<compile_context>
chip_gen: v6e
topology: v6e:2x2x1
jax: 0.10.0
libtpu: 0.0.40
codegen_flags: <defaults>
</compile_context>

<pallas_src>
import functools

import jax
import jax.numpy as jnp
from jax.experimental import pallas as pl
from jax.experimental.pallas import tpu as pltpu


# ---------------------------------------------------------------------------
# Kernels
# ---------------------------------------------------------------------------

def _layernorm_f32(x_f32, g_ref, b_ref, eps):
    mu = jnp.mean(x_f32, axis=-1, keepdims=True)
    xc = x_f32 - mu
    var = jnp.mean(xc * xc, axis=-1, keepdims=True)
    y = xc * jax.lax.rsqrt(var + eps)
    return y * g_ref[...].astype(jnp.float32) + b_ref[...].astype(jnp.float32)


def ln_qkv_lora_kernel(x_ref, g_ref, b_ref, w_ref, *rest, eps, use_lora):
    """norm1(x) -> one fused (tm, 3C) q/k/v GEMM (+ batched LoRA adapters)."""
    if use_lora:
        lb_ref, la_ref, o_ref = rest          # lb: (C, 3r), la: (3, r, C)
    else:
        (o_ref,) = rest
    c = x_ref.shape[1]
    y = _layernorm_f32(x_ref[...].astype(jnp.float32), g_ref, b_ref, eps)
    y = y.astype(w_ref.dtype)                  # stream LN output at weight dtype
    main = jnp.dot(y, w_ref[...], preferred_element_type=jnp.float32)   # (tm, 3C)
    if use_lora:
        r = la_ref.shape[1]
        inter = jnp.dot(y, lb_ref[...], preferred_element_type=jnp.float32)  # (tm, 3r)
        secs = []
        for i in range(3):                     # 0=q, 1=k, 2=v
            delta = jnp.dot(inter[:, i * r:(i + 1) * r].astype(la_ref.dtype),
                            la_ref[i], preferred_element_type=jnp.float32)
            secs.append(main[:, i * c:(i + 1) * c] + delta)
        main = jnp.concatenate(secs, axis=-1)
    o_ref[...] = main.astype(o_ref.dtype)      # single lane-dense (tm, 3C) store


def mha_proj_residual_kernel(qkv_ref, res_ref, wp_ref, bp_ref, o_ref, *,
                             num_heads, scale):
    """Per-batch MHA with fused out-projection + bias + residual.

    out = x + sum_h softmax(q_h k_h^T * scale) v_h @ Wproj[h*dh:(h+1)*dh, :] + bproj
    """
    # TODO(synk): for long sequences (N >~ 512) tile the KV axis with an
    # online-softmax accumulator instead of materializing the (N, N) scores.
    c3 = qkv_ref.shape[2]
    c = c3 // 3
    dh = c // num_heads
    qkv = qkv_ref[0]                                              # (N, 3C)
    acc = res_ref[0].astype(jnp.float32) + bp_ref[...].astype(jnp.float32)  # (N, C)
    for h in range(num_heads):
        q = qkv[:, h * dh:(h + 1) * dh].astype(jnp.float32) * scale
        k = qkv[:, c + h * dh:c + (h + 1) * dh].astype(jnp.float32)
        v = qkv[:, 2 * c + h * dh:2 * c + (h + 1) * dh]
        s = jax.lax.dot_general(q, k, (((1,), (1,)), ((), ())),
                                preferred_element_type=jnp.float32)       # (N, N)
        s = s - jnp.max(s, axis=-1, keepdims=True)
        e = jnp.exp(s)
        p = e * pl.reciprocal(jnp.sum(e, axis=-1, keepdims=True), approx=True)
        o = jnp.dot(p.astype(v.dtype), v, preferred_element_type=jnp.float32)
        acc = acc + jnp.dot(o.astype(wp_ref.dtype),
                            wp_ref[h * dh:(h + 1) * dh, :],
                            preferred_element_type=jnp.float32)
    o_ref[0] = acc.astype(o_ref.dtype)         # one lane-dense (N, C) store


def ln_mlp_residual_kernel(x_ref, g_ref, b_ref, w1_ref, b1_ref, w2_ref, b2_ref,
                           o_ref, *, eps):
    """out = x + fc2(GELU(fc1(norm2(x)))) with the hidden kept in VMEM."""
    xf = x_ref[...].astype(jnp.float32)
    y = _layernorm_f32(xf, g_ref, b_ref, eps).astype(w1_ref.dtype)
    h = jnp.dot(y, w1_ref[...], preferred_element_type=jnp.float32)
    h = h + b1_ref[...].astype(jnp.float32)
    # TODO(synk): PyTorch nn.GELU defaults to the exact erf form; the tanh
    # approximation used here differs by <~1e-3 in activation value.
    h = jax.nn.gelu(h, approximate=True).astype(w2_ref.dtype)
    out = jnp.dot(h, w2_ref[...], preferred_element_type=jnp.float32)
    out = out + b2_ref[...].astype(jnp.float32) + xf
    o_ref[...] = out.astype(o_ref.dtype)


# ---------------------------------------------------------------------------
# Generation-aware tiling / compiler params
# ---------------------------------------------------------------------------

@functools.lru_cache(maxsize=1)
def _vmem_capacity_bytes():
    cap = 64 * 1024 * 1024                     # conservative default (v7x per-TC)
    try:
        info = pltpu.get_tpu_info()
        cap = int(getattr(info, "vmem_capacity_bytes", cap)) or cap
    except Exception:
        pass
    return cap


def _compiler_params():
    cap = _vmem_capacity_bytes()
    limit = int(min(100 * 1024 * 1024, max(32 * 1024 * 1024, 0.75 * cap)))
    return pltpu.CompilerParams(
        dimension_semantics=("parallel",),
        vmem_limit_bytes=limit,                # 48 MiB on 64 MiB parts, 96 MiB on 128 MiB
    )


def _default_row_tile():
    return 512 if _vmem_capacity_bytes() >= 100 * 1024 * 1024 else 256


def _row_tile(m, tm, dtype):
    """Row tile: multiple of 8 (16 for bf16 packing), no padding / slicing."""
    mult = 16 if dtype == jnp.bfloat16 else 8
    if tm is None:
        tm = _default_row_tile()
    if tm >= m:
        return m                               # full extent — always layout-legal
    return max((int(tm) // mult) * mult, mult)


# ---------------------------------------------------------------------------
# pallas_call wrappers
# ---------------------------------------------------------------------------

def _ln_qkv(x2, g, b, w_qkv, lora_b, lora_a, *, eps, tm):
    m, c = x2.shape
    c3 = w_qkv.shape[1]
    use_lora = lora_b is not None
    tm = _row_tile(m, tm, x2.dtype)

    in_specs = [
        pl.BlockSpec((tm, c), lambda i: (i, 0)),
        pl.BlockSpec((1, c), lambda i: (0, 0)),
        pl.BlockSpec((1, c), lambda i: (0, 0)),
        pl.BlockSpec((c, c3), lambda i: (0, 0)),      # resident weights
    ]
    args = [x2, g, b, w_qkv]
    if use_lora:
        r3 = lora_b.shape[1]
        r = lora_a.shape[1]
        in_specs += [
            pl.BlockSpec((c, r3), lambda i: (0, 0)),
            pl.BlockSpec((3, r, c), lambda i: (0, 0, 0)),
        ]
        args += [lora_b, lora_a]

    return pl.pallas_call(
        functools.partial(ln_qkv_lora_kernel, eps=eps, use_lora=use_lora),
        out_shape=jax.ShapeDtypeStruct((m, c3), x2.dtype),
        grid_spec=pltpu.PrefetchScalarGridSpec(
            num_scalar_prefetch=0,
            grid=(pl.cdiv(m, tm),),
            in_specs=in_specs,
            out_specs=pl.BlockSpec((tm, c3), lambda i: (i, 0)),
        ),
        compiler_params=_compiler_params(),
    )(*args)


def _mha_proj(qkv3, x3, w_proj, b_proj, *, num_heads, scale):
    bsz, n, c3 = qkv3.shape
    c = c3 // 3
    return pl.pallas_call(
        functools.partial(mha_proj_residual_kernel, num_heads=num_heads, scale=scale),
        out_shape=jax.ShapeDtypeStruct((bsz, n, c), x3.dtype),
        grid_spec=pltpu.PrefetchScalarGridSpec(
            num_scalar_prefetch=0,
            grid=(bsz,),
            in_specs=[
                pl.BlockSpec((1, n, c3), lambda bb: (bb, 0, 0)),
                pl.BlockSpec((1, n, c), lambda bb: (bb, 0, 0)),   # residual x
                pl.BlockSpec((c, c), lambda bb: (0, 0)),          # resident w_proj
                pl.BlockSpec((1, c), lambda bb: (0, 0)),
            ],
            out_specs=pl.BlockSpec((1, n, c), lambda bb: (bb, 0, 0)),
        ),
        compiler_params=_compiler_params(),
    )(qkv3, x3, w_proj, b_proj)


def _ln_mlp(x2, g, b, w1, b1, w2, b2, *, eps, tm):
    m, c = x2.shape
    hid = w1.shape[1]
    tm = _row_tile(m, tm, x2.dtype)
    return pl.pallas_call(
        functools.partial(ln_mlp_residual_kernel, eps=eps),
        out_shape=jax.ShapeDtypeStruct((m, c), x2.dtype),
        grid_spec=pltpu.PrefetchScalarGridSpec(
            num_scalar_prefetch=0,
            grid=(pl.cdiv(m, tm),),
            in_specs=[
                pl.BlockSpec((tm, c), lambda i: (i, 0)),
                pl.BlockSpec((1, c), lambda i: (0, 0)),
                pl.BlockSpec((1, c), lambda i: (0, 0)),
                pl.BlockSpec((c, hid), lambda i: (0, 0)),         # resident w_fc1
                pl.BlockSpec((1, hid), lambda i: (0, 0)),
                pl.BlockSpec((hid, c), lambda i: (0, 0)),         # resident w_fc2
                pl.BlockSpec((1, c), lambda i: (0, 0)),
            ],
            out_specs=pl.BlockSpec((tm, c), lambda i: (i, 0)),
        ),
        compiler_params=_compiler_params(),
    )(x2, g, b, w1, b1, w2, b2)


# ---------------------------------------------------------------------------
# Block forward (eval mode: dropouts / drop_path are identity)
# ---------------------------------------------------------------------------

def vit_block_forward(x, params, *, num_heads, eps=1e-5, msa=(1, 1, 1),
                      block_weight=None, tm=None):
    bsz, n, c = x.shape
    dh = c // num_heads
    scale = dh ** (-0.5)
    m = bsz * n
    x2 = x.reshape(m, c)

    lora_b = params.get("lora_b", None)   # (C, 3r) concatenated [q|k|v]
    lora_a = params.get("lora_a", None)   # (3, r, C)
    if lora_b is not None:
        if block_weight is None:
            block_weight = jnp.ones((3,), jnp.float32)
        # Fold msa gate + block_weight into lora_A in f32, then cast back.
        gate = jnp.asarray(msa, jnp.float32) * block_weight.astype(jnp.float32)
        lora_a = (lora_a.astype(jnp.float32) * gate[:, None, None]).astype(lora_a.dtype)

    qkv = _ln_qkv(x2, params["ln1_g"], params["ln1_b"], params["w_qkv"],
                  lora_b, lora_a, eps=eps, tm=tm)                       # (M, 3C)
    x1 = _mha_proj(qkv.reshape(bsz, n, 3 * c), x, params["w_proj"],
                   params["b_proj"], num_heads=num_heads, scale=scale)  # (B, N, C)
    out = _ln_mlp(x1.reshape(m, c), params["ln2_g"], params["ln2_b"],
                  params["w_fc1"], params["b_fc1"], params["w_fc2"],
                  params["b_fc2"], eps=eps, tm=tm)                      # (M, C)
    return out.reshape(bsz, n, c)


# ---------------------------------------------------------------------------
# Parameters + pure-JAX reference
# ---------------------------------------------------------------------------

def init_block_params(key, dim, num_heads, *, mlp_ratio=4.0, lora_rank=16,
                      dtype=jnp.float32):
    del num_heads
    hid = int(dim * mlp_ratio)
    ks = jax.random.split(key, 18)
    std = 0.02

    def lin_w(k, fi, fo):
        # Stored as (in, out) == PyTorch weight.T; transposition done once here.
        return (std * jax.random.normal(k, (fi, fo))).astype(dtype)

    wq, wk, wv = lin_w(ks[0], dim, dim), lin_w(ks[1], dim, dim), lin_w(ks[2], dim, dim)

    lora_b, lora_a = [], []
    for i in range(3):
        # random_orth LoRA-B init: Wb = Q.T of QR(uniform(dim, r)); store Wb.T = Q.
        q_mat, _ = jnp.linalg.qr(jax.random.uniform(ks[3 + i], (dim, lora_rank)))
        lora_b.append(q_mat)
        # NOTE: the PyTorch module zero-inits lora_A (output = 0 at init);
        # small random values are used here so the fused LoRA path is exercised.
        lora_a.append(std * jax.random.normal(ks[6 + i], (lora_rank, dim)))

    return {
        "ln1_g": (1.0 + 0.1 * jax.random.normal(ks[9], (1, dim))).astype(dtype),
        "ln1_b": (0.1 * jax.random.normal(ks[10], (1, dim))).astype(dtype),
        "w_qkv": jnp.concatenate([wq, wk, wv], axis=1),          # (dim, 3*dim), no bias
        "w_proj": lin_w(ks[11], dim, dim),
        "b_proj": (std * jax.random.normal(ks[12], (1, dim))).astype(dtype),
        "ln2_g": (1.0 + 0.1 * jax.random.normal(ks[13], (1, dim))).astype(dtype),
        "ln2_b": (0.1 * jax.random.normal(ks[14], (1, dim))).astype(dtype),
        "w_fc1": lin_w(ks[15], dim, hid),
        "b_fc1": (std * jax.random.normal(ks[16], (1, hid))).astype(dtype),
        "w_fc2": lin_w(ks[17], hid, dim),
        "b_fc2": jnp.zeros((1, dim), dtype),
        "lora_b": jnp.concatenate(lora_b, axis=1).astype(dtype),  # (dim, 3*r)
        "lora_a": jnp.stack(lora_a).astype(dtype),                # (3, r, dim)
    }


def block_reference(x, p, *, num_heads, eps=1e-5, msa=(1, 1, 1), block_weight=None):
    """Pure-JAX (non-Pallas) f32 reference matching the PyTorch forward."""
    bsz, n, c = x.shape
    dh = c // num_heads
    scale = dh ** (-0.5)
    f32 = jnp.float32
    xf = x.astype(f32)
    pf = jax.tree_util.tree_map(lambda a: a.astype(f32), p)
    bw = jnp.ones((3,), f32) if block_weight is None else block_weight.astype(f32)
    r = pf["lora_a"].shape[1]

    def ln(z, g, b):
        mu = jnp.mean(z, -1, keepdims=True)
        var = jnp.mean((z - mu) ** 2, -1, keepdims=True)
        return (z - mu) / jnp.sqrt(var + eps) * g.reshape(-1) + b.reshape(-1)

    y = ln(xf, pf["ln1_g"], pf["ln1_b"])

    def proj(i):
        out = y @ pf["w_qkv"][:, i * c:(i + 1) * c]
        lb = pf["lora_b"][:, i * r:(i + 1) * r]
        return out + msa[i] * bw[i] * ((y @ lb) @ pf["lora_a"][i])

    q, k, v = proj(0), proj(1), proj(2)

    def split_heads(t):
        return t.reshape(bsz, n, num_heads, dh).transpose(0, 2, 1, 3)

    qh, kh, vh = split_heads(q), split_heads(k), split_heads(v)
    attn = jax.nn.softmax(jnp.einsum("bhqd,bhkd->bhqk", qh, kh) * scale, axis=-1)
    o = jnp.einsum("bhqk,bhkd->bhqd", attn, vh).transpose(0, 2, 1, 3).reshape(bsz, n, c)
    x1 = xf + o @ pf["w_proj"] + pf["b_proj"].reshape(-1)
    y2 = ln(x1, pf["ln2_g"], pf["ln2_b"])
    h = jax.nn.gelu(y2 @ pf["w_fc1"] + pf["b_fc1"].reshape(-1), approximate=True)
    return x1 + h @ pf["w_fc2"] + pf["b_fc2"].reshape(-1)


# ---------------------------------------------------------------------------
# Demo / correctness check
# ---------------------------------------------------------------------------

if __name__ == "__main__":
    key = jax.random.PRNGKey(0)
    k_params, k_x = jax.random.split(key)

    batch, seq, dim, num_heads = 2, 8, 128, 4        # head_dim=32, mlp hidden=512
    lora_rank = 16
    msa = (1, 1, 1)

    x = jax.random.normal(k_x, (batch, seq, dim), dtype=jnp.float32)
    params = init_block_params(k_params, dim, num_heads,
                               mlp_ratio=4.0, lora_rank=lora_rank)
    block_weight = jnp.array([0.5, 1.0, 2.0], dtype=jnp.float32)

    fwd = jax.jit(lambda xx, pp, bw: vit_block_forward(
        xx, pp, num_heads=num_heads, msa=msa, block_weight=bw))

    out = jax.block_until_ready(fwd(x, params, block_weight))
    ref = block_reference(x, params, num_heads=num_heads, msa=msa,
                          block_weight=block_weight)
    assert out.shape == (batch, seq, dim)
    max_err = float(jnp.max(jnp.abs(out - ref)))
    assert jnp.allclose(out, ref, atol=3e-2, rtol=3e-2), f"f32 mismatch, max err {max_err}"

    # bf16 streaming path (halves HBM traffic; kernels still accumulate in f32).
    params_bf16 = jax.tree_util.tree_map(lambda a: a.astype(jnp.bfloat16), params)
    out_bf16 = jax.block_until_ready(
        fwd(x.astype(jnp.bfloat16), params_bf16, block_weight.astype(jnp.bfloat16)))
    assert bool(jnp.all(jnp.isfinite(out_bf16.astype(jnp.float32))))
    assert jnp.allclose(out_bf16.astype(jnp.float32), ref, atol=2.5e-1, rtol=2.5e-1)

    print("KERNEL_OK")
</pallas_src>

<mosaic_0001>
module attributes {stable_mosaic.version = 11 : i64} {
  func.func @ln_qkv_lora_kernel(%arg0: i32, %arg1: memref<16x128xf32, #tpu.memory_space<vmem>>, %arg2: memref<1x128xf32, #tpu.memory_space<vmem>>, %arg3: memref<1x128xf32, #tpu.memory_space<vmem>>, %arg4: memref<128x384xf32, #tpu.memory_space<vmem>>, %arg5: memref<128x48xf32, #tpu.memory_space<vmem>>, %arg6: memref<3x16x128xf32, #tpu.memory_space<vmem>>, %arg7: memref<16x384xf32, #tpu.memory_space<vmem>>) attributes {dimension_semantics = [#tpu.dimension_semantics<parallel>], iteration_bounds = array<i64: 1>, scalar_prefetch = 0 : i64, scratch_operands = 0 : i64, tpu.core_type = #tpu.core_type<tc>, window_params = [{transform_indices = @transform_0, window_bounds = array<i64: 16, 128>}, {pipeline_mode = #tpu.pipeline_mode<synchronous>, transform_indices = @transform_1, window_bounds = array<i64: 1, 128>}, {pipeline_mode = #tpu.pipeline_mode<synchronous>, transform_indices = @transform_2, window_bounds = array<i64: 1, 128>}, {pipeline_mode = #tpu.pipeline_mode<synchronous>, transform_indices = @transform_3, window_bounds = array<i64: 128, 384>}, {pipeline_mode = #tpu.pipeline_mode<synchronous>, transform_indices = @transform_4, window_bounds = array<i64: 128, 48>}, {pipeline_mode = #tpu.pipeline_mode<synchronous>, transform_indices = @transform_5, window_bounds = array<i64: 3, 16, 128>}, {transform_indices = @transform_6, window_bounds = array<i64: 16, 384>}]} {
    %c0 = arith.constant 0 : index
    %c0_0 = arith.constant 0 : index
    %0 = vector.load %arg1[%c0, %c0_0] : memref<16x128xf32, #tpu.memory_space<vmem>>, vector<16x128xf32>
    %cst = arith.constant dense<0.000000e+00> : vector<16xf32>
    %1 = vector.multi_reduction <add>, %0, %cst [1] : vector<16x128xf32> to vector<16xf32>
    %2 = vector.shape_cast %1 : vector<16xf32> to vector<16x1xf32>
    %cst_1 = arith.constant 1.280000e+02 : f32
    %3 = vector.broadcast %cst_1 : f32 to vector<16x1xf32>
    %4 = arith.divf %2, %3 : vector<16x1xf32>
    %5 = vector.broadcast %4 : vector<16x1xf32> to vector<16x128xf32>
    %6 = arith.subf %0, %5 : vector<16x128xf32>
    %7 = arith.mulf %6, %6 : vector<16x128xf32>
    %cst_2 = arith.constant dense<0.000000e+00> : vector<16xf32>
    %8 = vector.multi_reduction <add>, %7, %cst_2 [1] : vector<16x128xf32> to vector<16xf32>
    %9 = vector.shape_cast %8 : vector<16xf32> to vector<16x1xf32>
    %cst_3 = arith.constant 1.280000e+02 : f32
    %10 = vector.broadcast %cst_3 : f32 to vector<16x1xf32>
    %11 = arith.divf %9, %10 : vector<16x1xf32>
    %cst_4 = arith.constant 9.99999974E-6 : f32
    %12 = vector.broadcast %cst_4 : f32 to vector<16x1xf32>
    %13 = arith.addf %11, %12 : vector<16x1xf32>
    %14 = math.rsqrt %13 : vector<16x1xf32>
    %15 = vector.broadcast %14 : vector<16x1xf32> to vector<16x128xf32>
    %16 = arith.mulf %6, %15 : vector<16x128xf32>
    %c0_5 = arith.constant 0 : index
    %c0_6 = arith.constant 0 : index
    %17 = vector.load %arg2[%c0_5, %c0_6] : memref<1x128xf32, #tpu.memory_space<vmem>>, vector<1x128xf32>
    %18 = vector.broadcast %17 : vector<1x128xf32> to vector<16x128xf32>
    %19 = arith.mulf %16, %18 : vector<16x128xf32>
    %c0_7 = arith.constant 0 : index
    %c0_8 = arith.constant 0 : index
    %20 = vector.load %arg3[%c0_7, %c0_8] : memref<1x128xf32, #tpu.memory_space<vmem>>, vector<1x128xf32>
    %21 = vector.broadcast %20 : vector<1x128xf32> to vector<16x128xf32>
    %22 = arith.addf %19, %21 : vector<16x128xf32>
    %c0_9 = arith.constant 0 : index
    %c0_10 = arith.constant 0 : index
    %23 = vector.load %arg4[%c0_9, %c0_10] : memref<128x384xf32, #tpu.memory_space<vmem>>, vector<128x384xf32>
    %cst_11 = arith.constant dense<0.000000e+00> : vector<16x384xf32>
    %24 = tpu.matmul %22, %23, %cst_11 {dimension_numbers = #tpu.dot_dimension_numbers<[1], [0], [0], [1], [0, 0, 1, 1], [], []>} : vector<16x128xf32>, vector<128x384xf32>, vector<16x384xf32> -> vector<16x384xf32>
    %c0_12 = arith.constant 0 : index
    %c0_13 = arith.constant 0 : index
    %25 = vector.load %arg5[%c0_12, %c0_13] : memref<128x48xf32, #tpu.memory_space<vmem>>, vector<128x48xf32>
    %cst_14 = arith.constant dense<0.000000e+00> : vector<16x48xf32>
    %26 = tpu.matmul %22, %25, %cst_14 {dimension_numbers = #tpu.dot_dimension_numbers<[1], [0], [0], [1], [0, 0, 1, 1], [], []>} : vector<16x128xf32>, vector<128x48xf32>, vector<16x48xf32> -> vector<16x48xf32>
    %27 = vector.extract_strided_slice %26 {offsets = [0, 0], sizes = [16, 16], strides = [1, 1]} : vector<16x48xf32> to vector<16x16xf32>
    %c0_15 = arith.constant 0 : index
    %c0_16 = arith.constant 0 : index
    %c0_17 = arith.constant 0 : index
    %28 = vector.load %arg6[%c0_15, %c0_16, %c0_17] : memref<3x16x128xf32, #tpu.memory_space<vmem>>, vector<1x16x128xf32>
    %29 = vector.shape_cast %28 : vector<1x16x128xf32> to vector<16x128xf32>
    %cst_18 = arith.constant dense<0.000000e+00> : vector<16x128xf32>
    %30 = tpu.matmul %27, %29, %cst_18 {dimension_numbers = #tpu.dot_dimension_numbers<[1], [0], [0], [1], [0, 0, 1, 1], [], []>} : vector<16x16xf32>, vector<16x128xf32>, vector<16x128xf32> -> vector<16x128xf32>
    %31 = vector.extract_strided_slice %24 {offsets = [0, 0], sizes = [16, 128], strides = [1, 1]} : vector<16x384xf32> to vector<16x128xf32>
    %32 = arith.addf %31, %30 : vector<16x128xf32>
    %33 = vector.extract_strided_slice %26 {offsets = [0, 16], sizes = [16, 16], strides = [1, 1]} : vector<16x48xf32> to vector<16x16xf32>
    %c1 = arith.constant 1 : index
    %c0_19 = arith.constant 0 : index
    %c0_20 = arith.constant 0 : index
    %34 = vector.load %arg6[%c1, %c0_19, %c0_20] : memref<3x16x128xf32, #tpu.memory_space<vmem>>, vector<1x16x128xf32>
    %35 = vector.shape_cast %34 : vector<1x16x128xf32> to vector<16x128xf32>
    %cst_21 = arith.constant dense<0.000000e+00> : vector<16x128xf32>
    %36 = tpu.matmul %33, %35, %cst_21 {dimension_numbers = #tpu.dot_dimension_numbers<[1], [0], [0], [1], [0, 0, 1, 1], [], []>} : vector<16x16xf32>, vector<16x128xf32>, vector<16x128xf32> -> vector<16x128xf32>
    %37 = vector.extract_strided_slice %24 {offsets = [0, 128], sizes = [16, 128], strides = [1, 1]} : vector<16x384xf32> to vector<16x128xf32>
    %38 = arith.addf %37, %36 : vector<16x128xf32>
    %39 = vector.extract_strided_slice %26 {offsets = [0, 32], sizes = [16, 16], strides = [1, 1]} : vector<16x48xf32> to vector<16x16xf32>
    %c2 = arith.constant 2 : index
    %c0_22 = arith.constant 0 : index
    %c0_23 = arith.constant 0 : index
    %40 = vector.load %arg6[%c2, %c0_22, %c0_23] : memref<3x16x128xf32, #tpu.memory_space<vmem>>, vector<1x16x128xf32>
    %41 = vector.shape_cast %40 : vector<1x16x128xf32> to vector<16x128xf32>
    %cst_24 = arith.constant dense<0.000000e+00> : vector<16x128xf32>
    %42 = tpu.matmul %39, %41, %cst_24 {dimension_numbers = #tpu.dot_dimension_numbers<[1], [0], [0], [1], [0, 0, 1, 1], [], []>} : vector<16x16xf32>, vector<16x128xf32>, vector<16x128xf32> -> vector<16x128xf32>
    %43 = vector.extract_strided_slice %24 {offsets = [0, 256], sizes = [16, 128], strides = [1, 1]} : vector<16x384xf32> to vector<16x128xf32>
    %44 = arith.addf %43, %42 : vector<16x128xf32>
    %45 = tpu.concatenate %32, %38, %44 in 1 : vector<16x128xf32>, vector<16x128xf32>, vector<16x128xf32> -> vector<16x384xf32>
    %c0_25 = arith.constant 0 : index
    %c0_26 = arith.constant 0 : index
    %46 = vector.load %arg7[%c0_25, %c0_26] : memref<16x384xf32, #tpu.memory_space<vmem>>, vector<16x384xf32>
    tpu.vector_store %arg7[%c0_25, %c0_26], %45 {strides = array<i32>} : memref<16x384xf32, #tpu.memory_space<vmem>>, vector<16x384xf32>,
    return
  }
  func.func @transform_0(%arg0: i32) -> (i32, i32) {
    %c0_i32 = arith.constant 0 : i32
    %c0_i32_0 = arith.constant 0 : i32
    return %arg0, %c0_i32 : i32, i32
  }
  func.func @transform_1(%arg0: i32) -> (i32, i32) {
    %c0_i32 = arith.constant 0 : i32
    %c0_i32_0 = arith.constant 0 : i32
    %c0_i32_1 = arith.constant 0 : i32
    return %c0_i32, %c0_i32_0 : i32, i32
  }
  func.func @transform_2(%arg0: i32) -> (i32, i32) {
    %c0_i32 = arith.constant 0 : i32
    %c0_i32_0 = arith.constant 0 : i32
    %c0_i32_1 = arith.constant 0 : i32
    return %c0_i32, %c0_i32_0 : i32, i32
  }
  func.func @transform_3(%arg0: i32) -> (i32, i32) {
    %c0_i32 = arith.constant 0 : i32
    %c0_i32_0 = arith.constant 0 : i32
    %c0_i32_1 = arith.constant 0 : i32
    return %c0_i32, %c0_i32_0 : i32, i32
  }
  func.func @transform_4(%arg0: i32) -> (i32, i32) {
    %c0_i32 = arith.constant 0 : i32
    %c0_i32_0 = arith.constant 0 : i32
    %c0_i32_1 = arith.constant 0 : i32
    return %c0_i32, %c0_i32_0 : i32, i32
  }
  func.func @transform_5(%arg0: i32) -> (i32, i32, i32) {
    %c0_i32 = arith.constant 0 : i32
    %c0_i32_0 = arith.constant 0 : i32
    %c0_i32_1 = arith.constant 0 : i32
    %c0_i32_2 = arith.constant 0 : i32
    return %c0_i32, %c0_i32_0, %c0_i32_1 : i32, i32, i32
  }
  func.func @transform_6(%arg0: i32) -> (i32, i32) {
    %c0_i32 = arith.constant 0 : i32
    %c0_i32_0 = arith.constant 0 : i32
    return %arg0, %c0_i32 : i32, i32
  }
}

module attributes {stable_mosaic.version = 11 : i64} {
  func.func @mha_proj_residual_kernel(%arg0: i32, %arg1: memref<1x8x384xf32, #tpu.memory_space<vmem>>, %arg2: memref<1x8x128xf32, #tpu.memory_space<vmem>>, %arg3: memref<128x128xf32, #tpu.memory_space<vmem>>, %arg4: memref<1x128xf32, #tpu.memory_space<vmem>>, %arg5: memref<1x8x128xf32, #tpu.memory_space<vmem>>) attributes {dimension_semantics = [#tpu.dimension_semantics<parallel>], iteration_bounds = array<i64: 2>, scalar_prefetch = 0 : i64, scratch_operands = 0 : i64, tpu.core_type = #tpu.core_type<tc>, window_params = [{transform_indices = @transform_0, window_bounds = array<i64: 1, 8, 384>}, {transform_indices = @transform_1, window_bounds = array<i64: 1, 8, 128>}, {pipeline_mode = #tpu.pipeline_mode<synchronous>, transform_indices = @transform_2, window_bounds = array<i64: 128, 128>}, {pipeline_mode = #tpu.pipeline_mode<synchronous>, transform_indices = @transform_3, window_bounds = array<i64: 1, 128>}, {transform_indices = @transform_4, window_bounds = array<i64: 1, 8, 128>}]} {
    %c0 = arith.constant 0 : index
    %c0_0 = arith.constant 0 : index
    %c0_1 = arith.constant 0 : index
    %0 = vector.load %arg1[%c0, %c0_0, %c0_1] : memref<1x8x384xf32, #tpu.memory_space<vmem>>, vector<1x8x384xf32>
    %1 = vector.shape_cast %0 : vector<1x8x384xf32> to vector<8x384xf32>
    %c0_2 = arith.constant 0 : index
    %c0_3 = arith.constant 0 : index
    %c0_4 = arith.constant 0 : index
    %2 = vector.load %arg2[%c0_2, %c0_3, %c0_4] : memref<1x8x128xf32, #tpu.memory_space<vmem>>, vector<1x8x128xf32>
    %3 = vector.shape_cast %2 : vector<1x8x128xf32> to vector<8x128xf32>
    %c0_5 = arith.constant 0 : index
    %c0_6 = arith.constant 0 : index
    %4 = vector.load %arg4[%c0_5, %c0_6] : memref<1x128xf32, #tpu.memory_space<vmem>>, vector<1x128xf32>
    %5 = vector.broadcast %4 : vector<1x128xf32> to vector<8x128xf32>
    %6 = arith.addf %3, %5 : vector<8x128xf32>
    %7 = vector.extract_strided_slice %1 {offsets = [0, 0], sizes = [8, 32], strides = [1, 1]} : vector<8x384xf32> to vector<8x32xf32>
    %cst = arith.constant 0.176776692 : f32
    %8 = vector.broadcast %cst : f32 to vector<8x32xf32>
    %9 = arith.mulf %7, %8 : vector<8x32xf32>
    %10 = vector.extract_strided_slice %1 {offsets = [0, 128], sizes = [8, 32], strides = [1, 1]} : vector<8x384xf32> to vector<8x32xf32>
    %11 = vector.extract_strided_slice %1 {offsets = [0, 256], sizes = [8, 32], strides = [1, 1]} : vector<8x384xf32> to vector<8x32xf32>
    %cst_7 = arith.constant dense<0.000000e+00> : vector<8x8xf32>
    %12 = tpu.matmul %9, %10, %cst_7 {dimension_numbers = #tpu.dot_dimension_numbers<[1], [1], [0], [0], [0, 0, 1, 0], [], []>} : vector<8x32xf32>, vector<8x32xf32>, vector<8x8xf32> -> vector<8x8xf32>
    %cst_8 = arith.constant dense<0xFF800000> : vector<8xf32>
    %13 = vector.multi_reduction <maximumf>, %12, %cst_8 [1] : vector<8x8xf32> to vector<8xf32>
    %14 = vector.shape_cast %13 : vector<8xf32> to vector<8x1xf32>
    %15 = vector.broadcast %14 : vector<8x1xf32> to vector<8x8xf32>
    %16 = arith.subf %12, %15 : vector<8x8xf32>
    %17 = math.exp %16 : vector<8x8xf32>
    %cst_9 = arith.constant dense<0.000000e+00> : vector<8xf32>
    %18 = vector.multi_reduction <add>, %17, %cst_9 [1] : vector<8x8xf32> to vector<8xf32>
    %19 = vector.shape_cast %18 : vector<8xf32> to vector<8x1xf32>
    %20 = tpu.reciprocal %19 {approx = true} : vector<8x1xf32> -> vector<8x1xf32>
    %21 = vector.broadcast %20 : vector<8x1xf32> to vector<8x8xf32>
    %22 = arith.mulf %17, %21 : vector<8x8xf32>
    %cst_10 = arith.constant dense<0.000000e+00> : vector<8x32xf32>
    %23 = tpu.matmul %22, %11, %cst_10 {dimension_numbers = #tpu.dot_dimension_numbers<[1], [0], [0], [1], [0, 0, 1, 1], [], []>} : vector<8x8xf32>, vector<8x32xf32>, vector<8x32xf32> -> vector<8x32xf32>
    %c0_11 = arith.constant 0 : index
    %c0_12 = arith.constant 0 : index
    %24 = vector.load %arg3[%c0_11, %c0_12] : memref<128x128xf32, #tpu.memory_space<vmem>>, vector<32x128xf32>
    %cst_13 = arith.constant dense<0.000000e+00> : vector<8x128xf32>
    %25 = tpu.matmul %23, %24, %cst_13 {dimension_numbers = #tpu.dot_dimension_numbers<[1], [0], [0], [1], [0, 0, 1, 1], [], []>} : vector<8x32xf32>, vector<32x128xf32>, vector<8x128xf32> -> vector<8x128xf32>
    %26 = arith.addf %6, %25 : vector<8x128xf32>
    %27 = vector.extract_strided_slice %1 {offsets = [0, 32], sizes = [8, 32], strides = [1, 1]} : vector<8x384xf32> to vector<8x32xf32>
    %cst_14 = arith.constant 0.176776692 : f32
    %28 = vector.broadcast %cst_14 : f32 to vector<8x32xf32>
    %29 = arith.mulf %27, %28 : vector<8x32xf32>
    %30 = vector.extract_strided_slice %1 {offsets = [0, 160], sizes = [8, 32], strides = [1, 1]} : vector<8x384xf32> to vector<8x32xf32>
    %31 = vector.extract_strided_slice %1 {offsets = [0, 288], sizes = [8, 32], strides = [1, 1]} : vector<8x384xf32> to vector<8x32xf32>
    %cst_15 = arith.constant dense<0.000000e+00> : vector<8x8xf32>
    %32 = tpu.matmul %29, %30, %cst_15 {dimension_numbers = #tpu.dot_dimension_numbers<[1], [1], [0], [0], [0, 0, 1, 0], [], []>} : vector<8x32xf32>, vector<8x32xf32>, vector<8x8xf32> -> vector<8x8xf32>
    %cst_16 = arith.constant dense<0xFF800000> : vector<8xf32>
    %33 = vector.multi_reduction <maximumf>, %32, %cst_16 [1] : vector<8x8xf32> to vector<8xf32>
    %34 = vector.shape_cast %33 : vector<8xf32> to vector<8x1xf32>
    %35 = vector.broadcast %34 : vector<8x1xf32> to vector<8x8xf32>
    %36 = arith.subf %32, %35 : vector<8x8xf32>
    %37 = math.exp %36 : vector<8x8xf32>
    %cst_17 = arith.constant dense<0.000000e+00> : vector<8xf32>
    %38 = vector.multi_reduction <add>, %37, %cst_17 [1] : vector<8x8xf32> to vector<8xf32>
    %39 = vector.shape_cast %38 : vector<8xf32> to vector<8x1xf32>
    %40 = tpu.reciprocal %39 {approx = true} : vector<8x1xf32> -> vector<8x1xf32>
    %41 = vector.broadcast %40 : vector<8x1xf32> to vector<8x8xf32>
    %42 = arith.mulf %37, %41 : vector<8x8xf32>
    %cst_18 = arith.constant dense<0.000000e+00> : vector<8x32xf32>
    %43 = tpu.matmul %42, %31, %cst_18 {dimension_numbers = #tpu.dot_dimension_numbers<[1], [0], [0], [1], [0, 0, 1, 1], [], []>} : vector<8x8xf32>, vector<8x32xf32>, vector<8x32xf32> -> vector<8x32xf32>
    %c32 = arith.constant 32 : index
    %c0_19 = arith.constant 0 : index
    %44 = vector.load %arg3[%c32, %c0_19] : memref<128x128xf32, #tpu.memory_space<vmem>>, vector<32x128xf32>
    %cst_20 = arith.constant dense<0.000000e+00> : vector<8x128xf32>
    %45 = tpu.matmul %43, %44, %cst_20 {dimension_numbers = #tpu.dot_dimension_numbers<[1], [0], [0], [1], [0, 0, 1, 1], [], []>} : vector<8x32xf32>, vector<32x128xf32>, vector<8x128xf32> -> vector<8x128xf32>
    %46 = arith.addf %26, %45 : vector<8x128xf32>
    %47 = vector.extract_strided_slice %1 {offsets = [0, 64], sizes = [8, 32], strides = [1, 1]} : vector<8x384xf32> to vector<8x32xf32>
    %cst_21 = arith.constant 0.176776692 : f32
    %48 = vector.broadcast %cst_21 : f32 to vector<8x32xf32>
    %49 = arith.mulf %47, %48 : vector<8x32xf32>
    %50 = vector.extract_strided_slice %1 {offsets = [0, 192], sizes = [8, 32], strides = [1, 1]} : vector<8x384xf32> to vector<8x32xf32>
    %51 = vector.extract_strided_slice %1 {offsets = [0, 320], sizes = [8, 32], strides = [1, 1]} : vector<8x384xf32> to vector<8x32xf32>
    %cst_22 = arith.constant dense<0.000000e+00> : vector<8x8xf32>
    %52 = tpu.matmul %49, %50, %cst_22 {dimension_numbers = #tpu.dot_dimension_numbers<[1], [1], [0], [0], [0, 0, 1, 0], [], []>} : vector<8x32xf32>, vector<8x32xf32>, vector<8x8xf32> -> vector<8x8xf32>
    %cst_23 = arith.constant dense<0xFF800000> : vector<8xf32>
    %53 = vector.multi_reduction <maximumf>, %52, %cst_23 [1] : vector<8x8xf32> to vector<8xf32>
    %54 = vector.shape_cast %53 : vector<8xf32> to vector<8x1xf32>
    %55 = vector.broadcast %54 : vector<8x1xf32> to vector<8x8xf32>
    %56 = arith.subf %52, %55 : vector<8x8xf32>
    %57 = math.exp %56 : vector<8x8xf32>
    %cst_24 = arith.constant dense<0.000000e+00> : vector<8xf32>
    %58 = vector.multi_reduction <add>, %57, %cst_24 [1] : vector<8x8xf32> to vector<8xf32>
    %59 = vector.shape_cast %58 : vector<8xf32> to vector<8x1xf32>
    %60 = tpu.reciprocal %59 {approx = true} : vector<8x1xf32> -> vector<8x1xf32>
    %61 = vector.broadcast %60 : vector<8x1xf32> to vector<8x8xf32>
    %62 = arith.mulf %57, %61 : vector<8x8xf32>
    %cst_25 = arith.constant dense<0.000000e+00> : vector<8x32xf32>
    %63 = tpu.matmul %62, %51, %cst_25 {dimension_numbers = #tpu.dot_dimension_numbers<[1], [0], [0], [1], [0, 0, 1, 1], [], []>} : vector<8x8xf32>, vector<8x32xf32>, vector<8x32xf32> -> vector<8x32xf32>
    %c64 = arith.constant 64 : index
    %c0_26 = arith.constant 0 : index
    %64 = vector.load %arg3[%c64, %c0_26] : memref<128x128xf32, #tpu.memory_space<vmem>>, vector<32x128xf32>
    %cst_27 = arith.constant dense<0.000000e+00> : vector<8x128xf32>
    %65 = tpu.matmul %63, %64, %cst_27 {dimension_numbers = #tpu.dot_dimension_numbers<[1], [0], [0], [1], [0, 0, 1, 1], [], []>} : vector<8x32xf32>, vector<32x128xf32>, vector<8x128xf32> -> vector<8x128xf32>
    %66 = arith.addf %46, %65 : vector<8x128xf32>
    %67 = vector.extract_strided_slice %1 {offsets = [0, 96], sizes = [8, 32], strides = [1, 1]} : vector<8x384xf32> to vector<8x32xf32>
    %cst_28 = arith.constant 0.176776692 : f32
    %68 = vector.broadcast %cst_28 : f32 to vector<8x32xf32>
    %69 = arith.mulf %67, %68 : vector<8x32xf32>
    %70 = vector.extract_strided_slice %1 {offsets = [0, 224], sizes = [8, 32], strides = [1, 1]} : vector<8x384xf32> to vector<8x32xf32>
    %71 = vector.extract_strided_slice %1 {offsets = [0, 352], sizes = [8, 32], strides = [1, 1]} : vector<8x384xf32> to vector<8x32xf32>
    %cst_29 = arith.constant dense<0.000000e+00> : vector<8x8xf32>
    %72 = tpu.matmul %69, %70, %cst_29 {dimension_numbers = #tpu.dot_dimension_numbers<[1], [1], [0], [0], [0, 0, 1, 0], [], []>} : vector<8x32xf32>, vector<8x32xf32>, vector<8x8xf32> -> vector<8x8xf32>
    %cst_30 = arith.constant dense<0xFF800000> : vector<8xf32>
    %73 = vector.multi_reduction <maximumf>, %72, %cst_30 [1] : vector<8x8xf32> to vector<8xf32>
    %74 = vector.shape_cast %73 : vector<8xf32> to vector<8x1xf32>
    %75 = vector.broadcast %74 : vector<8x1xf32> to vector<8x8xf32>
    %76 = arith.subf %72, %75 : vector<8x8xf32>
    %77 = math.exp %76 : vector<8x8xf32>
    %cst_31 = arith.constant dense<0.000000e+00> : vector<8xf32>
    %78 = vector.multi_reduction <add>, %77, %cst_31 [1] : vector<8x8xf32> to vector<8xf32>
    %79 = vector.shape_cast %78 : vector<8xf32> to vector<8x1xf32>
    %80 = tpu.reciprocal %79 {approx = true} : vector<8x1xf32> -> vector<8x1xf32>
    %81 = vector.broadcast %80 : vector<8x1xf32> to vector<8x8xf32>
    %82 = arith.mulf %77, %81 : vector<8x8xf32>
    %cst_32 = arith.constant dense<0.000000e+00> : vector<8x32xf32>
    %83 = tpu.matmul %82, %71, %cst_32 {dimension_numbers = #tpu.dot_dimension_numbers<[1], [0], [0], [1], [0, 0, 1, 1], [], []>} : vector<8x8xf32>, vector<8x32xf32>, vector<8x32xf32> -> vector<8x32xf32>
    %c96 = arith.constant 96 : index
    %c0_33 = arith.constant 0 : index
    %84 = vector.load %arg3[%c96, %c0_33] : memref<128x128xf32, #tpu.memory_space<vmem>>, vector<32x128xf32>
    %cst_34 = arith.constant dense<0.000000e+00> : vector<8x128xf32>
    %85 = tpu.matmul %83, %84, %cst_34 {dimension_numbers = #tpu.dot_dimension_numbers<[1], [0], [0], [1], [0, 0, 1, 1], [], []>} : vector<8x32xf32>, vector<32x128xf32>, vector<8x128xf32> -> vector<8x128xf32>
    %86 = arith.addf %66, %85 : vector<8x128xf32>
    %c0_35 = arith.constant 0 : index
    %c0_36 = arith.constant 0 : index
    %c0_37 = arith.constant 0 : index
    %87 = vector.load %arg5[%c0_35, %c0_36, %c0_37] : memref<1x8x128xf32, #tpu.memory_space<vmem>>, vector<1x8x128xf32>
    %88 = vector.shape_cast %87 : vector<1x8x128xf32> to vector<8x128xf32>
    %89 = vector.shape_cast %86 : vector<8x128xf32> to vector<1x8x128xf32>
    tpu.vector_store %arg5[%c0_35, %c0_36, %c0_37], %89 {strides = array<i32>} : memref<1x8x128xf32, #tpu.memory_space<vmem>>, vector<1x8x128xf32>,
    return
  }
  func.func @transform_0(%arg0: i32) -> (i32, i32, i32) {
    %c0_i32 = arith.constant 0 : i32
    %c0_i32_0 = arith.constant 0 : i32
    %c0_i32_1 = arith.constant 0 : i32
    return %arg0, %c0_i32, %c0_i32_0 : i32, i32, i32
  }
  func.func @transform_1(%arg0: i32) -> (i32, i32, i32) {
    %c0_i32 = arith.constant 0 : i32
    %c0_i32_0 = arith.constant 0 : i32
    %c0_i32_1 = arith.constant 0 : i32
    return %arg0, %c0_i32, %c0_i32_0 : i32, i32, i32
  }
  func.func @transform_2(%arg0: i32) -> (i32, i32) {
    %c0_i32 = arith.constant 0 : i32
    %c0_i32_0 = arith.constant 0 : i32
    %c0_i32_1 = arith.constant 0 : i32
    return %c0_i32, %c0_i32_0 : i32, i32
  }
  func.func @transform_3(%arg0: i32) -> (i32, i32) {
    %c0_i32 = arith.constant 0 : i32
    %c0_i32_0 = arith.constant 0 : i32
    %c0_i32_1 = arith.constant 0 : i32
    return %c0_i32, %c0_i32_0 : i32, i32
  }
  func.func @transform_4(%arg0: i32) -> (i32, i32, i32) {
    %c0_i32 = arith.constant 0 : i32
    %c0_i32_0 = arith.constant 0 : i32
    %c0_i32_1 = arith.constant 0 : i32
    return %arg0, %c0_i32, %c0_i32_0 : i32, i32, i32
  }
}

module attributes {stable_mosaic.version = 11 : i64} {
  func.func @ln_mlp_residual_kernel(%arg0: i32, %arg1: memref<16x128xf32, #tpu.memory_space<vmem>>, %arg2: memref<1x128xf32, #tpu.memory_space<vmem>>, %arg3: memref<1x128xf32, #tpu.memory_space<vmem>>, %arg4: memref<128x512xf32, #tpu.memory_space<vmem>>, %arg5: memref<1x512xf32, #tpu.memory_space<vmem>>, %arg6: memref<512x128xf32, #tpu.memory_space<vmem>>, %arg7: memref<1x128xf32, #tpu.memory_space<vmem>>, %arg8: memref<16x128xf32, #tpu.memory_space<vmem>>) attributes {dimension_semantics = [#tpu.dimension_semantics<parallel>], iteration_bounds = array<i64: 1>, scalar_prefetch = 0 : i64, scratch_operands = 0 : i64, tpu.core_type = #tpu.core_type<tc>, window_params = [{transform_indices = @transform_0, window_bounds = array<i64: 16, 128>}, {pipeline_mode = #tpu.pipeline_mode<synchronous>, transform_indices = @transform_1, window_bounds = array<i64: 1, 128>}, {pipeline_mode = #tpu.pipeline_mode<synchronous>, transform_indices = @transform_2, window_bounds = array<i64: 1, 128>}, {pipeline_mode = #tpu.pipeline_mode<synchronous>, transform_indices = @transform_3, window_bounds = array<i64: 128, 512>}, {pipeline_mode = #tpu.pipeline_mode<synchronous>, transform_indices = @transform_4, window_bounds = array<i64: 1, 512>}, {pipeline_mode = #tpu.pipeline_mode<synchronous>, transform_indices = @transform_5, window_bounds = array<i64: 512, 128>}, {pipeline_mode = #tpu.pipeline_mode<synchronous>, transform_indices = @transform_6, window_bounds = array<i64: 1, 128>}, {transform_indices = @transform_7, window_bounds = array<i64: 16, 128>}]} {
    %c0 = arith.constant 0 : index
    %c0_0 = arith.constant 0 : index
    %0 = vector.load %arg1[%c0, %c0_0] : memref<16x128xf32, #tpu.memory_space<vmem>>, vector<16x128xf32>
    %cst = arith.constant dense<0.000000e+00> : vector<16xf32>
    %1 = vector.multi_reduction <add>, %0, %cst [1] : vector<16x128xf32> to vector<16xf32>
    %2 = vector.shape_cast %1 : vector<16xf32> to vector<16x1xf32>
    %cst_1 = arith.constant 1.280000e+02 : f32
    %3 = vector.broadcast %cst_1 : f32 to vector<16x1xf32>
    %4 = arith.divf %2, %3 : vector<16x1xf32>
    %5 = vector.broadcast %4 : vector<16x1xf32> to vector<16x128xf32>
    %6 = arith.subf %0, %5 : vector<16x128xf32>
    %7 = arith.mulf %6, %6 : vector<16x128xf32>
    %cst_2 = arith.constant dense<0.000000e+00> : vector<16xf32>
    %8 = vector.multi_reduction <add>, %7, %cst_2 [1] : vector<16x128xf32> to vector<16xf32>
    %9 = vector.shape_cast %8 : vector<16xf32> to vector<16x1xf32>
    %cst_3 = arith.constant 1.280000e+02 : f32
    %10 = vector.broadcast %cst_3 : f32 to vector<16x1xf32>
    %11 = arith.divf %9, %10 : vector<16x1xf32>
    %cst_4 = arith.constant 9.99999974E-6 : f32
    %12 = vector.broadcast %cst_4 : f32 to vector<16x1xf32>
    %13 = arith.addf %11, %12 : vector<16x1xf32>
    %14 = math.rsqrt %13 : vector<16x1xf32>
    %15 = vector.broadcast %14 : vector<16x1xf32> to vector<16x128xf32>
    %16 = arith.mulf %6, %15 : vector<16x128xf32>
    %c0_5 = arith.constant 0 : index
    %c0_6 = arith.constant 0 : index
    %17 = vector.load %arg2[%c0_5, %c0_6] : memref<1x128xf32, #tpu.memory_space<vmem>>, vector<1x128xf32>
    %18 = vector.broadcast %17 : vector<1x128xf32> to vector<16x128xf32>
    %19 = arith.mulf %16, %18 : vector<16x128xf32>
    %c0_7 = arith.constant 0 : index
    %c0_8 = arith.constant 0 : index
    %20 = vector.load %arg3[%c0_7, %c0_8] : memref<1x128xf32, #tpu.memory_space<vmem>>, vector<1x128xf32>
    %21 = vector.broadcast %20 : vector<1x128xf32> to vector<16x128xf32>
    %22 = arith.addf %19, %21 : vector<16x128xf32>
    %c0_9 = arith.constant 0 : index
    %c0_10 = arith.constant 0 : index
    %23 = vector.load %arg4[%c0_9, %c0_10] : memref<128x512xf32, #tpu.memory_space<vmem>>, vector<128x512xf32>
    %cst_11 = arith.constant dense<0.000000e+00> : vector<16x512xf32>
    %24 = tpu.matmul %22, %23, %cst_11 {dimension_numbers = #tpu.dot_dimension_numbers<[1], [0], [0], [1], [0, 0, 1, 1], [], []>} : vector<16x128xf32>, vector<128x512xf32>, vector<16x512xf32> -> vector<16x512xf32>
    %c0_12 = arith.constant 0 : index
    %c0_13 = arith.constant 0 : index
    %25 = vector.load %arg5[%c0_12, %c0_13] : memref<1x512xf32, #tpu.memory_space<vmem>>, vector<1x512xf32>
    %26 = vector.broadcast %25 : vector<1x512xf32> to vector<16x512xf32>
    %27 = arith.addf %24, %26 : vector<16x512xf32>
    %28 = arith.mulf %27, %27 : vector<16x512xf32>
    %29 = arith.mulf %27, %28 : vector<16x512xf32>
    %cst_14 = arith.constant 4.471500e-02 : f32
    %30 = vector.broadcast %cst_14 : f32 to vector<16x512xf32>
    %31 = arith.mulf %30, %29 : vector<16x512xf32>
    %32 = arith.addf %27, %31 : vector<16x512xf32>
    %cst_15 = arith.constant 0.797884583 : f32
    %33 = vector.broadcast %cst_15 : f32 to vector<16x512xf32>
    %34 = arith.mulf %33, %32 : vector<16x512xf32>
    %35 = math.tanh %34 : vector<16x512xf32>
    %cst_16 = arith.constant 1.000000e+00 : f32
    %36 = vector.broadcast %cst_16 : f32 to vector<16x512xf32>
    %37 = arith.addf %36, %35 : vector<16x512xf32>
    %cst_17 = arith.constant 5.000000e-01 : f32
    %38 = vector.broadcast %cst_17 : f32 to vector<16x512xf32>
    %39 = arith.mulf %38, %37 : vector<16x512xf32>
    %40 = arith.mulf %27, %39 : vector<16x512xf32>
    %c0_18 = arith.constant 0 : index
    %c0_19 = arith.constant 0 : index
    %41 = vector.load %arg6[%c0_18, %c0_19] : memref<512x128xf32, #tpu.memory_space<vmem>>, vector<512x128xf32>
    %cst_20 = arith.constant dense<0.000000e+00> : vector<16x128xf32>
    %42 = tpu.matmul %40, %41, %cst_20 {dimension_numbers = #tpu.dot_dimension_numbers<[1], [0], [0], [1], [0, 0, 1, 1], [], []>} : vector<16x512xf32>, vector<512x128xf32>, vector<16x128xf32> -> vector<16x128xf32>
    %c0_21 = arith.constant 0 : index
    %c0_22 = arith.constant 0 : index
    %43 = vector.load %arg7[%c0_21, %c0_22] : memref<1x128xf32, #tpu.memory_space<vmem>>, vector<1x128xf32>
    %44 = vector.broadcast %43 : vector<1x128xf32> to vector<16x128xf32>
    %45 = arith.addf %42, %44 : vector<16x128xf32>
    %46 = arith.addf %45, %0 : vector<16x128xf32>
    %c0_23 = arith.constant 0 : index
    %c0_24 = arith.constant 0 : index
    %47 = vector.load %arg8[%c0_23, %c0_24] : memref<16x128xf32, #tpu.memory_space<vmem>>, vector<16x128xf32>
    tpu.vector_store %arg8[%c0_23, %c0_24], %46 {strides = array<i32>} : memref<16x128xf32, #tpu.memory_space<vmem>>, vector<16x128xf32>,
    return
  }
  func.func @transform_0(%arg0: i32) -> (i32, i32) {
    %c0_i32 = arith.constant 0 : i32
    %c0_i32_0 = arith.constant 0 : i32
    return %arg0, %c0_i32 : i32, i32
  }
  func.func @transform_1(%arg0: i32) -> (i32, i32) {
    %c0_i32 = arith.constant 0 : i32
    %c0_i32_0 = arith.constant 0 : i32
    %c0_i32_1 = arith.constant 0 : i32
    return %c0_i32, %c0_i32_0 : i32, i32
  }
  func.func @transform_2(%arg0: i32) -> (i32, i32) {
    %c0_i32 = arith.constant 0 : i32
    %c0_i32_0 = arith.constant 0 : i32
    %c0_i32_1 = arith.constant 0 : i32
    return %c0_i32, %c0_i32_0 : i32, i32
  }
  func.func @transform_3(%arg0: i32) -> (i32, i32) {
    %c0_i32 = arith.constant 0 : i32
    %c0_i32_0 = arith.constant 0 : i32
    %c0_i32_1 = arith.constant 0 : i32
    return %c0_i32, %c0_i32_0 : i32, i32
  }
  func.func @transform_4(%arg0: i32) -> (i32, i32) {
    %c0_i32 = arith.constant 0 : i32
    %c0_i32_0 = arith.constant 0 : i32
    %c0_i32_1 = arith.constant 0 : i32
    return %c0_i32, %c0_i32_0 : i32, i32
  }
  func.func @transform_5(%arg0: i32) -> (i32, i32) {
    %c0_i32 = arith.constant 0 : i32
    %c0_i32_0 = arith.constant 0 : i32
    %c0_i32_1 = arith.constant 0 : i32
    return %c0_i32, %c0_i32_0 : i32, i32
  }
  func.func @transform_6(%arg0: i32) -> (i32, i32) {
    %c0_i32 = arith.constant 0 : i32
    %c0_i32_0 = arith.constant 0 : i32
    %c0_i32_1 = arith.constant 0 : i32
    return %c0_i32, %c0_i32_0 : i32, i32
  }
  func.func @transform_7(%arg0: i32) -> (i32, i32) {
    %c0_i32 = arith.constant 0 : i32
    %c0_i32_0 = arith.constant 0 : i32
    return %arg0, %c0_i32 : i32, i32
  }
}

</mosaic_0001>

<llo_original>
// kernel: _lambda_.3
$region0: #{_lambda_.3}
  #allocation0 [shape = 'u32[]', space=smem, size = 0x4, offset = 0x4, fixed_abs, tag = 'smem constant byte address 0x4 - core index']
  #allocation1 [shape = 'u32[144,128]{1,0:T(1,128)}', space=vmem, size = 0x12000, scoped, tag = 'internal scratch']
  %s0 = inlined_call_operand.vmem [shape: f32[16,128], index: 0, kind: input, shape index: {}]
  %s1 = inlined_call_operand.vmem [shape: f32[1,128], index: 1, kind: input, shape index: {}]
  %s2 = inlined_call_operand.vmem [shape: f32[1,128], index: 2, kind: input, shape index: {}]
  %s3 = inlined_call_operand.hbm [shape: f32[128,384], index: 3, kind: input, shape index: {}]
  %s4 = inlined_call_operand.vmem [shape: f32[128,48], index: 4, kind: input, shape index: {}]
  %s5 = inlined_call_operand.vmem [shape: f32[3,16,128], index: 5, kind: input, shape index: {}]
  %s6 = inlined_call_operand.vmem [shape: f32[16,384], index: 6, kind: output, shape index: {}]
  %s7 = sld [smem:[#allocation0]]
  $region38: #{_lambda_.3} parent=0
    _
  %s9 = ssub.s32 1, %s7
  %s10 = scalar_select 0, %s9, %s7
  $region1: #{_lambda_.3} parent=0
    #allocation2 [shape = 'u8[196608]{0}', space=vmem, size = 0x30000, scoped, tag = 'input window, operand 3, single buffered']
    #allocation3 [shape = 's32[1]{0}', space=sflag, size = 0x4, scoped, tag = 'scoped memory for _lambda_.3']
    %11 = vsyncpa [#allocation3], 0
    // Predicated region
    $region2: #{_lambda_.3} parent=1 // pred_check
      _
    $region3: #{_lambda_.3} parent=1 // pred_check_branch
      %13 = sbr.rel (0) target = $region5
    $region4: #{_lambda_.3} parent=1 // pred_region
      _
    $region5: #{_lambda_.3} parent=1 // pred_fallthru
      _
    // Predicated region
    $region6: #{_lambda_.3} parent=1 // pred_check
      _
    $region7: #{_lambda_.3} parent=1 // pred_check_branch
      %15 = sbr.rel (0) target = $region9
    $region8: #{_lambda_.3} parent=1 // pred_region
      _
    $region9: #{_lambda_.3} parent=1 // pred_fallthru
      _
    // Predicated region
    $region10: #{_lambda_.3} parent=1 // pred_check
      _
    $region11: #{_lambda_.3} parent=1 // pred_check_branch
      %17 = sbr.rel (0) target = $region13
    $region12: #{_lambda_.3} parent=1 // pred_region
      _
    $region13: #{_lambda_.3} parent=1 // pred_fallthru
      _
    // Predicated region
    $region14: #{_lambda_.3} parent=1 // pred_check
      _
    $region15: #{_lambda_.3} parent=1 // pred_check_branch
      %19 = sbr.rel (0) target = $region17
    $region16: #{_lambda_.3} parent=1 // pred_region
      %s21 = ssub.s32 6144, 6144
      %22 = vsyncadd [#allocation3], %s21
      %s23 = sshll.u32 [#allocation2], 4
      %s24 = int_to_ptr.vmem [resolvable:$true] %s23
      %29 = dma.hbm_to_vmem [thread:$0]  %s3, 6144, %s24, [#allocation3], 384, 384, 24
    $region17: #{_lambda_.3} parent=1 // pred_fallthru
      _
    // Predicated region
    $region18: #{_lambda_.3} parent=1 // pred_check
      _
    $region19: #{_lambda_.3} parent=1 // pred_check_branch
      %31 = sbr.rel (0) target = $region21
    $region20: #{_lambda_.3} parent=1 // pred_region
      _
    $region21: #{_lambda_.3} parent=1 // pred_fallthru
      _
    // Predicated region
    $region22: #{_lambda_.3} parent=1 // pred_check
      _
    $region23: #{_lambda_.3} parent=1 // pred_check_branch
      %33 = sbr.rel (0) target = $region25
    $region24: #{_lambda_.3} parent=1 // pred_region
      _
    $region25: #{_lambda_.3} parent=1 // pred_fallthru
      _
    // Predicated region
    $region26: #{_lambda_.3} parent=1 // pred_check
      _
    $region27: #{_lambda_.3} parent=1 // pred_check_branch
      %35 = sbr.rel (0) target = $region29
    $region28: #{_lambda_.3} parent=1 // pred_region
      %36 = dma.done [#allocation3], 6144
    $region29: #{_lambda_.3} parent=1 // pred_fallthru
      _
    %v37 = vld [vmem:[%s0] sm:$0xff]
    %v38 = vld [vmem:[%s0 + $0x8] sm:$0xff]
    %39 = vadd.xlane.f32.xlu0 %v37
    %v40 = vpop.xlane.xlu0 %39
    %41 = vadd.xlane.f32.xlu0 %v38
    %v42 = vpop.xlane.xlu0 %41
    %v43 = vrcp.pop 128.0
    %v44 = vmul.f32 %v40, %v43
    %v45 = vmul.f32 %v42, %v43
    %v46 = vsub.f32 %v37, %v44
    %v47 = vsub.f32 %v38, %v45
    %v48 = vmul.f32 %v46, %v46
    %v49 = vmul.f32 %v47, %v47
    %50 = vadd.xlane.f32.xlu0 %v48
    %v51 = vpop.xlane.xlu0 %50
    %52 = vadd.xlane.f32.xlu0 %v49
    %v53 = vpop.xlane.xlu0 %52
    %v54 = vmul.f32 %v51, %v43
    %v55 = vmul.f32 %v53, %v43
    %v56 = vadd.f32 %v54, 1e-05
    %v57 = vadd.f32 %v55, 1e-05
    %v58 = vrsqrt.pop %v56
    %v59 = vrsqrt.pop %v57
    %v60 = vmul.f32 %v46, %v58
    %v61 = vmul.f32 %v47, %v59
    %v62 = vld [vmem:[%s1] sm:$0x1]
    %v64 = vlaneseq
    %v65 = vshrl.u32 %v64, 7
    %v66 = vsub.s32 0, %v65
    %v67 = vrot.slane %v62, %v66
    %v69 = vmul.f32 %v60, %v67
    %v70 = vmul.f32 %v61, %v67
    %v71 = vld [vmem:[%s2] sm:$0x1]
    %v73 = vlaneseq
    %v74 = vshrl.u32 %v73, 7
    %v75 = vsub.s32 0, %v74
    %v76 = vrot.slane %v71, %v75
    %v78 = vadd.f32 %v69, %v76
    %v79 = vadd.f32 %v70, %v76
    %v80 = vld [vmem:[#allocation2] sm:$0xff]
    %v81 = vld [vmem:[#allocation2 + $0x8] sm:$0xff]
    %v82 = vld [vmem:[#allocation2 + $0x10] sm:$0xff]
    %v83 = vld [vmem:[#allocation2 + $0x18] sm:$0xff]
    %v84 = vld [vmem:[#allocation2 + $0x20] sm:$0xff]
    %v85 = vld [vmem:[#allocation2 + $0x28] sm:$0xff]
    %v86 = vld [vmem:[#allocation2 + $0x30] sm:$0xff]
    %v87 = vld [vmem:[#allocation2 + $0x38] sm:$0xff]
    %v88 = vld [vmem:[#allocation2 + $0x40] sm:$0xff]
    %v89 = vld [vmem:[#allocation2 + $0x48] sm:$0xff]
    %v90 = vld [vmem:[#allocation2 + $0x50] sm:$0xff]
    %v91 = vld [vmem:[#allocation2 + $0x58] sm:$0xff]
    %v92 = vld [vmem:[#allocation2 + $0x60] sm:$0xff]
    %v93 = vld [vmem:[#allocation2 + $0x68] sm:$0xff]
    %v94 = vld [vmem:[#allocation2 + $0x70] sm:$0xff]
    %v95 = vld [vmem:[#allocation2 + $0x78] sm:$0xff]
    %v96 = vld [vmem:[#allocation2 + $0x80] sm:$0xff]
    %v97 = vld [vmem:[#allocation2 + $0x88] sm:$0xff]
    %v98 = vld [vmem:[#allocation2 + $0x90] sm:$0xff]
    %v99 = vld [vmem:[#allocation2 + $0x98] sm:$0xff]
    %v100 = vld [vmem:[#allocation2 + $0xa0] sm:$0xff]
    %v101 = vld [vmem:[#allocation2 + $0xa8] sm:$0xff]
    %v102 = vld [vmem:[#allocation2 + $0xb0] sm:$0xff]
    %v103 = vld [vmem:[#allocation2 + $0xb8] sm:$0xff]
    %v104 = vld [vmem:[#allocation2 + $0xc0] sm:$0xff]
    %v105 = vld [vmem:[#allocation2 + $0xc8] sm:$0xff]
    %v106 = vld [vmem:[#allocation2 + $0xd0] sm:$0xff]
    %v107 = vld [vmem:[#allocation2 + $0xd8] sm:$0xff]
    %v108 = vld [vmem:[#allocation2 + $0xe0] sm:$0xff]
    %v109 = vld [vmem:[#allocation2 + $0xe8] sm:$0xff]
    %v110 = vld [vmem:[#allocation2 + $0xf0] sm:$0xff]
    %v111 = vld [vmem:[#allocation2 + $0xf8] sm:$0xff]
    %v112 = vld [vmem:[#allocation2 + $0x100] sm:$0xff]
    %v113 = vld [vmem:[#allocation2 + $0x108] sm:$0xff]
    %v114 = vld [vmem:[#allocation2 + $0x110] sm:$0xff]
    %v115 = vld [vmem:[#allocation2 + $0x118] sm:$0xff]
    %v116 = vld [vmem:[#allocation2 + $0x120] sm:$0xff]
    %v117 = vld [vmem:[#allocation2 + $0x128] sm:$0xff]
    %v118 = vld [vmem:[#allocation2 + $0x130] sm:$0xff]
    %v119 = vld [vmem:[#allocation2 + $0x138] sm:$0xff]
    %v120 = vld [vmem:[#allocation2 + $0x140] sm:$0xff]
    %v121 = vld [vmem:[#allocation2 + $0x148] sm:$0xff]
    %v122 = vld [vmem:[#allocation2 + $0x150] sm:$0xff]
    %v123 = vld [vmem:[#allocation2 + $0x158] sm:$0xff]
    %v124 = vld [vmem:[#allocation2 + $0x160] sm:$0xff]
    %v125 = vld [vmem:[#allocation2 + $0x168] sm:$0xff]
    %v126 = vld [vmem:[#allocation2 + $0x170] sm:$0xff]
    %v127 = vld [vmem:[#allocation2 + $0x178] sm:$0xff]
    %128 = vmatprep.subr.mxu0 %v126
    %129 = vmatpush1.msra.mxu0 %v125
    %130 = vmatprep.subr.mxu0 %v123
    %131 = vmatpush1.msra.mxu0 %v122
    %132 = vmatprep.subr.mxu0 %v120
    %133 = vmatpush1.msra.mxu0 %v119
    %134 = vmatprep.subr.mxu0 %v117
    %135 = vmatpush1.msra.mxu0 %v116
    %136 = vmatprep.subr.mxu0 %v114
    %137 = vmatpush1.msra.mxu0 %v113
    %138 = vmatprep.subr.mxu0 %v111
    %139 = vmatpush1.msra.mxu0 %v110
    %140 = vmatprep.subr.mxu0 %v108
    %141 = vmatpush1.msra.mxu0 %v107
    %142 = vmatprep.subr.mxu0 %v105
    %143 = vmatpush1.msra.mxu0 %v104
    %144 = vmatprep.subr.mxu0 %v102
    %145 = vmatpush1.msra.mxu0 %v101
    %146 = vmatprep.subr.mxu0 %v99
    %147 = vmatpush1.msra.mxu0 %v98
    %148 = vmatprep.subr.mxu0 %v96
    %149 = vmatpush1.msra.mxu0 %v95
    %150 = vmatprep.subr.mxu0 %v93
    %151 = vmatpush1.msra.mxu0 %v92
    %152 = vmatprep.subr.mxu0 %v90
    %153 = vmatpush1.msra.mxu0 %v89
    %154 = vmatprep.subr.mxu0 %v87
    %155 = vmatpush1.msra.mxu0 %v86
    %156 = vmatprep.subr.mxu0 %v84
    %157 = vmatpush1.msra.mxu0 %v83
    %158 = vmatprep.subr.mxu0 %v81
    %159 = vmatpush1.msra.mxu0 %v80
    %160 = vmatprep.subr.mxu0 0.0
    %161 = vmatpush2.msra.mxu0 0.0
    %162 = vmatprep.subr.mxu0 0.0
    %163 = vmatpush2.msra.mxu0 0.0
    %164 = vmatprep.subr.mxu0 0.0
    %165 = vmatpush2.msra.mxu0 0.0
    %166 = vmatprep.subr.mxu0 0.0
    %167 = vmatpush2.msra.mxu0 0.0
    %168 = vmatprep.subr.mxu0 0.0
    %169 = vmatpush2.msra.mxu0 0.0
    %170 = vmatprep.subr.mxu0 0.0
    %171 = vmatpush2.msra.mxu0 0.0
    %172 = vmatprep.subr.mxu0 0.0
    %173 = vmatpush2.msra.mxu0 0.0
    %174 = vmatprep.subr.mxu0 0.0
    %175 = vmatpush2.msra.mxu0 0.0
    %176 = vmatprep.subr.mxu0 0.0
    %177 = vmatpush2.msra.mxu0 0.0
    %178 = vmatprep.subr.mxu0 0.0
    %179 = vmatpush2.msra.mxu0 0.0
    %180 = vmatprep.subr.mxu0 0.0
    %181 = vmatpush2.msra.mxu0 0.0
    %182 = vmatprep.subr.mxu0 0.0
    %183 = vmatpush2.msra.mxu0 0.0
    %184 = vmatprep.subr.mxu0 0.0
    %185 = vmatpush2.msra.mxu0 0.0
    %186 = vmatprep.subr.mxu0 0.0
    %187 = vmatpush2.msra.mxu0 0.0
    %188 = vmatprep.subr.mxu0 0.0
    %189 = vmatpush2.msra.mxu0 0.0
    %190 = vmatprep.subr.mxu0 0.0
    %191 = vmatpush2.msra.mxu0 0.0
    %192 = vmatprep.mubr.f32.mxu0 0.0
    %193 = vmatmul.mubr.f32.gmra.mxu0 %v78
    %v194 = vpop.f32.mrf.mxu0
    %v195 = vadd.f32 0.0, %v194
    %v196 = vpop.f32.mrf.mxu0
    %v197 = vadd.f32 0.0, %v196
    %198 = vmatprep.mubr.f32.mxu0 0.0
    %199 = vmatmul.mubr.f32.gmra.mxu0 %v79
    %v200 = vpop.f32.mrf.mxu0
    %v201 = vadd.f32 0.0, %v200
    %v202 = vpop.f32.mrf.mxu0
    %v203 = vadd.f32 0.0, %v202
    %204 = vdwg.mxu0
    %205 = vmatprep.subr.mxu0 0.0
    %206 = vmatpush1.msra.mxu0 %v127
    %207 = vmatprep.subr.mxu0 0.0
    %208 = vmatpush1.msra.mxu0 %v124
    %209 = vmatprep.subr.mxu0 0.0
    %210 = vmatpush1.msra.mxu0 %v121
    %211 = vmatprep.subr.mxu0 0.0
    %212 = vmatpush1.msra.mxu0 %v118
    %213 = vmatprep.subr.mxu0 0.0
    %214 = vmatpush1.msra.mxu0 %v115
    %215 = vmatprep.subr.mxu0 0.0
    %216 = vmatpush1.msra.mxu0 %v112
    %217 = vmatprep.subr.mxu0 0.0
    %218 = vmatpush1.msra.mxu0 %v109
    %219 = vmatprep.subr.mxu0 0.0
    %220 = vmatpush1.msra.mxu0 %v106
    %221 = vmatprep.subr.mxu0 0.0
    %222 = vmatpush1.msra.mxu0 %v103
    %223 = vmatprep.subr.mxu0 0.0
    %224 = vmatpush1.msra.mxu0 %v100
    %225 = vmatprep.subr.mxu0 0.0
    %226 = vmatpush1.msra.mxu0 %v97
    %227 = vmatprep.subr.mxu0 0.0
    %228 = vmatpush1.msra.mxu0 %v94
    %229 = vmatprep.subr.mxu0 0.0
    %230 = vmatpush1.msra.mxu0 %v91
    %231 = vmatprep.subr.mxu0 0.0
    %232 = vmatpush1.msra.mxu0 %v88
    %233 = vmatprep.subr.mxu0 0.0
    %234 = vmatpush1.msra.mxu0 %v85
    %235 = vmatprep.subr.mxu0 0.0
    %236 = vmatpush1.msra.mxu0 %v82
    %237 = vmatprep.subr.mxu0 0.0
    %238 = vmatpush2.msra.mxu0 0.0
    %239 = vmatprep.subr.mxu0 0.0
    %240 = vmatpush2.msra.mxu0 0.0
    %241 = vmatprep.subr.mxu0 0.0
    %242 = vmatpush2.msra.mxu0 0.0
    %243 = vmatprep.subr.mxu0 0.0
    %244 = vmatpush2.msra.mxu0 0.0
    %245 = vmatprep.subr.mxu0 0.0
    %246 = vmatpush2.msra.mxu0 0.0
    %247 = vmatprep.subr.mxu0 0.0
    %248 = vmatpush2.msra.mxu0 0.0
    %249 = vmatprep.subr.mxu0 0.0
    %250 = vmatpush2.msra.mxu0 0.0
    %251 = vmatprep.subr.mxu0 0.0
    %252 = vmatpush2.msra.mxu0 0.0
    %253 = vmatprep.subr.mxu0 0.0
    %254 = vmatpush2.msra.mxu0 0.0
    %255 = vmatprep.subr.mxu0 0.0
    %256 = vmatpush2.msra.mxu0 0.0
    %257 = vmatprep.subr.mxu0 0.0
    %258 = vmatpush2.msra.mxu0 0.0
    %259 = vmatprep.subr.mxu0 0.0
    %260 = vmatpush2.msra.mxu0 0.0
    %261 = vmatprep.subr.mxu0 0.0
    %262 = vmatpush2.msra.mxu0 0.0
    %263 = vmatprep.subr.mxu0 0.0
    %264 = vmatpush2.msra.mxu0 0.0
    %265 = vmatprep.subr.mxu0 0.0
    %266 = vmatpush2.msra.mxu0 0.0
    %267 = vmatprep.subr.mxu0 0.0
    %268 = vmatpush2.msra.mxu0 0.0
    %269 = vmatprep.mubr.f32.mxu0 0.0
    %270 = vmatmul.mubr.f32.gmra.mxu0 %v78
    %v271 = vpop.f32.mrf.mxu0
    %v272 = vadd.f32 0.0, %v271
    %v273 = vpop.f32.mrf.mxu0
    %274 = vmatprep.mubr.f32.mxu0 0.0
    %275 = vmatmul.mubr.f32.gmra.mxu0 %v79
    %v276 = vpop.f32.mrf.mxu0
    %v277 = vadd.f32 0.0, %v276
    %v278 = vpop.f32.mrf.mxu0
    %279 = vdwg.mxu0
    %v280 = vld [vmem:[%s4] sm:$0xff]
    %v281 = vld [vmem:[%s4 + $0x8] sm:$0xff]
    %v282 = vld [vmem:[%s4 + $0x10] sm:$0xff]
    %v283 = vld [vmem:[%s4 + $0x18] sm:$0xff]
    %v284 = vld [vmem:[%s4 + $0x20] sm:$0xff]
    %v285 = vld [vmem:[%s4 + $0x28] sm:$0xff]
    %v286 = vld [vmem:[%s4 + $0x30] sm:$0xff]
    %v287 = vld [vmem:[%s4 + $0x38] sm:$0xff]
    %v288 = vld [vmem:[%s4 + $0x40] sm:$0xff]
    %v289 = vld [vmem:[%s4 + $0x48] sm:$0xff]
    %v290 = vld [vmem:[%s4 + $0x50] sm:$0xff]
    %v291 = vld [vmem:[%s4 + $0x58] sm:$0xff]
    %v292 = vld [vmem:[%s4 + $0x60] sm:$0xff]
    %v293 = vld [vmem:[%s4 + $0x68] sm:$0xff]
    %v294 = vld [vmem:[%s4 + $0x70] sm:$0xff]
    %v295 = vld [vmem:[%s4 + $0x78] sm:$0xff]
    %296 = vmatprep.subr.mxu0 0.0
    %297 = vmatpush1.msra.mxu0 %v295
    %298 = vmatprep.subr.mxu0 0.0
    %299 = vmatpush1.msra.mxu0 %v294
    %300 = vmatprep.subr.mxu0 0.0
    %301 = vmatpush1.msra.mxu0 %v293
    %302 = vmatprep.subr.mxu0 0.0
    %303 = vmatpush1.msra.mxu0 %v292
    %304 = vmatprep.subr.mxu0 0.0
    %305 = vmatpush1.msra.mxu0 %v291
    %306 = vmatprep.subr.mxu0 0.0
    %307 = vmatpush1.msra.mxu0 %v290
    %308 = vmatprep.subr.mxu0 0.0
    %309 = vmatpush1.msra.mxu0 %v289
    %310 = vmatprep.subr.mxu0 0.0
    %311 = vmatpush1.msra.mxu0 %v288
    %312 = vmatprep.subr.mxu0 0.0
    %313 = vmatpush1.msra.mxu0 %v287
    %314 = vmatprep.subr.mxu0 0.0
    %315 = vmatpush1.msra.mxu0 %v286
    %316 = vmatprep.subr.mxu0 0.0
    %317 = vmatpush1.msra.mxu0 %v285
    %318 = vmatprep.subr.mxu0 0.0
    %319 = vmatpush1.msra.mxu0 %v284
    %320 = vmatprep.subr.mxu0 0.0
    %321 = vmatpush1.msra.mxu0 %v283
    %322 = vmatprep.subr.mxu0 0.0
    %323 = vmatpush1.msra.mxu0 %v282
    %324 = vmatprep.subr.mxu0 0.0
    %325 = vmatpush1.msra.mxu0 %v281
    %326 = vmatprep.subr.mxu0 0.0
    %327 = vmatpush1.msra.mxu0 %v280
    %328 = vmatprep.subr.mxu0 0.0
    %329 = vmatpush2.msra.mxu0 0.0
    %330 = vmatprep.subr.mxu0 0.0
    %331 = vmatpush2.msra.mxu0 0.0
    %332 = vmatprep.subr.mxu0 0.0
    %333 = vmatpush2.msra.mxu0 0.0
    %334 = vmatprep.subr.mxu0 0.0
    %335 = vmatpush2.msra.mxu0 0.0
    %336 = vmatprep.subr.mxu0 0.0
    %337 = vmatpush2.msra.mxu0 0.0
    %338 = vmatprep.subr.mxu0 0.0
    %339 = vmatpush2.msra.mxu0 0.0
    %340 = vmatprep.subr.mxu0 0.0
    %341 = vmatpush2.msra.mxu0 0.0
    %342 = vmatprep.subr.mxu0 0.0
    %343 = vmatpush2.msra.mxu0 0.0
    %344 = vmatprep.subr.mxu0 0.0
    %345 = vmatpush2.msra.mxu0 0.0
    %346 = vmatprep.subr.mxu0 0.0
    %347 = vmatpush2.msra.mxu0 0.0
    %348 = vmatprep.subr.mxu0 0.0
    %349 = vmatpush2.msra.mxu0 0.0
    %350 = vmatprep.subr.mxu0 0.0
    %351 = vmatpush2.msra.mxu0 0.0
    %352 = vmatprep.subr.mxu0 0.0
    %353 = vmatpush2.msra.mxu0 0.0
    %354 = vmatprep.subr.mxu0 0.0
    %355 = vmatpush2.msra.mxu0 0.0
    %356 = vmatprep.subr.mxu0 0.0
    %357 = vmatpush2.msra.mxu0 0.0
    %358 = vmatprep.subr.mxu0 0.0
    %359 = vmatpush2.msra.mxu0 0.0
    %360 = vmatprep.mubr.f32.mxu0 0.0
    %361 = vmatmul.mubr.f32.gmra.mxu0 %v78
    %v362 = vpop.f32.mrf.mxu0
    %v363 = vadd.f32 0.0, %v362
    %v364 = vpop.f32.mrf.mxu0
    %365 = vmatprep.mubr.f32.mxu0 0.0
    %366 = vmatmul.mubr.f32.gmra.mxu0 %v79
    %v367 = vpop.f32.mrf.mxu0
    %v368 = vadd.f32 0.0, %v367
    %v369 = vpop.f32.mrf.mxu0
    %370 = vdwg.mxu0
    %v371 = vld [vmem:[%s5] sm:$0xff]
    %v372 = vld [vmem:[%s5 + $0x8] sm:$0xff]
    %vm373 = vcmask 130048
    %v375 = vsel %vm373, %v363, 0
    %v378 = vsel %vm373, %v368, 0
    %380 = vmatprep.subr.mxu0 0.0
    %381 = vmatpush1.msra.mxu0 0.0
    %382 = vmatprep.subr.mxu0 0.0
    %383 = vmatpush1.msra.mxu0 0.0
    %384 = vmatprep.subr.mxu0 0.0
    %385 = vmatpush1.msra.mxu0 0.0
    %386 = vmatprep.subr.mxu0 0.0
    %387 = vmatpush1.msra.mxu0 0.0
    %388 = vmatprep.subr.mxu0 0.0
    %389 = vmatpush1.msra.mxu0 0.0
    %390 = vmatprep.subr.mxu0 0.0
    %391 = vmatpush1.msra.mxu0 0.0
    %392 = vmatprep.subr.mxu0 0.0
    %393 = vmatpush1.msra.mxu0 0.0
    %394 = vmatprep.subr.mxu0 0.0
    %395 = vmatpush1.msra.mxu0 0.0
    %396 = vmatprep.subr.mxu0 0.0
    %397 = vmatpush1.msra.mxu0 0.0
    %398 = vmatprep.subr.mxu0 0.0
    %399 = vmatpush1.msra.mxu0 0.0
    %400 = vmatprep.subr.mxu0 0.0
    %401 = vmatpush1.msra.mxu0 0.0
    %402 = vmatprep.subr.mxu0 0.0
    %403 = vmatpush1.msra.mxu0 0.0
    %404 = vmatprep.subr.mxu0 0.0
    %405 = vmatpush1.msra.mxu0 0.0
    %406 = vmatprep.subr.mxu0 0.0
    %407 = vmatpush1.msra.mxu0 0.0
    %408 = vmatprep.subr.mxu0 0.0
    %409 = vmatpush1.msra.mxu0 %v372
    %410 = vmatprep.subr.mxu0 0.0
    %411 = vmatpush1.msra.mxu0 %v371
    %412 = vmatprep.subr.mxu0 0.0
    %413 = vmatpush2.msra.mxu0 0.0
    %414 = vmatprep.subr.mxu0 0.0
    %415 = vmatpush2.msra.mxu0 0.0
    %416 = vmatprep.subr.mxu0 0.0
    %417 = vmatpush2.msra.mxu0 0.0
    %418 = vmatprep.subr.mxu0 0.0
    %419 = vmatpush2.msra.mxu0 0.0
    %420 = vmatprep.subr.mxu0 0.0
    %421 = vmatpush2.msra.mxu0 0.0
    %422 = vmatprep.subr.mxu0 0.0
    %423 = vmatpush2.msra.mxu0 0.0
    %424 = vmatprep.subr.mxu0 0.0
    %425 = vmatpush2.msra.mxu0 0.0
    %426 = vmatprep.subr.mxu0 0.0
    %427 = vmatpush2.msra.mxu0 0.0
    %428 = vmatprep.subr.mxu0 0.0
    %429 = vmatpush2.msra.mxu0 0.0
    %430 = vmatprep.subr.mxu0 0.0
    %431 = vmatpush2.msra.mxu0 0.0
    %432 = vmatprep.subr.mxu0 0.0
    %433 = vmatpush2.msra.mxu0 0.0
    %434 = vmatprep.subr.mxu0 0.0
    %435 = vmatpush2.msra.mxu0 0.0
    %436 = vmatprep.subr.mxu0 0.0
    %437 = vmatpush2.msra.mxu0 0.0
    %438 = vmatprep.subr.mxu0 0.0
    %439 = vmatpush2.msra.mxu0 0.0
    %440 = vmatprep.subr.mxu0 0.0
    %441 = vmatpush2.msra.mxu0 0.0
    %442 = vmatprep.subr.mxu0 0.0
    %443 = vmatpush2.msra.mxu0 0.0
    %444 = vmatprep.mubr.f32.mxu0 0.0
    %445 = vmatmul.mubr.f32.gmra.mxu0 %v375
    %v446 = vpop.f32.mrf.mxu0
    %v447 = vadd.f32 0.0, %v446
    %v448 = vpop.f32.mrf.mxu0
    %449 = vmatprep.mubr.f32.mxu0 0.0
    %450 = vmatmul.mubr.f32.gmra.mxu0 %v378
    %v451 = vpop.f32.mrf.mxu0
    %v452 = vadd.f32 0.0, %v451
    %v453 = vpop.f32.mrf.mxu0
    %454 = vdwg.mxu0
    %v455 = vadd.f32 %v195, %v447
    %v456 = vadd.f32 %v201, %v452
    %s457 = scalar_lea.vmem %s5, 16
    %v458 = vld [vmem:[%s457] sm:$0xff]
    %v459 = vld [vmem:[%s457 + $0x8] sm:$0xff]
    %460 = vrot.lane.b32.xlu0 %v363, 112
    %v461 = vpop.permute.xlu0 %460
    %462 = vrot.lane.b32.xlu0 %v368, 112
    %v463 = vpop.permute.xlu0 %462
    %v464 = vsel %vm373, %v461, 0
    %v466 = vsel %vm373, %v463, 0
    %468 = vmatprep.subr.mxu0 0.0
    %469 = vmatpush1.msra.mxu0 0.0
    %470 = vmatprep.subr.mxu0 0.0
    %471 = vmatpush1.msra.mxu0 0.0
    %472 = vmatprep.subr.mxu0 0.0
    %473 = vmatpush1.msra.mxu0 0.0
    %474 = vmatprep.subr.mxu0 0.0
    %475 = vmatpush1.msra.mxu0 0.0
    %476 = vmatprep.subr.mxu0 0.0
    %477 = vmatpush1.msra.mxu0 0.0
    %478 = vmatprep.subr.mxu0 0.0
    %479 = vmatpush1.msra.mxu0 0.0
    %480 = vmatprep.subr.mxu0 0.0
    %481 = vmatpush1.msra.mxu0 0.0
    %482 = vmatprep.subr.mxu0 0.0
    %483 = vmatpush1.msra.mxu0 0.0
    %484 = vmatprep.subr.mxu0 0.0
    %485 = vmatpush1.msra.mxu0 0.0
    %486 = vmatprep.subr.mxu0 0.0
    %487 = vmatpush1.msra.mxu0 0.0
    %488 = vmatprep.subr.mxu0 0.0
    %489 = vmatpush1.msra.mxu0 0.0
    %490 = vmatprep.subr.mxu0 0.0
    %491 = vmatpush1.msra.mxu0 0.0
    %492 = vmatprep.subr.mxu0 0.0
    %493 = vmatpush1.msra.mxu0 0.0
    %494 = vmatprep.subr.mxu0 0.0
    %495 = vmatpush1.msra.mxu0 0.0
    %496 = vmatprep.subr.mxu0 0.0
    %497 = vmatpush1.msra.mxu0 %v459
    %498 = vmatprep.subr.mxu0 0.0
    %499 = vmatpush1.msra.mxu0 %v458
    %500 = vmatprep.subr.mxu0 0.0
    %501 = vmatpush2.msra.mxu0 0.0
    %502 = vmatprep.subr.mxu0 0.0
    %503 = vmatpush2.msra.mxu0 0.0
    %504 = vmatprep.subr.mxu0 0.0
    %505 = vmatpush2.msra.mxu0 0.0
    %506 = vmatprep.subr.mxu0 0.0
    %507 = vmatpush2.msra.mxu0 0.0
    %508 = vmatprep.subr.mxu0 0.0
    %509 = vmatpush2.msra.mxu0 0.0
    %510 = vmatprep.subr.mxu0 0.0
    %511 = vmatpush2.msra.mxu0 0.0
    %512 = vmatprep.subr.mxu0 0.0
    %513 = vmatpush2.msra.mxu0 0.0
    %514 = vmatprep.subr.mxu0 0.0
    %515 = vmatpush2.msra.mxu0 0.0
    %516 = vmatprep.subr.mxu0 0.0
    %517 = vmatpush2.msra.mxu0 0.0
    %518 = vmatprep.subr.mxu0 0.0
    %519 = vmatpush2.msra.mxu0 0.0
    %520 = vmatprep.subr.mxu0 0.0
    %521 = vmatpush2.msra.mxu0 0.0
    %522 = vmatprep.subr.mxu0 0.0
    %523 = vmatpush2.msra.mxu0 0.0
    %524 = vmatprep.subr.mxu0 0.0
    %525 = vmatpush2.msra.mxu0 0.0
    %526 = vmatprep.subr.mxu0 0.0
    %527 = vmatpush2.msra.mxu0 0.0
    %528 = vmatprep.subr.mxu0 0.0
    %529 = vmatpush2.msra.mxu0 0.0
    %530 = vmatprep.subr.mxu0 0.0
    %531 = vmatpush2.msra.mxu0 0.0
    %532 = vmatprep.mubr.f32.mxu0 0.0
    %533 = vmatmul.mubr.f32.gmra.mxu0 %v464
    %v534 = vpop.f32.mrf.mxu0
    %v535 = vadd.f32 0.0, %v534
    %v536 = vpop.f32.mrf.mxu0
    %537 = vmatprep.mubr.f32.mxu0 0.0
    %538 = vmatmul.mubr.f32.gmra.mxu0 %v466
    %v539 = vpop.f32.mrf.mxu0
    %v540 = vadd.f32 0.0, %v539
    %v541 = vpop.f32.mrf.mxu0
    %542 = vdwg.mxu0
    %v543 = vadd.f32 %v197, %v535
    %v544 = vadd.f32 %v203, %v540
    %s545 = scalar_lea.vmem %s5, 32
    %v546 = vld [vmem:[%s545] sm:$0xff]
    %v547 = vld [vmem:[%s545 + $0x8] sm:$0xff]
    %548 = vrot.lane.b32.xlu0 %v363, 96
    %v549 = vpop.permute.xlu0 %548
    %550 = vrot.lane.b32.xlu0 %v368, 96
    %v551 = vpop.permute.xlu0 %550
    %v552 = vsel %vm373, %v549, 0
    %v554 = vsel %vm373, %v551, 0
    %556 = vmatprep.subr.mxu0 0.0
    %557 = vmatpush1.msra.mxu0 0.0
    %558 = vmatprep.subr.mxu0 0.0
    %559 = vmatpush1.msra.mxu0 0.0
    %560 = vmatprep.subr.mxu0 0.0
    %561 = vmatpush1.msra.mxu0 0.0
    %562 = vmatprep.subr.mxu0 0.0
    %563 = vmatpush1.msra.mxu0 0.0
    %564 = vmatprep.subr.mxu0 0.0
    %565 = vmatpush1.msra.mxu0 0.0
    %566 = vmatprep.subr.mxu0 0.0
    %567 = vmatpush1.msra.mxu0 0.0
    %568 = vmatprep.subr.mxu0 0.0
    %569 = vmatpush1.msra.mxu0 0.0
    %570 = vmatprep.subr.mxu0 0.0
    %571 = vmatpush1.msra.mxu0 0.0
    %572 = vmatprep.subr.mxu0 0.0
    %573 = vmatpush1.msra.mxu0 0.0
    %574 = vmatprep.subr.mxu0 0.0
    %575 = vmatpush1.msra.mxu0 0.0
    %576 = vmatprep.subr.mxu0 0.0
    %577 = vmatpush1.msra.mxu0 0.0
    %578 = vmatprep.subr.mxu0 0.0
    %579 = vmatpush1.msra.mxu0 0.0
    %580 = vmatprep.subr.mxu0 0.0
    %581 = vmatpush1.msra.mxu0 0.0
    %582 = vmatprep.subr.mxu0 0.0
    %583 = vmatpush1.msra.mxu0 0.0
    %584 = vmatprep.subr.mxu0 0.0
    %585 = vmatpush1.msra.mxu0 %v547
    %586 = vmatprep.subr.mxu0 0.0
    %587 = vmatpush1.msra.mxu0 %v546
    %588 = vmatprep.subr.mxu0 0.0
    %589 = vmatpush2.msra.mxu0 0.0
    %590 = vmatprep.subr.mxu0 0.0
    %591 = vmatpush2.msra.mxu0 0.0
    %592 = vmatprep.subr.mxu0 0.0
    %593 = vmatpush2.msra.mxu0 0.0
    %594 = vmatprep.subr.mxu0 0.0
    %595 = vmatpush2.msra.mxu0 0.0
    %596 = vmatprep.subr.mxu0 0.0
    %597 = vmatpush2.msra.mxu0 0.0
    %598 = vmatprep.subr.mxu0 0.0
    %599 = vmatpush2.msra.mxu0 0.0
    %600 = vmatprep.subr.mxu0 0.0
    %601 = vmatpush2.msra.mxu0 0.0
    %602 = vmatprep.subr.mxu0 0.0
    %603 = vmatpush2.msra.mxu0 0.0
    %604 = vmatprep.subr.mxu0 0.0
    %605 = vmatpush2.msra.mxu0 0.0
    %606 = vmatprep.subr.mxu0 0.0
    %607 = vmatpush2.msra.mxu0 0.0
    %608 = vmatprep.subr.mxu0 0.0
    %609 = vmatpush2.msra.mxu0 0.0
    %610 = vmatprep.subr.mxu0 0.0
    %611 = vmatpush2.msra.mxu0 0.0
    %612 = vmatprep.subr.mxu0 0.0
    %613 = vmatpush2.msra.mxu0 0.0
    %614 = vmatprep.subr.mxu0 0.0
    %615 = vmatpush2.msra.mxu0 0.0
    %616 = vmatprep.subr.mxu0 0.0
    %617 = vmatpush2.msra.mxu0 0.0
    %618 = vmatprep.subr.mxu0 0.0
    %619 = vmatpush2.msra.mxu0 0.0
    %620 = vmatprep.mubr.f32.mxu0 0.0
    %621 = vmatmul.mubr.f32.gmra.mxu0 %v552
    %v622 = vpop.f32.mrf.mxu0
    %v623 = vadd.f32 0.0, %v622
    %v624 = vpop.f32.mrf.mxu0
    %625 = vmatprep.mubr.f32.mxu0 0.0
    %626 = vmatmul.mubr.f32.gmra.mxu0 %v554
    %v627 = vpop.f32.mrf.mxu0
    %v628 = vadd.f32 0.0, %v627
    %v629 = vpop.f32.mrf.mxu0
    %630 = vdwg.mxu0
    %v631 = vadd.f32 %v272, %v623
    %v632 = vadd.f32 %v277, %v628
    %633 = vst [vmem:[%s6] sm:$0xff] %v455
    %634 = vst [vmem:[%s6 + $0x8] sm:$0xff] %v543
    %635 = vst [vmem:[%s6 + $0x10] sm:$0xff] %v631
    %636 = vst [vmem:[%s6 + $0x18] sm:$0xff] %v456
    %637 = vst [vmem:[%s6 + $0x20] sm:$0xff] %v544
    %638 = vst [vmem:[%s6 + $0x28] sm:$0xff] %v632
    // Predicated region
    $region30: #{_lambda_.3} parent=1 // pred_check
      _
    $region31: #{_lambda_.3} parent=1 // pred_check_branch
      %640 = sbr.rel (0) target = $region33
    $region32: #{_lambda_.3} parent=1 // pred_region
      _
    $region33: #{_lambda_.3} parent=1 // pred_fallthru
      _
    // Predicated region
    $region34: #{_lambda_.3} parent=1 // pred_check
      _
    $region35: #{_lambda_.3} parent=1 // pred_check_branch
      %642 = sbr.rel (0) target = $region37
    $region36: #{_lambda_.3} parent=1 // pred_region
      _
    $region37: #{_lambda_.3} parent=1 // pred_fallthru
      _
    %643 = vsyncpa [#allocation3], 1

// kernel: _lambda_.4
$region0: #{_lambda_.4}
  #allocation0 [shape = 'u32[]', space=smem, size = 0x4, offset = 0x4, fixed_abs, tag = 'smem constant byte address 0x4 - core index']
  #allocation1 [shape = 'u32[144,128]{1,0:T(1,128)}', space=vmem, size = 0x12000, scoped, tag = 'internal scratch']
  %s0 = inlined_call_operand.vmem [shape: f32[2,8,384], index: 0, kind: input, shape index: {}]
  %s1 = inlined_call_operand.vmem [shape: f32[2,8,128], index: 1, kind: input, shape index: {}]
  %s2 = inlined_call_operand.hbm [shape: f32[128,128], index: 2, kind: input, shape index: {}]
  %s3 = inlined_call_operand.vmem [shape: f32[1,128], index: 3, kind: input, shape index: {}]
  %s4 = inlined_call_operand.vmem [shape: f32[2,8,128], index: 4, kind: output, shape index: {}]
  %s5 = sld [smem:[#allocation0]]
  $region53: #{_lambda_.4} parent=0
    _
  %s7 = ssub.s32 1, %s5
  %s8 = scalar_select 0, %s7, %s5
  $region1: #{_lambda_.4} parent=0
    #allocation2 [shape = 'u8[65536]{0}', space=vmem, size = 0x10000, scoped, tag = 'input window, operand 2, single buffered']
    #allocation3 [shape = 's32[2]{0}', space=sflag, size = 0x8, scoped, tag = 'scoped memory for _lambda_.4']
    %9 = vsyncpa [#allocation3], 0
    loop: start=0, step=1, limit=4
    $region2: #{_lambda_.4} parent=1 // loop_pre_header
      _
    $region3: #{_lambda_.4} parent=1 // loop_header
      %s11 = sphi 0, %s15
      %p12 = scmp.ge.s32.totalorder %s11, 4
      %s21 = sphi 0, %s23
      %s24 = sphi 0, %s21
      %s25 = sphi 0, %s24
      %s41 = sphi 0, %s25
      %s47 = sphi 0, %s49
      %s50 = sphi 0, %s47
      %s51 = sphi 0, %s50
      %s67 = sphi 0, %s51
      %s71 = sphi 0, %s71
      %s73 = sphi 0, %s71
      %s74 = sphi 0, %s73
      %s88 = sphi 0, %s74
      %s92 = sphi 0, %s92
      %s94 = sphi 0, %s92
      %s95 = sphi 0, %s94
      %s109 = sphi 0, %s95
      %s115 = sphi 0, %s117
      %s118 = sphi 0, %s115
      %s119 = sphi 0, %s118
      %s135 = sphi 0, %s119
    $region4: #{_lambda_.4} parent=1 // loop_header_branch
      %14 = sbr.rel (%p12) target = $region8
    $region5: #{_lambda_.4} parent=1 // loop_body
      %s16 = ssub.s32 %s11, 1
      %s17 = ssub.s32 %s11, 2
      %s18 = sadd.s32 %s11, 1
      %s19 = ssub.s32 %s11, %s18
      %p20 = scmp.eq.s32.totalorder %s19, 0
      %s22 = sadd.s32 %s21, 1
      %s23 = scalar_select %p20, %s21, %s22
      %p26 = pneg %p20
      %p27 = scmp.eq.s32.totalorder %s11, 1
      %p28 = por %p26, %p27
      %p29 = scmp.ne.s32.totalorder %s21, %s24
      %p30 = scmp.eq.s32.totalorder %s11, 0
      %p31 = por %p29, %p30
      %p32 = scmp.ne.s32.totalorder %s21, %s24
      %p33 = scmp.eq.s32.totalorder %s16, 1
      %p34 = por %p32, %p33
      %p35 = scmp.ne.s32.totalorder %s24, %s25
      %p36 = scmp.eq.s32.totalorder %s16, 0
      %p37 = por %p35, %p36
      %p38 = scmp.ne.s32.totalorder %s24, %s25
      %p39 = scmp.eq.s32.totalorder %s17, 1
      %p40 = por %p38, %p39
      %p42 = scmp.ne.s32.totalorder %s25, %s41
      %p43 = scmp.eq.s32.totalorder %s17, 0
      %p44 = por %p42, %p43
      %s45 = ssub.s32 %s11, %s18
      %p46 = scmp.eq.s32.totalorder %s45, 0
      %s48 = sadd.s32 %s47, 1
      %s49 = scalar_select %p46, %s47, %s48
      %p52 = pneg %p46
      %p53 = scmp.eq.s32.totalorder %s11, 1
      %p54 = por %p52, %p53
      %p55 = scmp.ne.s32.totalorder %s47, %s50
      %p56 = scmp.eq.s32.totalorder %s11, 0
      %p57 = por %p55, %p56
      %p58 = scmp.ne.s32.totalorder %s47, %s50
      %p59 = scmp.eq.s32.totalorder %s16, 1
      %p60 = por %p58, %p59
      %p61 = scmp.ne.s32.totalorder %s50, %s51
      %p62 = scmp.eq.s32.totalorder %s16, 0
      %p63 = por %p61, %p62
      %p64 = scmp.ne.s32.totalorder %s50, %s51
      %p65 = scmp.eq.s32.totalorder %s17, 1
      %p66 = por %p64, %p65
      %p68 = scmp.ne.s32.totalorder %s51, %s67
      %p69 = scmp.eq.s32.totalorder %s17, 0
      %p70 = por %p68, %p69
      %s72 = sadd.s32 %s71, 1
      %p75 = scmp.eq.s32.totalorder %s11, 1
      %p76 = scmp.ne.s32.totalorder %s71, %s73
      %p77 = scmp.eq.s32.totalorder %s11, 0
      %p78 = por %p76, %p77
      %p79 = scmp.ne.s32.totalorder %s71, %s73
      %p80 = scmp.eq.s32.totalorder %s16, 1
      %p81 = por %p79, %p80
      %p82 = scmp.ne.s32.totalorder %s73, %s74
      %p83 = scmp.eq.s32.totalorder %s16, 0
      %p84 = por %p82, %p83
      %p85 = scmp.ne.s32.totalorder %s73, %s74
      %p86 = scmp.eq.s32.totalorder %s17, 1
      %p87 = por %p85, %p86
      %p89 = scmp.ne.s32.totalorder %s74, %s88
      %p90 = scmp.eq.s32.totalorder %s17, 0
      %p91 = por %p89, %p90
      %s93 = sadd.s32 %s92, 1
      %p96 = scmp.eq.s32.totalorder %s11, 1
      %p97 = scmp.ne.s32.totalorder %s92, %s94
      %p98 = scmp.eq.s32.totalorder %s11, 0
      %p99 = por %p97, %p98
      %p100 = scmp.ne.s32.totalorder %s92, %s94
      %p101 = scmp.eq.s32.totalorder %s16, 1
      %p102 = por %p100, %p101
      %p103 = scmp.ne.s32.totalorder %s94, %s95
      %p104 = scmp.eq.s32.totalorder %s16, 0
      %p105 = por %p103, %p104
      %p106 = scmp.ne.s32.totalorder %s94, %s95
      %p107 = scmp.eq.s32.totalorder %s17, 1
      %p108 = por %p106, %p107
      %p110 = scmp.ne.s32.totalorder %s95, %s109
      %p111 = scmp.eq.s32.totalorder %s17, 0
      %p112 = por %p110, %p111
      %s113 = ssub.s32 %s11, %s18
      %p114 = scmp.eq.s32.totalorder %s113, 0
      %s116 = sadd.s32 %s115, 1
      %s117 = scalar_select %p114, %s115, %s116
      %p120 = pneg %p114
      %p121 = scmp.eq.s32.totalorder %s11, 1
      %p122 = por %p120, %p121
      %p123 = scmp.ne.s32.totalorder %s115, %s118
      %p124 = scmp.eq.s32.totalorder %s11, 0
      %p125 = por %p123, %p124
      %p126 = scmp.ne.s32.totalorder %s115, %s118
      %p127 = scmp.eq.s32.totalorder %s16, 1
      %p128 = por %p126, %p127
      %p129 = scmp.ne.s32.totalorder %s118, %s119
      %p130 = scmp.eq.s32.totalorder %s16, 0
      %p131 = por %p129, %p130
      %p132 = scmp.ne.s32.totalorder %s118, %s119
      %p133 = scmp.eq.s32.totalorder %s17, 1
      %p134 = por %p132, %p133
      %p136 = scmp.ne.s32.totalorder %s119, %s135
      %p137 = scmp.eq.s32.totalorder %s17, 0
      %p138 = por %p136, %p137
      %p139 = scmp.le.s32.totalorder 1, %s11
      %p140 = scmp.lt.s32.totalorder %s11, 3
      %p141 = pnand %p139, %p140
      %p142 = pneg %p141
      // Predicated region
      $region9: #{_lambda_.4} parent=5 // pred_check
        _
      $region10: #{_lambda_.4} parent=5 // pred_check_branch
        %144 = sbr.rel (%p141) target = $region12
      $region11: #{_lambda_.4} parent=5 // pred_region
        %s145 = ssub.s32 %s11, 1
        // Predicated region
        $region13: #{_lambda_.4} parent=11 // pred_check
          %p146 = pneg %p84
        $region14: #{_lambda_.4} parent=11 // pred_check_branch
          %148 = sbr.rel (%p146) target = $region16
        $region15: #{_lambda_.4} parent=11 // pred_region
          %s150 = ssub.s32 2048, 2048
          %151 = vsyncadd [#allocation3], %s150
          %s152 = sshll.u32 [#allocation2], 4
          %s153 = int_to_ptr.vmem [resolvable:$true] %s152
          %158 = dma.hbm_to_vmem [thread:$0]  %s2, 2048, %s153, [#allocation3], 128, 128, 8
        $region16: #{_lambda_.4} parent=11 // pred_fallthru
          _
        // Predicated region
        $region17: #{_lambda_.4} parent=11 // pred_check
          %p159 = pneg %p105
        $region18: #{_lambda_.4} parent=11 // pred_check_branch
          %161 = sbr.rel (%p159) target = $region20
        $region19: #{_lambda_.4} parent=11 // pred_region
          _
        $region20: #{_lambda_.4} parent=11 // pred_fallthru
          _
      $region12: #{_lambda_.4} parent=5 // pred_fallthru
        _
      %p162 = scmp.lt.s32.totalorder %s11, 2
      // Predicated region
      $region21: #{_lambda_.4} parent=5 // pred_check
        %p163 = pneg %p162
      $region22: #{_lambda_.4} parent=5 // pred_check_branch
        %165 = sbr.rel (%p163) target = $region24
      $region23: #{_lambda_.4} parent=5 // pred_region
        // Predicated region
        $region25: #{_lambda_.4} parent=23 // pred_check
          %p166 = pneg %p31
        $region26: #{_lambda_.4} parent=23 // pred_check_branch
          %168 = sbr.rel (%p166) target = $region28
        $region27: #{_lambda_.4} parent=23 // pred_region
          %p169 = scmp.lt.s32.totalorder %s11, 1
          %s170 = scalar_select %p169, %s11, 1
          %s171 = smul.addr %s170, 3
          %s172 = smul.addr %s171, 8
          %s173 = scalar_lea.vmem %s0, %s172
        $region28: #{_lambda_.4} parent=23 // pred_fallthru
          _
        // Predicated region
        $region29: #{_lambda_.4} parent=23 // pred_check
          %p174 = pneg %p57
        $region30: #{_lambda_.4} parent=23 // pred_check_branch
          %176 = sbr.rel (%p174) target = $region32
        $region31: #{_lambda_.4} parent=23 // pred_region
          %p177 = scmp.lt.s32.totalorder %s11, 1
          %s178 = scalar_select %p177, %s11, 1
          %s179 = smul.addr %s178, 8
          %s180 = scalar_lea.vmem %s1, %s179
        $region32: #{_lambda_.4} parent=23 // pred_fallthru
          _
      $region24: #{_lambda_.4} parent=5 // pred_fallthru
        _
      %p181 = scmp.le.s32.totalorder 1, %s11
      %p182 = scmp.lt.s32.totalorder %s11, 3
      %p183 = pnand %p181, %p182
      %p184 = pneg %p183
      // Predicated region
      $region33: #{_lambda_.4} parent=5 // pred_check
        _
      $region34: #{_lambda_.4} parent=5 // pred_check_branch
        %186 = sbr.rel (%p183) target = $region36
      $region35: #{_lambda_.4} parent=5 // pred_region
        %s187 = ssub.s32 %s11, 1
        // Predicated region
        $region37: #{_lambda_.4} parent=35 // pred_check
          %p188 = pneg %p84
        $region38: #{_lambda_.4} parent=35 // pred_check_branch
          %190 = sbr.rel (%p188) target = $region40
        $region39: #{_lambda_.4} parent=35 // pred_region
          %191 = dma.done [#allocation3], 2048
        $region40: #{_lambda_.4} parent=35 // pred_fallthru
          _
        %p192 = scmp.lt.s32.totalorder %s16, 1
        %s193 = scalar_select %p192, %s16, 1
        %s194 = smul.addr %s193, 3
        %s195 = smul.addr %s194, 8
        %s196 = scalar_lea.vmem %s0, %s195
        %p197 = pneg %p37
        %p198 = pneg %p34
        %p199 = scmp.lt.s32.totalorder %s16, 1
        %s200 = scalar_select %p199, %s16, 1
        %s201 = smul.addr %s200, 8
        %s202 = scalar_lea.vmem %s1, %s201
        %p203 = pneg %p63
        %p204 = pneg %p60
        %p205 = pneg %p84
        %p206 = pneg %p81
        %p207 = pneg %p105
        %p208 = pneg %p102
        %p209 = pneg %p131
        %p210 = pneg %p128
        %p211 = scmp.lt.s32.totalorder %s16, 1
        %s212 = scalar_select %p211, %s16, 1
        %s213 = smul.addr %s212, 8
        %s214 = scalar_lea.vmem %s4, %s213
        %p215 = scmp.lt.s32.totalorder %s16, 1
        %s216 = scalar_select %p215, %s16, 1
        %s217 = smul.addr %s216, 3
        %s218 = smul.addr %s217, 8
        %s219 = scalar_lea.vmem %s0, %s218
        %p220 = scmp.lt.s32.totalorder %s16, 1
        %s221 = scalar_select %p220, %s16, 1
        %s222 = smul.addr %s221, 8
        %s223 = scalar_lea.vmem %s1, %s222
        %p224 = scmp.lt.s32.totalorder %s16, 1
        %s225 = scalar_select %p224, %s16, 1
        %s226 = smul.addr %s225, 8
        %s227 = scalar_lea.vmem %s4, %s226
        %v228 = vld [vmem:[%s219] sm:$0xff]
        %v229 = vld [vmem:[%s219 + $0x8] sm:$0xff]
        %v230 = vld [vmem:[%s219 + $0x10] sm:$0xff]
        %v231 = vld [vmem:[%s223] sm:$0xff]
        %v232 = vld [vmem:[%s3] sm:$0x1]
        %v234 = vlaneseq
        %v235 = vshrl.u32 %v234, 7
        %v236 = vsub.s32 0, %v235
        %v237 = vrot.slane %v232, %v236
        %v239 = vadd.f32 %v231, %v237
        %v240 = vmul.f32 %v228, 0.17677669
        %vm241 = vcmask 261120
        %v243 = vsel %vm241, %v240, 0
        %v246 = vsel %vm241, %v229, 0
        %248 = vmatprep.subr.mxu0 0.0
        %249 = vmatpush1.xpose.msra.mxu0 0.0
        %250 = vmatprep.subr.mxu0 0.0
        %251 = vmatpush1.xpose.msra.mxu0 0.0
        %252 = vmatprep.subr.mxu0 0.0
        %253 = vmatpush1.xpose.msra.mxu0 0.0
        %254 = vmatprep.subr.mxu0 0.0
        %255 = vmatpush1.xpose.msra.mxu0 0.0
        %256 = vmatprep.subr.mxu0 0.0
        %257 = vmatpush1.xpose.msra.mxu0 0.0
        %258 = vmatprep.subr.mxu0 0.0
        %259 = vmatpush1.xpose.msra.mxu0 0.0
        %260 = vmatprep.subr.mxu0 0.0
        %261 = vmatpush1.xpose.msra.mxu0 0.0
        %262 = vmatprep.subr.mxu0 0.0
        %263 = vmatpush1.xpose.msra.mxu0 0.0
        %264 = vmatprep.subr.mxu0 0.0
        %265 = vmatpush1.xpose.msra.mxu0 0.0
        %266 = vmatprep.subr.mxu0 0.0
        %267 = vmatpush1.xpose.msra.mxu0 0.0
        %268 = vmatprep.subr.mxu0 0.0
        %269 = vmatpush1.xpose.msra.mxu0 0.0
        %270 = vmatprep.subr.mxu0 0.0
        %271 = vmatpush1.xpose.msra.mxu0 0.0
        %272 = vmatprep.subr.mxu0 0.0
        %273 = vmatpush1.xpose.msra.mxu0 0.0
        %274 = vmatprep.subr.mxu0 0.0
        %275 = vmatpush1.xpose.msra.mxu0 0.0
        %276 = vmatprep.subr.mxu0 0.0
        %277 = vmatpush1.xpose.msra.mxu0 0.0
        %278 = vmatprep.subr.mxu0 0.0
        %279 = vmatpush1.xpose.msra.mxu0 %v246
        %280 = vmatprep.subr.mxu0 0.0
        %281 = vmatpush2.xpose.msra.mxu0 0.0
        %282 = vmatprep.subr.mxu0 0.0
        %283 = vmatpush2.xpose.msra.mxu0 0.0
        %284 = vmatprep.subr.mxu0 0.0
        %285 = vmatpush2.xpose.msra.mxu0 0.0
        %286 = vmatprep.subr.mxu0 0.0
        %287 = vmatpush2.xpose.msra.mxu0 0.0
        %288 = vmatprep.subr.mxu0 0.0
        %289 = vmatpush2.xpose.msra.mxu0 0.0
        %290 = vmatprep.subr.mxu0 0.0
        %291 = vmatpush2.xpose.msra.mxu0 0.0
        %292 = vmatprep.subr.mxu0 0.0
        %293 = vmatpush2.xpose.msra.mxu0 0.0
        %294 = vmatprep.subr.mxu0 0.0
        %295 = vmatpush2.xpose.msra.mxu0 0.0
        %296 = vmatprep.subr.mxu0 0.0
        %297 = vmatpush2.xpose.msra.mxu0 0.0
        %298 = vmatprep.subr.mxu0 0.0
        %299 = vmatpush2.xpose.msra.mxu0 0.0
        %300 = vmatprep.subr.mxu0 0.0
        %301 = vmatpush2.xpose.msra.mxu0 0.0
        %302 = vmatprep.subr.mxu0 0.0
        %303 = vmatpush2.xpose.msra.mxu0 0.0
        %304 = vmatprep.subr.mxu0 0.0
        %305 = vmatpush2.xpose.msra.mxu0 0.0
        %306 = vmatprep.subr.mxu0 0.0
        %307 = vmatpush2.xpose.msra.mxu0 0.0
        %308 = vmatprep.subr.mxu0 0.0
        %309 = vmatpush2.xpose.msra.mxu0 0.0
        %310 = vmatprep.subr.mxu0 0.0
        %311 = vmatpush2.xpose.msra.mxu0 0.0
        %312 = vmatprep.mubr.f32.mxu0 0.0
        %313 = vmatmul.mubr.f32.gmra.mxu0 %v243
        %v314 = vpop.f32.mrf.mxu0
        %v315 = vadd.f32 0.0, %v314
        %v316 = vpop.f32.mrf.mxu0
        %317 = vdwg.mxu0
        %vm318 = vcmask 64512
        %v319 = vsel %vm318, %v315, -inf
        %320 = vmax.xlane.f32.xlu0 %v319
        %v321 = vpop.xlane.xlu0 %320
        %v322 = vsub.f32 %v315, %v321
        %v323 = vmul.f32 %v322, 1.442695
        %v324 = vpow.pop %v323
        %v325 = vsel %vm318, %v324, 0.0
        %326 = vadd.xlane.f32.xlu0 %v325
        %v327 = vpop.xlane.xlu0 %326
        %v328 = vrcp.pop %v327
        %v329 = vmul.f32 %v324, %v328
        %v331 = vsel %vm318, %v329, 0
        %333 = vmatprep.subr.mxu0 0.0
        %334 = vmatpush1.msra.mxu0 0.0
        %335 = vmatprep.subr.mxu0 0.0
        %336 = vmatpush1.msra.mxu0 0.0
        %337 = vmatprep.subr.mxu0 0.0
        %338 = vmatpush1.msra.mxu0 0.0
        %339 = vmatprep.subr.mxu0 0.0
        %340 = vmatpush1.msra.mxu0 0.0
        %341 = vmatprep.subr.mxu0 0.0
        %342 = vmatpush1.msra.mxu0 0.0
        %343 = vmatprep.subr.mxu0 0.0
        %344 = vmatpush1.msra.mxu0 0.0
        %345 = vmatprep.subr.mxu0 0.0
        %346 = vmatpush1.msra.mxu0 0.0
        %347 = vmatprep.subr.mxu0 0.0
        %348 = vmatpush1.msra.mxu0 0.0
        %349 = vmatprep.subr.mxu0 0.0
        %350 = vmatpush1.msra.mxu0 0.0
        %351 = vmatprep.subr.mxu0 0.0
        %352 = vmatpush1.msra.mxu0 0.0
        %353 = vmatprep.subr.mxu0 0.0
        %354 = vmatpush1.msra.mxu0 0.0
        %355 = vmatprep.subr.mxu0 0.0
        %356 = vmatpush1.msra.mxu0 0.0
        %357 = vmatprep.subr.mxu0 0.0
        %358 = vmatpush1.msra.mxu0 0.0
        %359 = vmatprep.subr.mxu0 0.0
        %360 = vmatpush1.msra.mxu0 0.0
        %361 = vmatprep.subr.mxu0 0.0
        %362 = vmatpush1.msra.mxu0 0.0
        %363 = vmatprep.subr.mxu0 0.0
        %364 = vmatpush1.msra.mxu0 %v230
        %365 = vmatprep.subr.mxu0 0.0
        %366 = vmatpush2.msra.mxu0 0.0
        %367 = vmatprep.subr.mxu0 0.0
        %368 = vmatpush2.msra.mxu0 0.0
        %369 = vmatprep.subr.mxu0 0.0
        %370 = vmatpush2.msra.mxu0 0.0
        %371 = vmatprep.subr.mxu0 0.0
        %372 = vmatpush2.msra.mxu0 0.0
        %373 = vmatprep.subr.mxu0 0.0
        %374 = vmatpush2.msra.mxu0 0.0
        %375 = vmatprep.subr.mxu0 0.0
        %376 = vmatpush2.msra.mxu0 0.0
        %377 = vmatprep.subr.mxu0 0.0
        %378 = vmatpush2.msra.mxu0 0.0
        %379 = vmatprep.subr.mxu0 0.0
        %380 = vmatpush2.msra.mxu0 0.0
        %381 = vmatprep.subr.mxu0 0.0
        %382 = vmatpush2.msra.mxu0 0.0
        %383 = vmatprep.subr.mxu0 0.0
        %384 = vmatpush2.msra.mxu0 0.0
        %385 = vmatprep.subr.mxu0 0.0
        %386 = vmatpush2.msra.mxu0 0.0
        %387 = vmatprep.subr.mxu0 0.0
        %388 = vmatpush2.msra.mxu0 0.0
        %389 = vmatprep.subr.mxu0 0.0
        %390 = vmatpush2.msra.mxu0 0.0
        %391 = vmatprep.subr.mxu0 0.0
        %392 = vmatpush2.msra.mxu0 0.0
        %393 = vmatprep.subr.mxu0 0.0
        %394 = vmatpush2.msra.mxu0 0.0
        %395 = vmatprep.subr.mxu0 0.0
        %396 = vmatpush2.msra.mxu0 0.0
        %397 = vmatprep.mubr.f32.mxu0 0.0
        %398 = vmatmul.mubr.f32.gmra.mxu0 %v331
        %v399 = vpop.f32.mrf.mxu0
        %v400 = vadd.f32 0.0, %v399
        %v401 = vpop.f32.mrf.mxu0
        %402 = vdwg.mxu0
        %v403 = vld [vmem:[#allocation2] sm:$0xff]
        %v404 = vld [vmem:[#allocation2 + $0x8] sm:$0xff]
        %v405 = vld [vmem:[#allocation2 + $0x10] sm:$0xff]
        %v406 = vld [vmem:[#allocation2 + $0x18] sm:$0xff]
        %v408 = vsel %vm241, %v400, 0
        %410 = vmatprep.subr.mxu0 0.0
        %411 = vmatpush1.msra.mxu0 0.0
        %412 = vmatprep.subr.mxu0 0.0
        %413 = vmatpush1.msra.mxu0 0.0
        %414 = vmatprep.subr.mxu0 0.0
        %415 = vmatpush1.msra.mxu0 0.0
        %416 = vmatprep.subr.mxu0 0.0
        %417 = vmatpush1.msra.mxu0 0.0
        %418 = vmatprep.subr.mxu0 0.0
        %419 = vmatpush1.msra.mxu0 0.0
        %420 = vmatprep.subr.mxu0 0.0
        %421 = vmatpush1.msra.mxu0 0.0
        %422 = vmatprep.subr.mxu0 0.0
        %423 = vmatpush1.msra.mxu0 0.0
        %424 = vmatprep.subr.mxu0 0.0
        %425 = vmatpush1.msra.mxu0 0.0
        %426 = vmatprep.subr.mxu0 0.0
        %427 = vmatpush1.msra.mxu0 0.0
        %428 = vmatprep.subr.mxu0 0.0
        %429 = vmatpush1.msra.mxu0 0.0
        %430 = vmatprep.subr.mxu0 0.0
        %431 = vmatpush1.msra.mxu0 0.0
        %432 = vmatprep.subr.mxu0 0.0
        %433 = vmatpush1.msra.mxu0 0.0
        %434 = vmatprep.subr.mxu0 0.0
        %435 = vmatpush1.msra.mxu0 %v406
        %436 = vmatprep.subr.mxu0 0.0
        %437 = vmatpush1.msra.mxu0 %v405
        %438 = vmatprep.subr.mxu0 0.0
        %439 = vmatpush1.msra.mxu0 %v404
        %440 = vmatprep.subr.mxu0 0.0
        %441 = vmatpush1.msra.mxu0 %v403
        %442 = vmatprep.subr.mxu0 0.0
        %443 = vmatpush2.msra.mxu0 0.0
        %444 = vmatprep.subr.mxu0 0.0
        %445 = vmatpush2.msra.mxu0 0.0
        %446 = vmatprep.subr.mxu0 0.0
        %447 = vmatpush2.msra.mxu0 0.0
        %448 = vmatprep.subr.mxu0 0.0
        %449 = vmatpush2.msra.mxu0 0.0
        %450 = vmatprep.subr.mxu0 0.0
        %451 = vmatpush2.msra.mxu0 0.0
        %452 = vmatprep.subr.mxu0 0.0
        %453 = vmatpush2.msra.mxu0 0.0
        %454 = vmatprep.subr.mxu0 0.0
        %455 = vmatpush2.msra.mxu0 0.0
        %456 = vmatprep.subr.mxu0 0.0
        %457 = vmatpush2.msra.mxu0 0.0
        %458 = vmatprep.subr.mxu0 0.0
        %459 = vmatpush2.msra.mxu0 0.0
        %460 = vmatprep.subr.mxu0 0.0
        %461 = vmatpush2.msra.mxu0 0.0
        %462 = vmatprep.subr.mxu0 0.0
        %463 = vmatpush2.msra.mxu0 0.0
        %464 = vmatprep.subr.mxu0 0.0
        %465 = vmatpush2.msra.mxu0 0.0
        %466 = vmatprep.subr.mxu0 0.0
        %467 = vmatpush2.msra.mxu0 0.0
        %468 = vmatprep.subr.mxu0 0.0
        %469 = vmatpush2.msra.mxu0 0.0
        %470 = vmatprep.subr.mxu0 0.0
        %471 = vmatpush2.msra.mxu0 0.0
        %472 = vmatprep.subr.mxu0 0.0
        %473 = vmatpush2.msra.mxu0 0.0
        %474 = vmatprep.mubr.f32.mxu0 0.0
        %475 = vmatmul.mubr.f32.gmra.mxu0 %v408
        %v476 = vpop.f32.mrf.mxu0
        %v477 = vadd.f32 0.0, %v476
        %v478 = vpop.f32.mrf.mxu0
        %479 = vdwg.mxu0
        %v480 = vadd.f32 %v239, %v477
        %481 = vrot.lane.b32.xlu0 %v240, 96
        %v482 = vpop.permute.xlu0 %481
        %483 = vrot.lane.b32.xlu0 %v229, 96
        %v484 = vpop.permute.xlu0 %483
        %v485 = vsel %vm241, %v482, 0
        %v487 = vsel %vm241, %v484, 0
        %489 = vmatprep.subr.mxu0 0.0
        %490 = vmatpush1.xpose.msra.mxu0 0.0
        %491 = vmatprep.subr.mxu0 0.0
        %492 = vmatpush1.xpose.msra.mxu0 0.0
        %493 = vmatprep.subr.mxu0 0.0
        %494 = vmatpush1.xpose.msra.mxu0 0.0
        %495 = vmatprep.subr.mxu0 0.0
        %496 = vmatpush1.xpose.msra.mxu0 0.0
        %497 = vmatprep.subr.mxu0 0.0
        %498 = vmatpush1.xpose.msra.mxu0 0.0
        %499 = vmatprep.subr.mxu0 0.0
        %500 = vmatpush1.xpose.msra.mxu0 0.0
        %501 = vmatprep.subr.mxu0 0.0
        %502 = vmatpush1.xpose.msra.mxu0 0.0
        %503 = vmatprep.subr.mxu0 0.0
        %504 = vmatpush1.xpose.msra.mxu0 0.0
        %505 = vmatprep.subr.mxu0 0.0
        %506 = vmatpush1.xpose.msra.mxu0 0.0
        %507 = vmatprep.subr.mxu0 0.0
        %508 = vmatpush1.xpose.msra.mxu0 0.0
        %509 = vmatprep.subr.mxu0 0.0
        %510 = vmatpush1.xpose.msra.mxu0 0.0
        %511 = vmatprep.subr.mxu0 0.0
        %512 = vmatpush1.xpose.msra.mxu0 0.0
        %513 = vmatprep.subr.mxu0 0.0
        %514 = vmatpush1.xpose.msra.mxu0 0.0
        %515 = vmatprep.subr.mxu0 0.0
        %516 = vmatpush1.xpose.msra.mxu0 0.0
        %517 = vmatprep.subr.mxu0 0.0
        %518 = vmatpush1.xpose.msra.mxu0 0.0
        %519 = vmatprep.subr.mxu0 0.0
        %520 = vmatpush1.xpose.msra.mxu0 %v487
        %521 = vmatprep.subr.mxu0 0.0
        %522 = vmatpush2.xpose.msra.mxu0 0.0
        %523 = vmatprep.subr.mxu0 0.0
        %524 = vmatpush2.xpose.msra.mxu0 0.0
        %525 = vmatprep.subr.mxu0 0.0
        %526 = vmatpush2.xpose.msra.mxu0 0.0
        %527 = vmatprep.subr.mxu0 0.0
        %528 = vmatpush2.xpose.msra.mxu0 0.0
        %529 = vmatprep.subr.mxu0 0.0
        %530 = vmatpush2.xpose.msra.mxu0 0.0
        %531 = vmatprep.subr.mxu0 0.0
        %532 = vmatpush2.xpose.msra.mxu0 0.0
        %533 = vmatprep.subr.mxu0 0.0
        %534 = vmatpush2.xpose.msra.mxu0 0.0
        %535 = vmatprep.subr.mxu0 0.0
        %536 = vmatpush2.xpose.msra.mxu0 0.0
        %537 = vmatprep.subr.mxu0 0.0
        %538 = vmatpush2.xpose.msra.mxu0 0.0
        %539 = vmatprep.subr.mxu0 0.0
        %540 = vmatpush2.xpose.msra.mxu0 0.0
        %541 = vmatprep.subr.mxu0 0.0
        %542 = vmatpush2.xpose.msra.mxu0 0.0
        %543 = vmatprep.subr.mxu0 0.0
        %544 = vmatpush2.xpose.msra.mxu0 0.0
        %545 = vmatprep.subr.mxu0 0.0
        %546 = vmatpush2.xpose.msra.mxu0 0.0
        %547 = vmatprep.subr.mxu0 0.0
        %548 = vmatpush2.xpose.msra.mxu0 0.0
        %549 = vmatprep.subr.mxu0 0.0
        %550 = vmatpush2.xpose.msra.mxu0 0.0
        %551 = vmatprep.subr.mxu0 0.0
        %552 = vmatpush2.xpose.msra.mxu0 0.0
        %553 = vmatprep.mubr.f32.mxu0 0.0
        %554 = vmatmul.mubr.f32.gmra.mxu0 %v485
        %v555 = vpop.f32.mrf.mxu0
        %v556 = vadd.f32 0.0, %v555
        %v557 = vpop.f32.mrf.mxu0
        %558 = vdwg.mxu0
        %v559 = vsel %vm318, %v556, -inf
        %560 = vmax.xlane.f32.xlu0 %v559
        %v561 = vpop.xlane.xlu0 %560
        %v562 = vsub.f32 %v556, %v561
        %v563 = vmul.f32 %v562, 1.442695
        %v564 = vpow.pop %v563
        %v565 = vsel %vm318, %v564, 0.0
        %566 = vadd.xlane.f32.xlu0 %v565
        %v567 = vpop.xlane.xlu0 %566
        %v568 = vrcp.pop %v567
        %v569 = vmul.f32 %v564, %v568
        %571 = vrot.lane.b32.xlu0 %v230, 96
        %v572 = vpop.permute.xlu0 %571
        %v575 = vsel %vm318, %v569, 0
        %577 = vmatprep.subr.mxu0 0.0
        %578 = vmatpush1.msra.mxu0 0.0
        %579 = vmatprep.subr.mxu0 0.0
        %580 = vmatpush1.msra.mxu0 0.0
        %581 = vmatprep.subr.mxu0 0.0
        %582 = vmatpush1.msra.mxu0 0.0
        %583 = vmatprep.subr.mxu0 0.0
        %584 = vmatpush1.msra.mxu0 0.0
        %585 = vmatprep.subr.mxu0 0.0
        %586 = vmatpush1.msra.mxu0 0.0
        %587 = vmatprep.subr.mxu0 0.0
        %588 = vmatpush1.msra.mxu0 0.0
        %589 = vmatprep.subr.mxu0 0.0
        %590 = vmatpush1.msra.mxu0 0.0
        %591 = vmatprep.subr.mxu0 0.0
        %592 = vmatpush1.msra.mxu0 0.0
        %593 = vmatprep.subr.mxu0 0.0
        %594 = vmatpush1.msra.mxu0 0.0
        %595 = vmatprep.subr.mxu0 0.0
        %596 = vmatpush1.msra.mxu0 0.0
        %597 = vmatprep.subr.mxu0 0.0
        %598 = vmatpush1.msra.mxu0 0.0
        %599 = vmatprep.subr.mxu0 0.0
        %600 = vmatpush1.msra.mxu0 0.0
        %601 = vmatprep.subr.mxu0 0.0
        %602 = vmatpush1.msra.mxu0 0.0
        %603 = vmatprep.subr.mxu0 0.0
        %604 = vmatpush1.msra.mxu0 0.0
        %605 = vmatprep.subr.mxu0 0.0
        %606 = vmatpush1.msra.mxu0 0.0
        %607 = vmatprep.subr.mxu0 0.0
        %608 = vmatpush1.msra.mxu0 %v572
        %609 = vmatprep.subr.mxu0 0.0
        %610 = vmatpush2.msra.mxu0 0.0
        %611 = vmatprep.subr.mxu0 0.0
        %612 = vmatpush2.msra.mxu0 0.0
        %613 = vmatprep.subr.mxu0 0.0
        %614 = vmatpush2.msra.mxu0 0.0
        %615 = vmatprep.subr.mxu0 0.0
        %616 = vmatpush2.msra.mxu0 0.0
        %617 = vmatprep.subr.mxu0 0.0
        %618 = vmatpush2.msra.mxu0 0.0
        %619 = vmatprep.subr.mxu0 0.0
        %620 = vmatpush2.msra.mxu0 0.0
        %621 = vmatprep.subr.mxu0 0.0
        %622 = vmatpush2.msra.mxu0 0.0
        %623 = vmatprep.subr.mxu0 0.0
        %624 = vmatpush2.msra.mxu0 0.0
        %625 = vmatprep.subr.mxu0 0.0
        %626 = vmatpush2.msra.mxu0 0.0
        %627 = vmatprep.subr.mxu0 0.0
        %628 = vmatpush2.msra.mxu0 0.0
        %629 = vmatprep.subr.mxu0 0.0
        %630 = vmatpush2.msra.mxu0 0.0
        %631 = vmatprep.subr.mxu0 0.0
        %632 = vmatpush2.msra.mxu0 0.0
        %633 = vmatprep.subr.mxu0 0.0
        %634 = vmatpush2.msra.mxu0 0.0
        %635 = vmatprep.subr.mxu0 0.0
        %636 = vmatpush2.msra.mxu0 0.0
        %637 = vmatprep.subr.mxu0 0.0
        %638 = vmatpush2.msra.mxu0 0.0
        %639 = vmatprep.subr.mxu0 0.0
        %640 = vmatpush2.msra.mxu0 0.0
        %641 = vmatprep.mubr.f32.mxu0 0.0
        %642 = vmatmul.mubr.f32.gmra.mxu0 %v575
        %v643 = vpop.f32.mrf.mxu0
        %v644 = vadd.f32 0.0, %v643
        %v645 = vpop.f32.mrf.mxu0
        %646 = vdwg.mxu0
        %v647 = vld [vmem:[#allocation2 + $0x20] sm:$0xff]
        %v648 = vld [vmem:[#allocation2 + $0x28] sm:$0xff]
        %v649 = vld [vmem:[#allocation2 + $0x30] sm:$0xff]
        %v650 = vld [vmem:[#allocation2 + $0x38] sm:$0xff]
        %v652 = vsel %vm241, %v644, 0
        %654 = vmatprep.subr.mxu0 0.0
        %655 = vmatpush1.msra.mxu0 0.0
        %656 = vmatprep.subr.mxu0 0.0
        %657 = vmatpush1.msra.mxu0 0.0
        %658 = vmatprep.subr.mxu0 0.0
        %659 = vmatpush1.msra.mxu0 0.0
        %660 = vmatprep.subr.mxu0 0.0
        %661 = vmatpush1.msra.mxu0 0.0
        %662 = vmatprep.subr.mxu0 0.0
        %663 = vmatpush1.msra.mxu0 0.0
        %664 = vmatprep.subr.mxu0 0.0
        %665 = vmatpush1.msra.mxu0 0.0
        %666 = vmatprep.subr.mxu0 0.0
        %667 = vmatpush1.msra.mxu0 0.0
        %668 = vmatprep.subr.mxu0 0.0
        %669 = vmatpush1.msra.mxu0 0.0
        %670 = vmatprep.subr.mxu0 0.0
        %671 = vmatpush1.msra.mxu0 0.0
        %672 = vmatprep.subr.mxu0 0.0
        %673 = vmatpush1.msra.mxu0 0.0
        %674 = vmatprep.subr.mxu0 0.0
        %675 = vmatpush1.msra.mxu0 0.0
        %676 = vmatprep.subr.mxu0 0.0
        %677 = vmatpush1.msra.mxu0 0.0
        %678 = vmatprep.subr.mxu0 0.0
        %679 = vmatpush1.msra.mxu0 %v650
        %680 = vmatprep.subr.mxu0 0.0
        %681 = vmatpush1.msra.mxu0 %v649
        %682 = vmatprep.subr.mxu0 0.0
        %683 = vmatpush1.msra.mxu0 %v648
        %684 = vmatprep.subr.mxu0 0.0
        %685 = vmatpush1.msra.mxu0 %v647
        %686 = vmatprep.subr.mxu0 0.0
        %687 = vmatpush2.msra.mxu0 0.0
        %688 = vmatprep.subr.mxu0 0.0
        %689 = vmatpush2.msra.mxu0 0.0
        %690 = vmatprep.subr.mxu0 0.0
        %691 = vmatpush2.msra.mxu0 0.0
        %692 = vmatprep.subr.mxu0 0.0
        %693 = vmatpush2.msra.mxu0 0.0
        %694 = vmatprep.subr.mxu0 0.0
        %695 = vmatpush2.msra.mxu0 0.0
        %696 = vmatprep.subr.mxu0 0.0
        %697 = vmatpush2.msra.mxu0 0.0
        %698 = vmatprep.subr.mxu0 0.0
        %699 = vmatpush2.msra.mxu0 0.0
        %700 = vmatprep.subr.mxu0 0.0
        %701 = vmatpush2.msra.mxu0 0.0
        %702 = vmatprep.subr.mxu0 0.0
        %703 = vmatpush2.msra.mxu0 0.0
        %704 = vmatprep.subr.mxu0 0.0
        %705 = vmatpush2.msra.mxu0 0.0
        %706 = vmatprep.subr.mxu0 0.0
        %707 = vmatpush2.msra.mxu0 0.0
        %708 = vmatprep.subr.mxu0 0.0
        %709 = vmatpush2.msra.mxu0 0.0
        %710 = vmatprep.subr.mxu0 0.0
        %711 = vmatpush2.msra.mxu0 0.0
        %712 = vmatprep.subr.mxu0 0.0
        %713 = vmatpush2.msra.mxu0 0.0
        %714 = vmatprep.subr.mxu0 0.0
        %715 = vmatpush2.msra.mxu0 0.0
        %716 = vmatprep.subr.mxu0 0.0
        %717 = vmatpush2.msra.mxu0 0.0
        %718 = vmatprep.mubr.f32.mxu0 0.0
        %719 = vmatmul.mubr.f32.gmra.mxu0 %v652
        %v720 = vpop.f32.mrf.mxu0
        %v721 = vadd.f32 0.0, %v720
        %v722 = vpop.f32.mrf.mxu0
        %723 = vdwg.mxu0
        %v724 = vadd.f32 %v480, %v721
        %725 = vrot.lane.b32.xlu0 %v240, 64
        %v726 = vpop.permute.xlu0 %725
        %727 = vrot.lane.b32.xlu0 %v229, 64
        %v728 = vpop.permute.xlu0 %727
        %v729 = vsel %vm241, %v726, 0
        %v731 = vsel %vm241, %v728, 0
        %733 = vmatprep.subr.mxu0 0.0
        %734 = vmatpush1.xpose.msra.mxu0 0.0
        %735 = vmatprep.subr.mxu0 0.0
        %736 = vmatpush1.xpose.msra.mxu0 0.0
        %737 = vmatprep.subr.mxu0 0.0
        %738 = vmatpush1.xpose.msra.mxu0 0.0
        %739 = vmatprep.subr.mxu0 0.0
        %740 = vmatpush1.xpose.msra.mxu0 0.0
        %741 = vmatprep.subr.mxu0 0.0
        %742 = vmatpush1.xpose.msra.mxu0 0.0
        %743 = vmatprep.subr.mxu0 0.0
        %744 = vmatpush1.xpose.msra.mxu0 0.0
        %745 = vmatprep.subr.mxu0 0.0
        %746 = vmatpush1.xpose.msra.mxu0 0.0
        %747 = vmatprep.subr.mxu0 0.0
        %748 = vmatpush1.xpose.msra.mxu0 0.0
        %749 = vmatprep.subr.mxu0 0.0
        %750 = vmatpush1.xpose.msra.mxu0 0.0
        %751 = vmatprep.subr.mxu0 0.0
        %752 = vmatpush1.xpose.msra.mxu0 0.0
        %753 = vmatprep.subr.mxu0 0.0
        %754 = vmatpush1.xpose.msra.mxu0 0.0
        %755 = vmatprep.subr.mxu0 0.0
        %756 = vmatpush1.xpose.msra.mxu0 0.0
        %757 = vmatprep.subr.mxu0 0.0
        %758 = vmatpush1.xpose.msra.mxu0 0.0
        %759 = vmatprep.subr.mxu0 0.0
        %760 = vmatpush1.xpose.msra.mxu0 0.0
        %761 = vmatprep.subr.mxu0 0.0
        %762 = vmatpush1.xpose.msra.mxu0 0.0
        %763 = vmatprep.subr.mxu0 0.0
        %764 = vmatpush1.xpose.msra.mxu0 %v731
        %765 = vmatprep.subr.mxu0 0.0
        %766 = vmatpush2.xpose.msra.mxu0 0.0
        %767 = vmatprep.subr.mxu0 0.0
        %768 = vmatpush2.xpose.msra.mxu0 0.0
        %769 = vmatprep.subr.mxu0 0.0
        %770 = vmatpush2.xpose.msra.mxu0 0.0
        %771 = vmatprep.subr.mxu0 0.0
        %772 = vmatpush2.xpose.msra.mxu0 0.0
        %773 = vmatprep.subr.mxu0 0.0
        %774 = vmatpush2.xpose.msra.mxu0 0.0
        %775 = vmatprep.subr.mxu0 0.0
        %776 = vmatpush2.xpose.msra.mxu0 0.0
        %777 = vmatprep.subr.mxu0 0.0
        %778 = vmatpush2.xpose.msra.mxu0 0.0
        %779 = vmatprep.subr.mxu0 0.0
        %780 = vmatpush2.xpose.msra.mxu0 0.0
        %781 = vmatprep.subr.mxu0 0.0
        %782 = vmatpush2.xpose.msra.mxu0 0.0
        %783 = vmatprep.subr.mxu0 0.0
        %784 = vmatpush2.xpose.msra.mxu0 0.0
        %785 = vmatprep.subr.mxu0 0.0
        %786 = vmatpush2.xpose.msra.mxu0 0.0
        %787 = vmatprep.subr.mxu0 0.0
        %788 = vmatpush2.xpose.msra.mxu0 0.0
        %789 = vmatprep.subr.mxu0 0.0
        %790 = vmatpush2.xpose.msra.mxu0 0.0
        %791 = vmatprep.subr.mxu0 0.0
        %792 = vmatpush2.xpose.msra.mxu0 0.0
        %793 = vmatprep.subr.mxu0 0.0
        %794 = vmatpush2.xpose.msra.mxu0 0.0
        %795 = vmatprep.subr.mxu0 0.0
        %796 = vmatpush2.xpose.msra.mxu0 0.0
        %797 = vmatprep.mubr.f32.mxu0 0.0
        %798 = vmatmul.mubr.f32.gmra.mxu0 %v729
        %v799 = vpop.f32.mrf.mxu0
        %v800 = vadd.f32 0.0, %v799
        %v801 = vpop.f32.mrf.mxu0
        %802 = vdwg.mxu0
        %v803 = vsel %vm318, %v800, -inf
        %804 = vmax.xlane.f32.xlu0 %v803
        %v805 = vpop.xlane.xlu0 %804
        %v806 = vsub.f32 %v800, %v805
        %v807 = vmul.f32 %v806, 1.442695
        %v808 = vpow.pop %v807
        %v809 = vsel %vm318, %v808, 0.0
        %810 = vadd.xlane.f32.xlu0 %v809
        %v811 = vpop.xlane.xlu0 %810
        %v812 = vrcp.pop %v811
        %v813 = vmul.f32 %v808, %v812
        %814 = vrot.lane.b32.xlu0 %v230, 64
        %v815 = vpop.permute.xlu0 %814
        %v818 = vsel %vm318, %v813, 0
        %820 = vmatprep.subr.mxu0 0.0
        %821 = vmatpush1.msra.mxu0 0.0
        %822 = vmatprep.subr.mxu0 0.0
        %823 = vmatpush1.msra.mxu0 0.0
        %824 = vmatprep.subr.mxu0 0.0
        %825 = vmatpush1.msra.mxu0 0.0
        %826 = vmatprep.subr.mxu0 0.0
        %827 = vmatpush1.msra.mxu0 0.0
        %828 = vmatprep.subr.mxu0 0.0
        %829 = vmatpush1.msra.mxu0 0.0
        %830 = vmatprep.subr.mxu0 0.0
        %831 = vmatpush1.msra.mxu0 0.0
        %832 = vmatprep.subr.mxu0 0.0
        %833 = vmatpush1.msra.mxu0 0.0
        %834 = vmatprep.subr.mxu0 0.0
        %835 = vmatpush1.msra.mxu0 0.0
        %836 = vmatprep.subr.mxu0 0.0
        %837 = vmatpush1.msra.mxu0 0.0
        %838 = vmatprep.subr.mxu0 0.0
        %839 = vmatpush1.msra.mxu0 0.0
        %840 = vmatprep.subr.mxu0 0.0
        %841 = vmatpush1.msra.mxu0 0.0
        %842 = vmatprep.subr.mxu0 0.0
        %843 = vmatpush1.msra.mxu0 0.0
        %844 = vmatprep.subr.mxu0 0.0
        %845 = vmatpush1.msra.mxu0 0.0
        %846 = vmatprep.subr.mxu0 0.0
        %847 = vmatpush1.msra.mxu0 0.0
        %848 = vmatprep.subr.mxu0 0.0
        %849 = vmatpush1.msra.mxu0 0.0
        %850 = vmatprep.subr.mxu0 0.0
        %851 = vmatpush1.msra.mxu0 %v815
        %852 = vmatprep.subr.mxu0 0.0
        %853 = vmatpush2.msra.mxu0 0.0
        %854 = vmatprep.subr.mxu0 0.0
        %855 = vmatpush2.msra.mxu0 0.0
        %856 = vmatprep.subr.mxu0 0.0
        %857 = vmatpush2.msra.mxu0 0.0
        %858 = vmatprep.subr.mxu0 0.0
        %859 = vmatpush2.msra.mxu0 0.0
        %860 = vmatprep.subr.mxu0 0.0
        %861 = vmatpush2.msra.mxu0 0.0
        %862 = vmatprep.subr.mxu0 0.0
        %863 = vmatpush2.msra.mxu0 0.0
        %864 = vmatprep.subr.mxu0 0.0
        %865 = vmatpush2.msra.mxu0 0.0
        %866 = vmatprep.subr.mxu0 0.0
        %867 = vmatpush2.msra.mxu0 0.0
        %868 = vmatprep.subr.mxu0 0.0
        %869 = vmatpush2.msra.mxu0 0.0
        %870 = vmatprep.subr.mxu0 0.0
        %871 = vmatpush2.msra.mxu0 0.0
        %872 = vmatprep.subr.mxu0 0.0
        %873 = vmatpush2.msra.mxu0 0.0
        %874 = vmatprep.subr.mxu0 0.0
        %875 = vmatpush2.msra.mxu0 0.0
        %876 = vmatprep.subr.mxu0 0.0
        %877 = vmatpush2.msra.mxu0 0.0
        %878 = vmatprep.subr.mxu0 0.0
        %879 = vmatpush2.msra.mxu0 0.0
        %880 = vmatprep.subr.mxu0 0.0
        %881 = vmatpush2.msra.mxu0 0.0
        %882 = vmatprep.subr.mxu0 0.0
        %883 = vmatpush2.msra.mxu0 0.0
        %884 = vmatprep.mubr.f32.mxu0 0.0
        %885 = vmatmul.mubr.f32.gmra.mxu0 %v818
        %v886 = vpop.f32.mrf.mxu0
        %v887 = vadd.f32 0.0, %v886
        %v888 = vpop.f32.mrf.mxu0
        %889 = vdwg.mxu0
        %v890 = vld [vmem:[#allocation2 + $0x40] sm:$0xff]
        %v891 = vld [vmem:[#allocation2 + $0x48] sm:$0xff]
        %v892 = vld [vmem:[#allocation2 + $0x50] sm:$0xff]
        %v893 = vld [vmem:[#allocation2 + $0x58] sm:$0xff]
        %v895 = vsel %vm241, %v887, 0
        %897 = vmatprep.subr.mxu0 0.0
        %898 = vmatpush1.msra.mxu0 0.0
        %899 = vmatprep.subr.mxu0 0.0
        %900 = vmatpush1.msra.mxu0 0.0
        %901 = vmatprep.subr.mxu0 0.0
        %902 = vmatpush1.msra.mxu0 0.0
        %903 = vmatprep.subr.mxu0 0.0
        %904 = vmatpush1.msra.mxu0 0.0
        %905 = vmatprep.subr.mxu0 0.0
        %906 = vmatpush1.msra.mxu0 0.0
        %907 = vmatprep.subr.mxu0 0.0
        %908 = vmatpush1.msra.mxu0 0.0
        %909 = vmatprep.subr.mxu0 0.0
        %910 = vmatpush1.msra.mxu0 0.0
        %911 = vmatprep.subr.mxu0 0.0
        %912 = vmatpush1.msra.mxu0 0.0
        %913 = vmatprep.subr.mxu0 0.0
        %914 = vmatpush1.msra.mxu0 0.0
        %915 = vmatprep.subr.mxu0 0.0
        %916 = vmatpush1.msra.mxu0 0.0
        %917 = vmatprep.subr.mxu0 0.0
        %918 = vmatpush1.msra.mxu0 0.0
        %919 = vmatprep.subr.mxu0 0.0
        %920 = vmatpush1.msra.mxu0 0.0
        %921 = vmatprep.subr.mxu0 0.0
        %922 = vmatpush1.msra.mxu0 %v893
        %923 = vmatprep.subr.mxu0 0.0
        %924 = vmatpush1.msra.mxu0 %v892
        %925 = vmatprep.subr.mxu0 0.0
        %926 = vmatpush1.msra.mxu0 %v891
        %927 = vmatprep.subr.mxu0 0.0
        %928 = vmatpush1.msra.mxu0 %v890
        %929 = vmatprep.subr.mxu0 0.0
        %930 = vmatpush2.msra.mxu0 0.0
        %931 = vmatprep.subr.mxu0 0.0
        %932 = vmatpush2.msra.mxu0 0.0
        %933 = vmatprep.subr.mxu0 0.0
        %934 = vmatpush2.msra.mxu0 0.0
        %935 = vmatprep.subr.mxu0 0.0
        %936 = vmatpush2.msra.mxu0 0.0
        %937 = vmatprep.subr.mxu0 0.0
        %938 = vmatpush2.msra.mxu0 0.0
        %939 = vmatprep.subr.mxu0 0.0
        %940 = vmatpush2.msra.mxu0 0.0
        %941 = vmatprep.subr.mxu0 0.0
        %942 = vmatpush2.msra.mxu0 0.0
        %943 = vmatprep.subr.mxu0 0.0
        %944 = vmatpush2.msra.mxu0 0.0
        %945 = vmatprep.subr.mxu0 0.0
        %946 = vmatpush2.msra.mxu0 0.0
        %947 = vmatprep.subr.mxu0 0.0
        %948 = vmatpush2.msra.mxu0 0.0
        %949 = vmatprep.subr.mxu0 0.0
        %950 = vmatpush2.msra.mxu0 0.0
        %951 = vmatprep.subr.mxu0 0.0
        %952 = vmatpush2.msra.mxu0 0.0
        %953 = vmatprep.subr.mxu0 0.0
        %954 = vmatpush2.msra.mxu0 0.0
        %955 = vmatprep.subr.mxu0 0.0
        %956 = vmatpush2.msra.mxu0 0.0
        %957 = vmatprep.subr.mxu0 0.0
        %958 = vmatpush2.msra.mxu0 0.0
        %959 = vmatprep.subr.mxu0 0.0
        %960 = vmatpush2.msra.mxu0 0.0
        %961 = vmatprep.mubr.f32.mxu0 0.0
        %962 = vmatmul.mubr.f32.gmra.mxu0 %v895
        %v963 = vpop.f32.mrf.mxu0
        %v964 = vadd.f32 0.0, %v963
        %v965 = vpop.f32.mrf.mxu0
        %966 = vdwg.mxu0
        %v967 = vadd.f32 %v724, %v964
        %968 = vrot.lane.b32.xlu0 %v240, 32
        %v969 = vpop.permute.xlu0 %968
        %970 = vrot.lane.b32.xlu0 %v229, 32
        %v971 = vpop.permute.xlu0 %970
        %v972 = vsel %vm241, %v969, 0
        %v974 = vsel %vm241, %v971, 0
        %976 = vmatprep.subr.mxu0 0.0
        %977 = vmatpush1.xpose.msra.mxu0 0.0
        %978 = vmatprep.subr.mxu0 0.0
        %979 = vmatpush1.xpose.msra.mxu0 0.0
        %980 = vmatprep.subr.mxu0 0.0
        %981 = vmatpush1.xpose.msra.mxu0 0.0
        %982 = vmatprep.subr.mxu0 0.0
        %983 = vmatpush1.xpose.msra.mxu0 0.0
        %984 = vmatprep.subr.mxu0 0.0
        %985 = vmatpush1.xpose.msra.mxu0 0.0
        %986 = vmatprep.subr.mxu0 0.0
        %987 = vmatpush1.xpose.msra.mxu0 0.0
        %988 = vmatprep.subr.mxu0 0.0
        %989 = vmatpush1.xpose.msra.mxu0 0.0
        %990 = vmatprep.subr.mxu0 0.0
        %991 = vmatpush1.xpose.msra.mxu0 0.0
        %992 = vmatprep.subr.mxu0 0.0
        %993 = vmatpush1.xpose.msra.mxu0 0.0
        %994 = vmatprep.subr.mxu0 0.0
        %995 = vmatpush1.xpose.msra.mxu0 0.0
        %996 = vmatprep.subr.mxu0 0.0
        %997 = vmatpush1.xpose.msra.mxu0 0.0
        %998 = vmatprep.subr.mxu0 0.0
        %999 = vmatpush1.xpose.msra.mxu0 0.0
        %1000 = vmatprep.subr.mxu0 0.0
        %1001 = vmatpush1.xpose.msra.mxu0 0.0
        %1002 = vmatprep.subr.mxu0 0.0
        %1003 = vmatpush1.xpose.msra.mxu0 0.0
        %1004 = vmatprep.subr.mxu0 0.0
        %1005 = vmatpush1.xpose.msra.mxu0 0.0
        %1006 = vmatprep.subr.mxu0 0.0
        %1007 = vmatpush1.xpose.msra.mxu0 %v974
        %1008 = vmatprep.subr.mxu0 0.0
        %1009 = vmatpush2.xpose.msra.mxu0 0.0
        %1010 = vmatprep.subr.mxu0 0.0
        %1011 = vmatpush2.xpose.msra.mxu0 0.0
        %1012 = vmatprep.subr.mxu0 0.0
        %1013 = vmatpush2.xpose.msra.mxu0 0.0
        %1014 = vmatprep.subr.mxu0 0.0
        %1015 = vmatpush2.xpose.msra.mxu0 0.0
        %1016 = vmatprep.subr.mxu0 0.0
        %1017 = vmatpush2.xpose.msra.mxu0 0.0
        %1018 = vmatprep.subr.mxu0 0.0
        %1019 = vmatpush2.xpose.msra.mxu0 0.0
        %1020 = vmatprep.subr.mxu0 0.0
        %1021 = vmatpush2.xpose.msra.mxu0 0.0
        %1022 = vmatprep.subr.mxu0 0.0
        %1023 = vmatpush2.xpose.msra.mxu0 0.0
        %1024 = vmatprep.subr.mxu0 0.0
        %1025 = vmatpush2.xpose.msra.mxu0 0.0
        %1026 = vmatprep.subr.mxu0 0.0
        %1027 = vmatpush2.xpose.msra.mxu0 0.0
        %1028 = vmatprep.subr.mxu0 0.0
        %1029 = vmatpush2.xpose.msra.mxu0 0.0
        %1030 = vmatprep.subr.mxu0 0.0
        %1031 = vmatpush2.xpose.msra.mxu0 0.0
        %1032 = vmatprep.subr.mxu0 0.0
        %1033 = vmatpush2.xpose.msra.mxu0 0.0
        %1034 = vmatprep.subr.mxu0 0.0
        %1035 = vmatpush2.xpose.msra.mxu0 0.0
        %1036 = vmatprep.subr.mxu0 0.0
        %1037 = vmatpush2.xpose.msra.mxu0 0.0
        %1038 = vmatprep.subr.mxu0 0.0
        %1039 = vmatpush2.xpose.msra.mxu0 0.0
        %1040 = vmatprep.mubr.f32.mxu0 0.0
        %1041 = vmatmul.mubr.f32.gmra.mxu0 %v972
        %v1042 = vpop.f32.mrf.mxu0
        %v1043 = vadd.f32 0.0, %v1042
        %v1044 = vpop.f32.mrf.mxu0
        %1045 = vdwg.mxu0
        %v1046 = vsel %vm318, %v1043, -inf
        %1047 = vmax.xlane.f32.xlu0 %v1046
        %v1048 = vpop.xlane.xlu0 %1047
        %v1049 = vsub.f32 %v1043, %v1048
        %v1050 = vmul.f32 %v1049, 1.442695
        %v1051 = vpow.pop %v1050
        %v1052 = vsel %vm318, %v1051, 0.0
        %1053 = vadd.xlane.f32.xlu0 %v1052
        %v1054 = vpop.xlane.xlu0 %1053
        %v1055 = vrcp.pop %v1054
        %v1056 = vmul.f32 %v1051, %v1055
        %1057 = vrot.lane.b32.xlu0 %v230, 32
        %v1058 = vpop.permute.xlu0 %1057
        %v1061 = vsel %vm318, %v1056, 0
        %1063 = vmatprep.subr.mxu0 0.0
        %1064 = vmatpush1.msra.mxu0 0.0
        %1065 = vmatprep.subr.mxu0 0.0
        %1066 = vmatpush1.msra.mxu0 0.0
        %1067 = vmatprep.subr.mxu0 0.0
        %1068 = vmatpush1.msra.mxu0 0.0
        %1069 = vmatprep.subr.mxu0 0.0
        %1070 = vmatpush1.msra.mxu0 0.0
        %1071 = vmatprep.subr.mxu0 0.0
        %1072 = vmatpush1.msra.mxu0 0.0
        %1073 = vmatprep.subr.mxu0 0.0
        %1074 = vmatpush1.msra.mxu0 0.0
        %1075 = vmatprep.subr.mxu0 0.0
        %1076 = vmatpush1.msra.mxu0 0.0
        %1077 = vmatprep.subr.mxu0 0.0
        %1078 = vmatpush1.msra.mxu0 0.0
        %1079 = vmatprep.subr.mxu0 0.0
        %1080 = vmatpush1.msra.mxu0 0.0
        %1081 = vmatprep.subr.mxu0 0.0
        %1082 = vmatpush1.msra.mxu0 0.0
        %1083 = vmatprep.subr.mxu0 0.0
        %1084 = vmatpush1.msra.mxu0 0.0
        %1085 = vmatprep.subr.mxu0 0.0
        %1086 = vmatpush1.msra.mxu0 0.0
        %1087 = vmatprep.subr.mxu0 0.0
        %1088 = vmatpush1.msra.mxu0 0.0
        %1089 = vmatprep.subr.mxu0 0.0
        %1090 = vmatpush1.msra.mxu0 0.0
        %1091 = vmatprep.subr.mxu0 0.0
        %1092 = vmatpush1.msra.mxu0 0.0
        %1093 = vmatprep.subr.mxu0 0.0
        %1094 = vmatpush1.msra.mxu0 %v1058
        %1095 = vmatprep.subr.mxu0 0.0
        %1096 = vmatpush2.msra.mxu0 0.0
        %1097 = vmatprep.subr.mxu0 0.0
        %1098 = vmatpush2.msra.mxu0 0.0
        %1099 = vmatprep.subr.mxu0 0.0
        %1100 = vmatpush2.msra.mxu0 0.0
        %1101 = vmatprep.subr.mxu0 0.0
        %1102 = vmatpush2.msra.mxu0 0.0
        %1103 = vmatprep.subr.mxu0 0.0
        %1104 = vmatpush2.msra.mxu0 0.0
        %1105 = vmatprep.subr.mxu0 0.0
        %1106 = vmatpush2.msra.mxu0 0.0
        %1107 = vmatprep.subr.mxu0 0.0
        %1108 = vmatpush2.msra.mxu0 0.0
        %1109 = vmatprep.subr.mxu0 0.0
        %1110 = vmatpush2.msra.mxu0 0.0
        %1111 = vmatprep.subr.mxu0 0.0
        %1112 = vmatpush2.msra.mxu0 0.0
        %1113 = vmatprep.subr.mxu0 0.0
        %1114 = vmatpush2.msra.mxu0 0.0
        %1115 = vmatprep.subr.mxu0 0.0
        %1116 = vmatpush2.msra.mxu0 0.0
        %1117 = vmatprep.subr.mxu0 0.0
        %1118 = vmatpush2.msra.mxu0 0.0
        %1119 = vmatprep.subr.mxu0 0.0
        %1120 = vmatpush2.msra.mxu0 0.0
        %1121 = vmatprep.subr.mxu0 0.0
        %1122 = vmatpush2.msra.mxu0 0.0
        %1123 = vmatprep.subr.mxu0 0.0
        %1124 = vmatpush2.msra.mxu0 0.0
        %1125 = vmatprep.subr.mxu0 0.0
        %1126 = vmatpush2.msra.mxu0 0.0
        %1127 = vmatprep.mubr.f32.mxu0 0.0
        %1128 = vmatmul.mubr.f32.gmra.mxu0 %v1061
        %v1129 = vpop.f32.mrf.mxu0
        %v1130 = vadd.f32 0.0, %v1129
        %v1131 = vpop.f32.mrf.mxu0
        %1132 = vdwg.mxu0
        %v1133 = vld [vmem:[#allocation2 + $0x60] sm:$0xff]
        %v1134 = vld [vmem:[#allocation2 + $0x68] sm:$0xff]
        %v1135 = vld [vmem:[#allocation2 + $0x70] sm:$0xff]
        %v1136 = vld [vmem:[#allocation2 + $0x78] sm:$0xff]
        %v1138 = vsel %vm241, %v1130, 0
        %1140 = vmatprep.subr.mxu0 0.0
        %1141 = vmatpush1.msra.mxu0 0.0
        %1142 = vmatprep.subr.mxu0 0.0
        %1143 = vmatpush1.msra.mxu0 0.0
        %1144 = vmatprep.subr.mxu0 0.0
        %1145 = vmatpush1.msra.mxu0 0.0
        %1146 = vmatprep.subr.mxu0 0.0
        %1147 = vmatpush1.msra.mxu0 0.0
        %1148 = vmatprep.subr.mxu0 0.0
        %1149 = vmatpush1.msra.mxu0 0.0
        %1150 = vmatprep.subr.mxu0 0.0
        %1151 = vmatpush1.msra.mxu0 0.0
        %1152 = vmatprep.subr.mxu0 0.0
        %1153 = vmatpush1.msra.mxu0 0.0
        %1154 = vmatprep.subr.mxu0 0.0
        %1155 = vmatpush1.msra.mxu0 0.0
        %1156 = vmatprep.subr.mxu0 0.0
        %1157 = vmatpush1.msra.mxu0 0.0
        %1158 = vmatprep.subr.mxu0 0.0
        %1159 = vmatpush1.msra.mxu0 0.0
        %1160 = vmatprep.subr.mxu0 0.0
        %1161 = vmatpush1.msra.mxu0 0.0
        %1162 = vmatprep.subr.mxu0 0.0
        %1163 = vmatpush1.msra.mxu0 0.0
        %1164 = vmatprep.subr.mxu0 0.0
        %1165 = vmatpush1.msra.mxu0 %v1136
        %1166 = vmatprep.subr.mxu0 0.0
        %1167 = vmatpush1.msra.mxu0 %v1135
        %1168 = vmatprep.subr.mxu0 0.0
        %1169 = vmatpush1.msra.mxu0 %v1134
        %1170 = vmatprep.subr.mxu0 0.0
        %1171 = vmatpush1.msra.mxu0 %v1133
        %1172 = vmatprep.subr.mxu0 0.0
        %1173 = vmatpush2.msra.mxu0 0.0
        %1174 = vmatprep.subr.mxu0 0.0
        %1175 = vmatpush2.msra.mxu0 0.0
        %1176 = vmatprep.subr.mxu0 0.0
        %1177 = vmatpush2.msra.mxu0 0.0
        %1178 = vmatprep.subr.mxu0 0.0
        %1179 = vmatpush2.msra.mxu0 0.0
        %1180 = vmatprep.subr.mxu0 0.0
        %1181 = vmatpush2.msra.mxu0 0.0
        %1182 = vmatprep.subr.mxu0 0.0
        %1183 = vmatpush2.msra.mxu0 0.0
        %1184 = vmatprep.subr.mxu0 0.0
        %1185 = vmatpush2.msra.mxu0 0.0
        %1186 = vmatprep.subr.mxu0 0.0
        %1187 = vmatpush2.msra.mxu0 0.0
        %1188 = vmatprep.subr.mxu0 0.0
        %1189 = vmatpush2.msra.mxu0 0.0
        %1190 = vmatprep.subr.mxu0 0.0
        %1191 = vmatpush2.msra.mxu0 0.0
        %1192 = vmatprep.subr.mxu0 0.0
        %1193 = vmatpush2.msra.mxu0 0.0
        %1194 = vmatprep.subr.mxu0 0.0
        %1195 = vmatpush2.msra.mxu0 0.0
        %1196 = vmatprep.subr.mxu0 0.0
        %1197 = vmatpush2.msra.mxu0 0.0
        %1198 = vmatprep.subr.mxu0 0.0
        %1199 = vmatpush2.msra.mxu0 0.0
        %1200 = vmatprep.subr.mxu0 0.0
        %1201 = vmatpush2.msra.mxu0 0.0
        %1202 = vmatprep.subr.mxu0 0.0
        %1203 = vmatpush2.msra.mxu0 0.0
        %1204 = vmatprep.mubr.f32.mxu0 0.0
        %1205 = vmatmul.mubr.f32.gmra.mxu0 %v1138
        %v1206 = vpop.f32.mrf.mxu0
        %v1207 = vadd.f32 0.0, %v1206
        %v1208 = vpop.f32.mrf.mxu0
        %1209 = vdwg.mxu0
        %v1210 = vadd.f32 %v967, %v1207
        %1211 = vst [vmem:[%s227] sm:$0xff] %v1210
        %p1212 = scmp.lt.s32.totalorder %s16, 1
        %s1213 = scalar_select %p1212, %s16, 1
        %s1214 = smul.addr %s1213, 8
        %s1215 = scalar_lea.vmem %s4, %s1214
        // Predicated region
        $region41: #{_lambda_.4} parent=35 // pred_check
          %p1216 = pneg %p128
        $region42: #{_lambda_.4} parent=35 // pred_check_branch
          %1218 = sbr.rel (%p1216) target = $region44
        $region43: #{_lambda_.4} parent=35 // pred_region
          _
        $region44: #{_lambda_.4} parent=35 // pred_fallthru
          _
      $region36: #{_lambda_.4} parent=5 // pred_fallthru
        _
      %p1219 = scmp.le.s32.totalorder 2, %s11
      // Predicated region
      $region45: #{_lambda_.4} parent=5 // pred_check
        %p1220 = pneg %p1219
      $region46: #{_lambda_.4} parent=5 // pred_check_branch
        %1222 = sbr.rel (%p1220) target = $region48
      $region47: #{_lambda_.4} parent=5 // pred_region
        %s1223 = ssub.s32 %s11, 2
        // Predicated region
        $region49: #{_lambda_.4} parent=47 // pred_check
          %p1224 = pneg %p134
        $region50: #{_lambda_.4} parent=47 // pred_check_branch
          %1226 = sbr.rel (%p1224) target = $region52
        $region51: #{_lambda_.4} parent=47 // pred_region
          %p1227 = scmp.lt.s32.totalorder %s17, 1
          %s1228 = scalar_select %p1227, %s17, 1
          %s1229 = smul.addr %s1228, 8
          %s1230 = scalar_lea.vmem %s4, %s1229
        $region52: #{_lambda_.4} parent=47 // pred_fallthru
          _
      $region48: #{_lambda_.4} parent=5 // pred_fallthru
        _
    $region6: #{_lambda_.4} parent=1 // loop_footer
      %s15 = sadd.s32 1, %s11
    $region7: #{_lambda_.4} parent=1 // loop_footer_branch
      %10 = sbr.rel target = $region3
    $region8: #{_lambda_.4} parent=1 // loop_exit
      _
    %1231 = vsyncpa [#allocation3], 1
    %s1232 = scalar_lea.sflag [#allocation3], 1
    %1233 = vsyncpa %s1232, 1

// kernel: _lambda_.5
$region0: #{_lambda_.5}
  #allocation0 [shape = 'u32[]', space=smem, size = 0x4, offset = 0x4, fixed_abs, tag = 'smem constant byte address 0x4 - core index']
  #allocation1 [shape = 'u32[144,128]{1,0:T(1,128)}', space=vmem, size = 0x12000, scoped, tag = 'internal scratch']
  %s0 = inlined_call_operand.vmem [shape: f32[16,128], index: 0, kind: input, shape index: {}]
  %s1 = inlined_call_operand.vmem [shape: f32[1,128], index: 1, kind: input, shape index: {}]
  %s2 = inlined_call_operand.vmem [shape: f32[1,128], index: 2, kind: input, shape index: {}]
  %s3 = inlined_call_operand.vmem [shape: f32[128,512], index: 3, kind: input, shape index: {}]
  %s4 = inlined_call_operand.vmem [shape: f32[1,512], index: 4, kind: input, shape index: {}]
  %s5 = inlined_call_operand.vmem [shape: f32[512,128], index: 5, kind: input, shape index: {}]
  %s6 = inlined_call_operand.vmem [shape: f32[1,128], index: 6, kind: input, shape index: {}]
  %s7 = inlined_call_operand.hbm [shape: f32[16,128], index: 7, kind: output, shape index: {}]
  %s8 = sld [smem:[#allocation0]]
  $region38: #{_lambda_.5} parent=0
    _
  %s10 = ssub.s32 1, %s8
  %s11 = scalar_select 0, %s10, %s8
  $region1: #{_lambda_.5} parent=0
    #allocation2 [shape = 'u8[8192]{0}', space=vmem, size = 0x2000, scoped, tag = 'output window, operand 0, single buffered']
    #allocation3 [shape = 's32[1]{0}', space=sflag, size = 0x4, scoped, tag = 'scoped memory for _lambda_.5']
    %12 = vsyncpa [#allocation3], 0
    // Predicated region
    $region2: #{_lambda_.5} parent=1 // pred_check
      _
    $region3: #{_lambda_.5} parent=1 // pred_check_branch
      %14 = sbr.rel (0) target = $region5
    $region4: #{_lambda_.5} parent=1 // pred_region
      _
    $region5: #{_lambda_.5} parent=1 // pred_fallthru
      _
    // Predicated region
    $region6: #{_lambda_.5} parent=1 // pred_check
      _
    $region7: #{_lambda_.5} parent=1 // pred_check_branch
      %16 = sbr.rel (0) target = $region9
    $region8: #{_lambda_.5} parent=1 // pred_region
      _
    $region9: #{_lambda_.5} parent=1 // pred_fallthru
      _
    // Predicated region
    $region10: #{_lambda_.5} parent=1 // pred_check
      _
    $region11: #{_lambda_.5} parent=1 // pred_check_branch
      %18 = sbr.rel (0) target = $region13
    $region12: #{_lambda_.5} parent=1 // pred_region
      _
    $region13: #{_lambda_.5} parent=1 // pred_fallthru
      _
    // Predicated region
    $region14: #{_lambda_.5} parent=1 // pred_check
      _
    $region15: #{_lambda_.5} parent=1 // pred_check_branch
      %20 = sbr.rel (0) target = $region17
    $region16: #{_lambda_.5} parent=1 // pred_region
      _
    $region17: #{_lambda_.5} parent=1 // pred_fallthru
      _
    // Predicated region
    $region18: #{_lambda_.5} parent=1 // pred_check
      _
    $region19: #{_lambda_.5} parent=1 // pred_check_branch
      %22 = sbr.rel (0) target = $region21
    $region20: #{_lambda_.5} parent=1 // pred_region
      _
    $region21: #{_lambda_.5} parent=1 // pred_fallthru
      _
    // Predicated region
    $region22: #{_lambda_.5} parent=1 // pred_check
      _
    $region23: #{_lambda_.5} parent=1 // pred_check_branch
      %24 = sbr.rel (0) target = $region25
    $region24: #{_lambda_.5} parent=1 // pred_region
      _
    $region25: #{_lambda_.5} parent=1 // pred_fallthru
      _
    // Predicated region
    $region26: #{_lambda_.5} parent=1 // pred_check
      _
    $region27: #{_lambda_.5} parent=1 // pred_check_branch
      %26 = sbr.rel (0) target = $region29
    $region28: #{_lambda_.5} parent=1 // pred_region
      _
    $region29: #{_lambda_.5} parent=1 // pred_fallthru
      _
    %v27 = vld [vmem:[%s0] sm:$0xff]
    %v28 = vld [vmem:[%s0 + $0x8] sm:$0xff]
    %29 = vadd.xlane.f32.xlu0 %v27
    %v30 = vpop.xlane.xlu0 %29
    %31 = vadd.xlane.f32.xlu0 %v28
    %v32 = vpop.xlane.xlu0 %31
    %v33 = vrcp.pop 128.0
    %v34 = vmul.f32 %v30, %v33
    %v35 = vmul.f32 %v32, %v33
    %v36 = vsub.f32 %v27, %v34
    %v37 = vsub.f32 %v28, %v35
    %v38 = vmul.f32 %v36, %v36
    %v39 = vmul.f32 %v37, %v37
    %40 = vadd.xlane.f32.xlu0 %v38
    %v41 = vpop.xlane.xlu0 %40
    %42 = vadd.xlane.f32.xlu0 %v39
    %v43 = vpop.xlane.xlu0 %42
    %v44 = vmul.f32 %v41, %v33
    %v45 = vmul.f32 %v43, %v33
    %v46 = vadd.f32 %v44, 1e-05
    %v47 = vadd.f32 %v45, 1e-05
    %v48 = vrsqrt.pop %v46
    %v49 = vrsqrt.pop %v47
    %v50 = vmul.f32 %v36, %v48
    %v51 = vmul.f32 %v37, %v49
    %v52 = vld [vmem:[%s1] sm:$0x1]
    %v54 = vlaneseq
    %v55 = vshrl.u32 %v54, 7
    %v56 = vsub.s32 0, %v55
    %v57 = vrot.slane %v52, %v56
    %v59 = vmul.f32 %v50, %v57
    %v60 = vmul.f32 %v51, %v57
    %v61 = vld [vmem:[%s2] sm:$0x1]
    %v63 = vlaneseq
    %v64 = vshrl.u32 %v63, 7
    %v65 = vsub.s32 0, %v64
    %v66 = vrot.slane %v61, %v65
    %v68 = vadd.f32 %v59, %v66
    %v69 = vadd.f32 %v60, %v66
    %v70 = vld [vmem:[%s3] sm:$0xff]
    %v71 = vld [vmem:[%s3 + $0x8] sm:$0xff]
    %v72 = vld [vmem:[%s3 + $0x10] sm:$0xff]
    %v73 = vld [vmem:[%s3 + $0x18] sm:$0xff]
    %v74 = vld [vmem:[%s3 + $0x20] sm:$0xff]
    %v75 = vld [vmem:[%s3 + $0x28] sm:$0xff]
    %v76 = vld [vmem:[%s3 + $0x30] sm:$0xff]
    %v77 = vld [vmem:[%s3 + $0x38] sm:$0xff]
    %v78 = vld [vmem:[%s3 + $0x40] sm:$0xff]
    %v79 = vld [vmem:[%s3 + $0x48] sm:$0xff]
    %v80 = vld [vmem:[%s3 + $0x50] sm:$0xff]
    %v81 = vld [vmem:[%s3 + $0x58] sm:$0xff]
    %v82 = vld [vmem:[%s3 + $0x60] sm:$0xff]
    %v83 = vld [vmem:[%s3 + $0x68] sm:$0xff]
    %v84 = vld [vmem:[%s3 + $0x70] sm:$0xff]
    %v85 = vld [vmem:[%s3 + $0x78] sm:$0xff]
    %v86 = vld [vmem:[%s3 + $0x80] sm:$0xff]
    %v87 = vld [vmem:[%s3 + $0x88] sm:$0xff]
    %v88 = vld [vmem:[%s3 + $0x90] sm:$0xff]
    %v89 = vld [vmem:[%s3 + $0x98] sm:$0xff]
    %v90 = vld [vmem:[%s3 + $0xa0] sm:$0xff]
    %v91 = vld [vmem:[%s3 + $0xa8] sm:$0xff]
    %v92 = vld [vmem:[%s3 + $0xb0] sm:$0xff]
    %v93 = vld [vmem:[%s3 + $0xb8] sm:$0xff]
    %v94 = vld [vmem:[%s3 + $0xc0] sm:$0xff]
    %v95 = vld [vmem:[%s3 + $0xc8] sm:$0xff]
    %v96 = vld [vmem:[%s3 + $0xd0] sm:$0xff]
    %v97 = vld [vmem:[%s3 + $0xd8] sm:$0xff]
    %v98 = vld [vmem:[%s3 + $0xe0] sm:$0xff]
    %v99 = vld [vmem:[%s3 + $0xe8] sm:$0xff]
    %v100 = vld [vmem:[%s3 + $0xf0] sm:$0xff]
    %v101 = vld [vmem:[%s3 + $0xf8] sm:$0xff]
    %v102 = vld [vmem:[%s3 + $0x100] sm:$0xff]
    %v103 = vld [vmem:[%s3 + $0x108] sm:$0xff]
    %v104 = vld [vmem:[%s3 + $0x110] sm:$0xff]
    %v105 = vld [vmem:[%s3 + $0x118] sm:$0xff]
    %v106 = vld [vmem:[%s3 + $0x120] sm:$0xff]
    %v107 = vld [vmem:[%s3 + $0x128] sm:$0xff]
    %v108 = vld [vmem:[%s3 + $0x130] sm:$0xff]
    %v109 = vld [vmem:[%s3 + $0x138] sm:$0xff]
    %v110 = vld [vmem:[%s3 + $0x140] sm:$0xff]
    %v111 = vld [vmem:[%s3 + $0x148] sm:$0xff]
    %v112 = vld [vmem:[%s3 + $0x150] sm:$0xff]
    %v113 = vld [vmem:[%s3 + $0x158] sm:$0xff]
    %v114 = vld [vmem:[%s3 + $0x160] sm:$0xff]
    %v115 = vld [vmem:[%s3 + $0x168] sm:$0xff]
    %v116 = vld [vmem:[%s3 + $0x170] sm:$0xff]
    %v117 = vld [vmem:[%s3 + $0x178] sm:$0xff]
    %v118 = vld [vmem:[%s3 + $0x180] sm:$0xff]
    %v119 = vld [vmem:[%s3 + $0x188] sm:$0xff]
    %v120 = vld [vmem:[%s3 + $0x190] sm:$0xff]
    %v121 = vld [vmem:[%s3 + $0x198] sm:$0xff]
    %v122 = vld [vmem:[%s3 + $0x1a0] sm:$0xff]
    %v123 = vld [vmem:[%s3 + $0x1a8] sm:$0xff]
    %v124 = vld [vmem:[%s3 + $0x1b0] sm:$0xff]
    %v125 = vld [vmem:[%s3 + $0x1b8] sm:$0xff]
    %v126 = vld [vmem:[%s3 + $0x1c0] sm:$0xff]
    %v127 = vld [vmem:[%s3 + $0x1c8] sm:$0xff]
    %v128 = vld [vmem:[%s3 + $0x1d0] sm:$0xff]
    %v129 = vld [vmem:[%s3 + $0x1d8] sm:$0xff]
    %v130 = vld [vmem:[%s3 + $0x1e0] sm:$0xff]
    %v131 = vld [vmem:[%s3 + $0x1e8] sm:$0xff]
    %v132 = vld [vmem:[%s3 + $0x1f0] sm:$0xff]
    %v133 = vld [vmem:[%s3 + $0x1f8] sm:$0xff]
    %v134 = vld [vmem:[%s4] sm:$0xf]
    %v136 = vlaneseq
    %v137 = vshrl.u32 %v136, 7
    %v138 = vsub.s32 0, %v137
    %v139 = vrot.slane %v134, %v138
    %v140 = vlaneseq
    %v141 = vshrl.u32 %v140, 7
    %v142 = vsub.s32 1, %v141
    %v143 = vrot.slane %v134, %v142
    %v144 = vlaneseq
    %v145 = vshrl.u32 %v144, 7
    %v146 = vsub.s32 2, %v145
    %v147 = vrot.slane %v134, %v146
    %v148 = vlaneseq
    %v149 = vshrl.u32 %v148, 7
    %v150 = vsub.s32 3, %v149
    %v151 = vrot.slane %v134, %v150
    %156 = vmatprep.subr.mxu0 %v131
    %157 = vmatpush1.msra.mxu0 %v130
    %158 = vmatprep.subr.mxu0 %v127
    %159 = vmatpush1.msra.mxu0 %v126
    %160 = vmatprep.subr.mxu0 %v123
    %161 = vmatpush1.msra.mxu0 %v122
    %162 = vmatprep.subr.mxu0 %v119
    %163 = vmatpush1.msra.mxu0 %v118
    %164 = vmatprep.subr.mxu0 %v115
    %165 = vmatpush1.msra.mxu0 %v114
    %166 = vmatprep.subr.mxu0 %v111
    %167 = vmatpush1.msra.mxu0 %v110
    %168 = vmatprep.subr.mxu0 %v107
    %169 = vmatpush1.msra.mxu0 %v106
    %170 = vmatprep.subr.mxu0 %v103
    %171 = vmatpush1.msra.mxu0 %v102
    %172 = vmatprep.subr.mxu0 %v99
    %173 = vmatpush1.msra.mxu0 %v98
    %174 = vmatprep.subr.mxu0 %v95
    %175 = vmatpush1.msra.mxu0 %v94
    %176 = vmatprep.subr.mxu0 %v91
    %177 = vmatpush1.msra.mxu0 %v90
    %178 = vmatprep.subr.mxu0 %v87
    %179 = vmatpush1.msra.mxu0 %v86
    %180 = vmatprep.subr.mxu0 %v83
    %181 = vmatpush1.msra.mxu0 %v82
    %182 = vmatprep.subr.mxu0 %v79
    %183 = vmatpush1.msra.mxu0 %v78
    %184 = vmatprep.subr.mxu0 %v75
    %185 = vmatpush1.msra.mxu0 %v74
    %186 = vmatprep.subr.mxu0 %v71
    %187 = vmatpush1.msra.mxu0 %v70
    %188 = vmatprep.subr.mxu0 0.0
    %189 = vmatpush2.msra.mxu0 0.0
    %190 = vmatprep.subr.mxu0 0.0
    %191 = vmatpush2.msra.mxu0 0.0
    %192 = vmatprep.subr.mxu0 0.0
    %193 = vmatpush2.msra.mxu0 0.0
    %194 = vmatprep.subr.mxu0 0.0
    %195 = vmatpush2.msra.mxu0 0.0
    %196 = vmatprep.subr.mxu0 0.0
    %197 = vmatpush2.msra.mxu0 0.0
    %198 = vmatprep.subr.mxu0 0.0
    %199 = vmatpush2.msra.mxu0 0.0
    %200 = vmatprep.subr.mxu0 0.0
    %201 = vmatpush2.msra.mxu0 0.0
    %202 = vmatprep.subr.mxu0 0.0
    %203 = vmatpush2.msra.mxu0 0.0
    %204 = vmatprep.subr.mxu0 0.0
    %205 = vmatpush2.msra.mxu0 0.0
    %206 = vmatprep.subr.mxu0 0.0
    %207 = vmatpush2.msra.mxu0 0.0
    %208 = vmatprep.subr.mxu0 0.0
    %209 = vmatpush2.msra.mxu0 0.0
    %210 = vmatprep.subr.mxu0 0.0
    %211 = vmatpush2.msra.mxu0 0.0
    %212 = vmatprep.subr.mxu0 0.0
    %213 = vmatpush2.msra.mxu0 0.0
    %214 = vmatprep.subr.mxu0 0.0
    %215 = vmatpush2.msra.mxu0 0.0
    %216 = vmatprep.subr.mxu0 0.0
    %217 = vmatpush2.msra.mxu0 0.0
    %218 = vmatprep.subr.mxu0 0.0
    %219 = vmatpush2.msra.mxu0 0.0
    %220 = vmatprep.mubr.f32.mxu0 0.0
    %221 = vmatmul.mubr.f32.gmra.mxu0 %v68
    %v222 = vpop.f32.mrf.mxu0
    %v223 = vadd.f32 %v139, %v222
    %v224 = vpop.f32.mrf.mxu0
    %v225 = vadd.f32 %v143, %v224
    %226 = vmatprep.mubr.f32.mxu0 0.0
    %227 = vmatmul.mubr.f32.gmra.mxu0 %v69
    %v228 = vpop.f32.mrf.mxu0
    %v229 = vadd.f32 %v139, %v228
    %v230 = vpop.f32.mrf.mxu0
    %v231 = vadd.f32 %v143, %v230
    %232 = vdwg.mxu0
    %233 = vmatprep.subr.mxu0 %v133
    %234 = vmatpush1.msra.mxu0 %v132
    %235 = vmatprep.subr.mxu0 %v129
    %236 = vmatpush1.msra.mxu0 %v128
    %237 = vmatprep.subr.mxu0 %v125
    %238 = vmatpush1.msra.mxu0 %v124
    %239 = vmatprep.subr.mxu0 %v121
    %240 = vmatpush1.msra.mxu0 %v120
    %241 = vmatprep.subr.mxu0 %v117
    %242 = vmatpush1.msra.mxu0 %v116
    %243 = vmatprep.subr.mxu0 %v113
    %244 = vmatpush1.msra.mxu0 %v112
    %245 = vmatprep.subr.mxu0 %v109
    %246 = vmatpush1.msra.mxu0 %v108
    %247 = vmatprep.subr.mxu0 %v105
    %248 = vmatpush1.msra.mxu0 %v104
    %249 = vmatprep.subr.mxu0 %v101
    %250 = vmatpush1.msra.mxu0 %v100
    %251 = vmatprep.subr.mxu0 %v97
    %252 = vmatpush1.msra.mxu0 %v96
    %253 = vmatprep.subr.mxu0 %v93
    %254 = vmatpush1.msra.mxu0 %v92
    %255 = vmatprep.subr.mxu0 %v89
    %256 = vmatpush1.msra.mxu0 %v88
    %257 = vmatprep.subr.mxu0 %v85
    %258 = vmatpush1.msra.mxu0 %v84
    %259 = vmatprep.subr.mxu0 %v81
    %260 = vmatpush1.msra.mxu0 %v80
    %261 = vmatprep.subr.mxu0 %v77
    %262 = vmatpush1.msra.mxu0 %v76
    %263 = vmatprep.subr.mxu0 %v73
    %264 = vmatpush1.msra.mxu0 %v72
    %265 = vmatprep.subr.mxu0 0.0
    %266 = vmatpush2.msra.mxu0 0.0
    %267 = vmatprep.subr.mxu0 0.0
    %268 = vmatpush2.msra.mxu0 0.0
    %269 = vmatprep.subr.mxu0 0.0
    %270 = vmatpush2.msra.mxu0 0.0
    %271 = vmatprep.subr.mxu0 0.0
    %272 = vmatpush2.msra.mxu0 0.0
    %273 = vmatprep.subr.mxu0 0.0
    %274 = vmatpush2.msra.mxu0 0.0
    %275 = vmatprep.subr.mxu0 0.0
    %276 = vmatpush2.msra.mxu0 0.0
    %277 = vmatprep.subr.mxu0 0.0
    %278 = vmatpush2.msra.mxu0 0.0
    %279 = vmatprep.subr.mxu0 0.0
    %280 = vmatpush2.msra.mxu0 0.0
    %281 = vmatprep.subr.mxu0 0.0
    %282 = vmatpush2.msra.mxu0 0.0
    %283 = vmatprep.subr.mxu0 0.0
    %284 = vmatpush2.msra.mxu0 0.0
    %285 = vmatprep.subr.mxu0 0.0
    %286 = vmatpush2.msra.mxu0 0.0
    %287 = vmatprep.subr.mxu0 0.0
    %288 = vmatpush2.msra.mxu0 0.0
    %289 = vmatprep.subr.mxu0 0.0
    %290 = vmatpush2.msra.mxu0 0.0
    %291 = vmatprep.subr.mxu0 0.0
    %292 = vmatpush2.msra.mxu0 0.0
    %293 = vmatprep.subr.mxu0 0.0
    %294 = vmatpush2.msra.mxu0 0.0
    %295 = vmatprep.subr.mxu0 0.0
    %296 = vmatpush2.msra.mxu0 0.0
    %297 = vmatprep.mubr.f32.mxu0 0.0
    %298 = vmatmul.mubr.f32.gmra.mxu0 %v68
    %v299 = vpop.f32.mrf.mxu0
    %v300 = vadd.f32 %v147, %v299
    %v301 = vpop.f32.mrf.mxu0
    %v302 = vadd.f32 %v151, %v301
    %303 = vmatprep.mubr.f32.mxu0 0.0
    %304 = vmatmul.mubr.f32.gmra.mxu0 %v69
    %v305 = vpop.f32.mrf.mxu0
    %v306 = vadd.f32 %v147, %v305
    %v307 = vpop.f32.mrf.mxu0
    %v308 = vadd.f32 %v151, %v307
    %309 = vdwg.mxu0
    %v310 = vmul.f32 %v223, %v223
    %v311 = vmul.f32 %v225, %v225
    %v312 = vmul.f32 %v300, %v300
    %v313 = vmul.f32 %v302, %v302
    %v314 = vmul.f32 %v229, %v229
    %v315 = vmul.f32 %v231, %v231
    %v316 = vmul.f32 %v306, %v306
    %v317 = vmul.f32 %v308, %v308
    %v318 = vmul.f32 %v223, %v310
    %v319 = vmul.f32 %v225, %v311
    %v320 = vmul.f32 %v300, %v312
    %v321 = vmul.f32 %v302, %v313
    %v322 = vmul.f32 %v229, %v314
    %v323 = vmul.f32 %v231, %v315
    %v324 = vmul.f32 %v306, %v316
    %v325 = vmul.f32 %v308, %v317
    %v326 = vmul.f32 %v318, 0.044715
    %v327 = vmul.f32 %v319, 0.044715
    %v328 = vmul.f32 %v320, 0.044715
    %v329 = vmul.f32 %v321, 0.044715
    %v330 = vmul.f32 %v322, 0.044715
    %v331 = vmul.f32 %v323, 0.044715
    %v332 = vmul.f32 %v324, 0.044715
    %v333 = vmul.f32 %v325, 0.044715
    %v334 = vadd.f32 %v223, %v326
    %v335 = vadd.f32 %v225, %v327
    %v336 = vadd.f32 %v300, %v328
    %v337 = vadd.f32 %v302, %v329
    %v338 = vadd.f32 %v229, %v330
    %v339 = vadd.f32 %v231, %v331
    %v340 = vadd.f32 %v306, %v332
    %v341 = vadd.f32 %v308, %v333
    %v342 = vmul.f32 %v334, 0.7978846
    %v343 = vmul.f32 %v335, 0.7978846
    %v344 = vmul.f32 %v336, 0.7978846
    %v345 = vmul.f32 %v337, 0.7978846
    %v346 = vmul.f32 %v338, 0.7978846
    %v347 = vmul.f32 %v339, 0.7978846
    %v348 = vmul.f32 %v340, 0.7978846
    %v349 = vmul.f32 %v341, 0.7978846
    %v350 = vtanh.pop %v342
    %v351 = vtanh.pop %v343
    %v352 = vtanh.pop %v344
    %v353 = vtanh.pop %v345
    %v354 = vtanh.pop %v346
    %v355 = vtanh.pop %v347
    %v356 = vtanh.pop %v348
    %v357 = vtanh.pop %v349
    %v358 = vadd.f32 %v350, 1.0
    %v359 = vadd.f32 %v351, 1.0
    %v360 = vadd.f32 %v352, 1.0
    %v361 = vadd.f32 %v353, 1.0
    %v362 = vadd.f32 %v354, 1.0
    %v363 = vadd.f32 %v355, 1.0
    %v364 = vadd.f32 %v356, 1.0
    %v365 = vadd.f32 %v357, 1.0
    %v366 = vmul.f32 %v358, 0.5
    %v367 = vmul.f32 %v359, 0.5
    %v368 = vmul.f32 %v360, 0.5
    %v369 = vmul.f32 %v361, 0.5
    %v370 = vmul.f32 %v362, 0.5
    %v371 = vmul.f32 %v363, 0.5
    %v372 = vmul.f32 %v364, 0.5
    %v373 = vmul.f32 %v365, 0.5
    %v374 = vmul.f32 %v223, %v366
    %v375 = vmul.f32 %v225, %v367
    %v376 = vmul.f32 %v300, %v368
    %v377 = vmul.f32 %v302, %v369
    %v378 = vmul.f32 %v229, %v370
    %v379 = vmul.f32 %v231, %v371
    %v380 = vmul.f32 %v306, %v372
    %v381 = vmul.f32 %v308, %v373
    %v382 = vld [vmem:[%s5] sm:$0xff]
    %v383 = vld [vmem:[%s5 + $0x8] sm:$0xff]
    %v384 = vld [vmem:[%s5 + $0x10] sm:$0xff]
    %v385 = vld [vmem:[%s5 + $0x18] sm:$0xff]
    %v386 = vld [vmem:[%s5 + $0x20] sm:$0xff]
    %v387 = vld [vmem:[%s5 + $0x28] sm:$0xff]
    %v388 = vld [vmem:[%s5 + $0x30] sm:$0xff]
    %v389 = vld [vmem:[%s5 + $0x38] sm:$0xff]
    %v390 = vld [vmem:[%s5 + $0x40] sm:$0xff]
    %v391 = vld [vmem:[%s5 + $0x48] sm:$0xff]
    %v392 = vld [vmem:[%s5 + $0x50] sm:$0xff]
    %v393 = vld [vmem:[%s5 + $0x58] sm:$0xff]
    %v394 = vld [vmem:[%s5 + $0x60] sm:$0xff]
    %v395 = vld [vmem:[%s5 + $0x68] sm:$0xff]
    %v396 = vld [vmem:[%s5 + $0x70] sm:$0xff]
    %v397 = vld [vmem:[%s5 + $0x78] sm:$0xff]
    %v398 = vld [vmem:[%s5 + $0x80] sm:$0xff]
    %v399 = vld [vmem:[%s5 + $0x88] sm:$0xff]
    %v400 = vld [vmem:[%s5 + $0x90] sm:$0xff]
    %v401 = vld [vmem:[%s5 + $0x98] sm:$0xff]
    %v402 = vld [vmem:[%s5 + $0xa0] sm:$0xff]
    %v403 = vld [vmem:[%s5 + $0xa8] sm:$0xff]
    %v404 = vld [vmem:[%s5 + $0xb0] sm:$0xff]
    %v405 = vld [vmem:[%s5 + $0xb8] sm:$0xff]
    %v406 = vld [vmem:[%s5 + $0xc0] sm:$0xff]
    %v407 = vld [vmem:[%s5 + $0xc8] sm:$0xff]
    %v408 = vld [vmem:[%s5 + $0xd0] sm:$0xff]
    %v409 = vld [vmem:[%s5 + $0xd8] sm:$0xff]
    %v410 = vld [vmem:[%s5 + $0xe0] sm:$0xff]
    %v411 = vld [vmem:[%s5 + $0xe8] sm:$0xff]
    %v412 = vld [vmem:[%s5 + $0xf0] sm:$0xff]
    %v413 = vld [vmem:[%s5 + $0xf8] sm:$0xff]
    %v414 = vld [vmem:[%s5 + $0x100] sm:$0xff]
    %v415 = vld [vmem:[%s5 + $0x108] sm:$0xff]
    %v416 = vld [vmem:[%s5 + $0x110] sm:$0xff]
    %v417 = vld [vmem:[%s5 + $0x118] sm:$0xff]
    %v418 = vld [vmem:[%s5 + $0x120] sm:$0xff]
    %v419 = vld [vmem:[%s5 + $0x128] sm:$0xff]
    %v420 = vld [vmem:[%s5 + $0x130] sm:$0xff]
    %v421 = vld [vmem:[%s5 + $0x138] sm:$0xff]
    %v422 = vld [vmem:[%s5 + $0x140] sm:$0xff]
    %v423 = vld [vmem:[%s5 + $0x148] sm:$0xff]
    %v424 = vld [vmem:[%s5 + $0x150] sm:$0xff]
    %v425 = vld [vmem:[%s5 + $0x158] sm:$0xff]
    %v426 = vld [vmem:[%s5 + $0x160] sm:$0xff]
    %v427 = vld [vmem:[%s5 + $0x168] sm:$0xff]
    %v428 = vld [vmem:[%s5 + $0x170] sm:$0xff]
    %v429 = vld [vmem:[%s5 + $0x178] sm:$0xff]
    %v430 = vld [vmem:[%s5 + $0x180] sm:$0xff]
    %v431 = vld [vmem:[%s5 + $0x188] sm:$0xff]
    %v432 = vld [vmem:[%s5 + $0x190] sm:$0xff]
    %v433 = vld [vmem:[%s5 + $0x198] sm:$0xff]
    %v434 = vld [vmem:[%s5 + $0x1a0] sm:$0xff]
    %v435 = vld [vmem:[%s5 + $0x1a8] sm:$0xff]
    %v436 = vld [vmem:[%s5 + $0x1b0] sm:$0xff]
    %v437 = vld [vmem:[%s5 + $0x1b8] sm:$0xff]
    %v438 = vld [vmem:[%s5 + $0x1c0] sm:$0xff]
    %v439 = vld [vmem:[%s5 + $0x1c8] sm:$0xff]
    %v440 = vld [vmem:[%s5 + $0x1d0] sm:$0xff]
    %v441 = vld [vmem:[%s5 + $0x1d8] sm:$0xff]
    %v442 = vld [vmem:[%s5 + $0x1e0] sm:$0xff]
    %v443 = vld [vmem:[%s5 + $0x1e8] sm:$0xff]
    %v444 = vld [vmem:[%s5 + $0x1f0] sm:$0xff]
    %v445 = vld [vmem:[%s5 + $0x1f8] sm:$0xff]
    %v446 = vld [vmem:[%s6] sm:$0x1]
    %v448 = vlaneseq
    %v449 = vshrl.u32 %v448, 7
    %v450 = vsub.s32 0, %v449
    %v451 = vrot.slane %v446, %v450
    %453 = vmatprep.subr.mxu0 0.0
    %454 = vmatpush1.msra.mxu0 %v397
    %455 = vmatprep.subr.mxu0 0.0
    %456 = vmatpush1.msra.mxu0 %v396
    %457 = vmatprep.subr.mxu0 0.0
    %458 = vmatpush1.msra.mxu0 %v395
    %459 = vmatprep.subr.mxu0 0.0
    %460 = vmatpush1.msra.mxu0 %v394
    %461 = vmatprep.subr.mxu0 0.0
    %462 = vmatpush1.msra.mxu0 %v393
    %463 = vmatprep.subr.mxu0 0.0
    %464 = vmatpush1.msra.mxu0 %v392
    %465 = vmatprep.subr.mxu0 0.0
    %466 = vmatpush1.msra.mxu0 %v391
    %467 = vmatprep.subr.mxu0 0.0
    %468 = vmatpush1.msra.mxu0 %v390
    %469 = vmatprep.subr.mxu0 0.0
    %470 = vmatpush1.msra.mxu0 %v389
    %471 = vmatprep.subr.mxu0 0.0
    %472 = vmatpush1.msra.mxu0 %v388
    %473 = vmatprep.subr.mxu0 0.0
    %474 = vmatpush1.msra.mxu0 %v387
    %475 = vmatprep.subr.mxu0 0.0
    %476 = vmatpush1.msra.mxu0 %v386
    %477 = vmatprep.subr.mxu0 0.0
    %478 = vmatpush1.msra.mxu0 %v385
    %479 = vmatprep.subr.mxu0 0.0
    %480 = vmatpush1.msra.mxu0 %v384
    %481 = vmatprep.subr.mxu0 0.0
    %482 = vmatpush1.msra.mxu0 %v383
    %483 = vmatprep.subr.mxu0 0.0
    %484 = vmatpush1.msra.mxu0 %v382
    %485 = vmatprep.subr.mxu0 0.0
    %486 = vmatpush2.msra.mxu0 %v413
    %487 = vmatprep.subr.mxu0 0.0
    %488 = vmatpush2.msra.mxu0 %v412
    %489 = vmatprep.subr.mxu0 0.0
    %490 = vmatpush2.msra.mxu0 %v411
    %491 = vmatprep.subr.mxu0 0.0
    %492 = vmatpush2.msra.mxu0 %v410
    %493 = vmatprep.subr.mxu0 0.0
    %494 = vmatpush2.msra.mxu0 %v409
    %495 = vmatprep.subr.mxu0 0.0
    %496 = vmatpush2.msra.mxu0 %v408
    %497 = vmatprep.subr.mxu0 0.0
    %498 = vmatpush2.msra.mxu0 %v407
    %499 = vmatprep.subr.mxu0 0.0
    %500 = vmatpush2.msra.mxu0 %v406
    %501 = vmatprep.subr.mxu0 0.0
    %502 = vmatpush2.msra.mxu0 %v405
    %503 = vmatprep.subr.mxu0 0.0
    %504 = vmatpush2.msra.mxu0 %v404
    %505 = vmatprep.subr.mxu0 0.0
    %506 = vmatpush2.msra.mxu0 %v403
    %507 = vmatprep.subr.mxu0 0.0
    %508 = vmatpush2.msra.mxu0 %v402
    %509 = vmatprep.subr.mxu0 0.0
    %510 = vmatpush2.msra.mxu0 %v401
    %511 = vmatprep.subr.mxu0 0.0
    %512 = vmatpush2.msra.mxu0 %v400
    %513 = vmatprep.subr.mxu0 0.0
    %514 = vmatpush2.msra.mxu0 %v399
    %515 = vmatprep.subr.mxu0 0.0
    %516 = vmatpush2.msra.mxu0 %v398
    %517 = vmatprep.mubr.f32.mxu0 %v375
    %518 = vmatmul.mubr.f32.gmra.mxu0 %v374
    %v519 = vpop.f32.mrf.mxu0
    %v520 = vadd.f32 %v451, %v519
    %v521 = vpop.f32.mrf.mxu0
    %522 = vmatprep.mubr.f32.mxu0 %v379
    %523 = vmatmul.mubr.f32.gmra.mxu0 %v378
    %v524 = vpop.f32.mrf.mxu0
    %v525 = vadd.f32 %v451, %v524
    %v526 = vpop.f32.mrf.mxu0
    %527 = vdwg.mxu0
    %528 = vmatprep.subr.mxu0 0.0
    %529 = vmatpush1.msra.mxu0 %v429
    %530 = vmatprep.subr.mxu0 0.0
    %531 = vmatpush1.msra.mxu0 %v428
    %532 = vmatprep.subr.mxu0 0.0
    %533 = vmatpush1.msra.mxu0 %v427
    %534 = vmatprep.subr.mxu0 0.0
    %535 = vmatpush1.msra.mxu0 %v426
    %536 = vmatprep.subr.mxu0 0.0
    %537 = vmatpush1.msra.mxu0 %v425
    %538 = vmatprep.subr.mxu0 0.0
    %539 = vmatpush1.msra.mxu0 %v424
    %540 = vmatprep.subr.mxu0 0.0
    %541 = vmatpush1.msra.mxu0 %v423
    %542 = vmatprep.subr.mxu0 0.0
    %543 = vmatpush1.msra.mxu0 %v422
    %544 = vmatprep.subr.mxu0 0.0
    %545 = vmatpush1.msra.mxu0 %v421
    %546 = vmatprep.subr.mxu0 0.0
    %547 = vmatpush1.msra.mxu0 %v420
    %548 = vmatprep.subr.mxu0 0.0
    %549 = vmatpush1.msra.mxu0 %v419
    %550 = vmatprep.subr.mxu0 0.0
    %551 = vmatpush1.msra.mxu0 %v418
    %552 = vmatprep.subr.mxu0 0.0
    %553 = vmatpush1.msra.mxu0 %v417
    %554 = vmatprep.subr.mxu0 0.0
    %555 = vmatpush1.msra.mxu0 %v416
    %556 = vmatprep.subr.mxu0 0.0
    %557 = vmatpush1.msra.mxu0 %v415
    %558 = vmatprep.subr.mxu0 0.0
    %559 = vmatpush1.msra.mxu0 %v414
    %560 = vmatprep.subr.mxu0 0.0
    %561 = vmatpush2.msra.mxu0 %v445
    %562 = vmatprep.subr.mxu0 0.0
    %563 = vmatpush2.msra.mxu0 %v444
    %564 = vmatprep.subr.mxu0 0.0
    %565 = vmatpush2.msra.mxu0 %v443
    %566 = vmatprep.subr.mxu0 0.0
    %567 = vmatpush2.msra.mxu0 %v442
    %568 = vmatprep.subr.mxu0 0.0
    %569 = vmatpush2.msra.mxu0 %v441
    %570 = vmatprep.subr.mxu0 0.0
    %571 = vmatpush2.msra.mxu0 %v440
    %572 = vmatprep.subr.mxu0 0.0
    %573 = vmatpush2.msra.mxu0 %v439
    %574 = vmatprep.subr.mxu0 0.0
    %575 = vmatpush2.msra.mxu0 %v438
    %576 = vmatprep.subr.mxu0 0.0
    %577 = vmatpush2.msra.mxu0 %v437
    %578 = vmatprep.subr.mxu0 0.0
    %579 = vmatpush2.msra.mxu0 %v436
    %580 = vmatprep.subr.mxu0 0.0
    %581 = vmatpush2.msra.mxu0 %v435
    %582 = vmatprep.subr.mxu0 0.0
    %583 = vmatpush2.msra.mxu0 %v434
    %584 = vmatprep.subr.mxu0 0.0
    %585 = vmatpush2.msra.mxu0 %v433
    %586 = vmatprep.subr.mxu0 0.0
    %587 = vmatpush2.msra.mxu0 %v432
    %588 = vmatprep.subr.mxu0 0.0
    %589 = vmatpush2.msra.mxu0 %v431
    %590 = vmatprep.subr.mxu0 0.0
    %591 = vmatpush2.msra.mxu0 %v430
    %592 = vmatprep.mubr.f32.mxu0 %v377
    %593 = vmatmul.mubr.f32.gmra.mxu0 %v376
    %v594 = vpop.f32.mrf.mxu0
    %v595 = vadd.f32 %v520, %v594
    %v596 = vpop.f32.mrf.mxu0
    %597 = vmatprep.mubr.f32.mxu0 %v381
    %598 = vmatmul.mubr.f32.gmra.mxu0 %v380
    %v599 = vpop.f32.mrf.mxu0
    %v600 = vadd.f32 %v525, %v599
    %v601 = vpop.f32.mrf.mxu0
    %602 = vdwg.mxu0
    %v603 = vadd.f32 %v595, %v27
    %v604 = vadd.f32 %v600, %v28
    %605 = vst [vmem:[#allocation2] sm:$0xff] %v603
    %606 = vst [vmem:[#allocation2 + $0x8] sm:$0xff] %v604
    // Predicated region
    $region30: #{_lambda_.5} parent=1 // pred_check
      _
    $region31: #{_lambda_.5} parent=1 // pred_check_branch
      %608 = sbr.rel (0) target = $region33
    $region32: #{_lambda_.5} parent=1 // pred_region
      %s610 = ssub.s32 256, 256
      %611 = vsyncadd [#allocation3], %s610
      %s612 = sshll.u32 [#allocation2], 4
      %s613 = int_to_ptr.vmem [resolvable:$true] %s612
      %618 = dma.vmem_to_hbm [thread:$0]  %s613, 256, %s7, [#allocation3], 128, 128, 8
    $region33: #{_lambda_.5} parent=1 // pred_fallthru
      _
    // Predicated region
    $region34: #{_lambda_.5} parent=1 // pred_check
      _
    $region35: #{_lambda_.5} parent=1 // pred_check_branch
      %620 = sbr.rel (0) target = $region37
    $region36: #{_lambda_.5} parent=1 // pred_region
      %621 = dma.done [#allocation3], 256
    $region37: #{_lambda_.5} parent=1 // pred_fallthru
      _
    %622 = vsyncpa [#allocation3], 1

</llo_original>
